<compile_context>
chip_gen: v7x
topology: tpu7x:2x2x1
jax: 0.10.0
libtpu: 0.0.40
codegen_flags: <defaults>
</compile_context>

<pallas_src>
import functools

import jax
import jax.numpy as jnp
from jax import lax
from jax.experimental import pallas as pl
from jax.experimental.pallas import tpu as pltpu

_SUBLANE = 8
_LANE = 128


def _round_up(n, m):
    return ((n + m - 1) // m) * m


def _pick_time_block(T, request):
    """Largest divisor of T not exceeding `request`.

    TODO(synk): support a masked/partial final time block (step count in SMEM
    + pl.when) so awkward/prime T does not degenerate to tiny time tiles.
    """
    for cand in range(max(1, min(request, T)), 0, -1):
        if T % cand == 0:
            return cand
    return T


# --------------------------------- kernel ------------------------------------
def _fused_lstm_kernel(*refs, nlayers, compute_dtype):
    x_ref = refs[0]
    layer_refs = refs[1:1 + 3 * nlayers]
    wp_ref, bp_ref, wd_ref, bd_ref = refs[1 + 3 * nlayers:5 + 3 * nlayers]
    out_ref = refs[5 + 3 * nlayers]
    h_scr, c_scr, seq_scr, gx_scr = refs[6 + 3 * nlayers:]

    tb, bb, _ = x_ref.shape            # time-major input block (tb, bb, Dp)
    Hp = h_scr.shape[-1]
    ti = pl.program_id(1)              # time axis MUST stay the innermost grid axis

    # Recurrent state carries across time blocks in VMEM scratch; reset only on
    # the first time block of each batch block.
    @pl.when(ti == 0)
    def _init():
        h_scr[...] = jnp.zeros_like(h_scr)
        c_scr[...] = jnp.zeros_like(c_scr)

    def sigmoid(v):
        # 1 EUP push (tanh) per gate instead of exp + reciprocal.
        return 0.5 * jnp.tanh(0.5 * v) + 0.5

    layer_in = x_ref[...]              # (tb, bb, D_in) in compute dtype
    h_last = None
    for layer in range(nlayers):
        wih_ref, whh_ref, b_ref = layer_refs[3 * layer:3 * layer + 3]
        d_in = wih_ref.shape[0]
        last = layer == nlayers - 1

        # Hoisted input projection + fused bias: one MXU-sized matmul per
        # (layer, time block); the serial recurrence below only does h @ W_hh^T.
        gx = (jnp.dot(layer_in.reshape(tb * bb, d_in), wih_ref[...],
                      preferred_element_type=jnp.float32) + b_ref[...])
        gx_scr[...] = gx.reshape(tb, bb, 4 * Hp)

        whh = whh_ref[...]
        h = h_scr[layer]               # f32 carried state
        c = c_scr[layer]
        # TODO(synk): interleave two independent batch sub-chunks here so one
        # chunk's h @ W_hh matmul overlaps the other's EUP/VALU gate math.
        for t in range(tb):            # fully unrolled, static slices only
            gates = gx_scr[t] + jnp.dot(h.astype(compute_dtype), whh,
                                        preferred_element_type=jnp.float32)
            i_g = sigmoid(gates[:, 0 * Hp:1 * Hp])
            f_g = sigmoid(gates[:, 1 * Hp:2 * Hp])
            g_g = jnp.tanh(gates[:, 2 * Hp:3 * Hp])
            o_g = sigmoid(gates[:, 3 * Hp:4 * Hp])
            c = f_g * c + i_g * g_g
            h = o_g * jnp.tanh(c)
            if not last:
                seq_scr[t] = h.astype(compute_dtype)   # feeds the next layer
        h_scr[layer] = h
        c_scr[layer] = c
        if not last:
            layer_in = seq_scr[...]
        else:
            h_last = h

    # Fused projection + ReLU + decoder on the final hidden state only; the
    # hidden sequences never leave VMEM, only (bb, Sp) goes to HBM.
    @pl.when(ti == pl.num_programs(1) - 1)
    def _head():
        z = (jnp.dot(h_last.astype(compute_dtype), wp_ref[...],
                     preferred_element_type=jnp.float32) + bp_ref[...])
        z = jnp.maximum(z, 0.0)        # ReLU; dropout is identity in eval mode
        out_ref[...] = (jnp.dot(z.astype(compute_dtype), wd_ref[...],
                                preferred_element_type=jnp.float32) + bd_ref[...])


# ----------------------------- weight padding ---------------------------------
def _pad_lstm_weights(lp, H, Hp, d_in, d_in_p, compute_dtype):
    """Zero-pad per-gate row blocks (i,f,g,o); exact-preserving.  bf16 weights,
    f32 combined bias."""
    w_ih = lp["w_ih"].astype(jnp.float32)                  # (4H, d_in)
    w_hh = lp["w_hh"].astype(jnp.float32)                  # (4H, H)
    bias = (lp["b_ih"] + lp["b_hh"]).astype(jnp.float32)   # (4H,)
    w_ih_p = jnp.pad(w_ih.reshape(4, H, d_in),
                     ((0, 0), (0, Hp - H), (0, d_in_p - d_in))).reshape(4 * Hp, d_in_p)
    w_hh_p = jnp.pad(w_hh.reshape(4, H, H),
                     ((0, 0), (0, Hp - H), (0, Hp - H))).reshape(4 * Hp, Hp)
    b_p = jnp.pad(bias.reshape(4, H), ((0, 0), (0, Hp - H))).reshape(1, 4 * Hp)
    return (w_ih_p.T.astype(compute_dtype),    # (d_in_p, 4Hp)
            w_hh_p.T.astype(compute_dtype),    # (Hp, 4Hp)
            b_p)                               # (1, 4Hp)  f32


def _pad_head_weights(params, H, Hp, ninterm, Ip, nspeaker, Sp, compute_dtype):
    wp = jnp.pad(params["proj_w"].astype(jnp.float32),
                 ((0, Ip - ninterm), (0, Hp - H)))
    bp = jnp.pad(params["proj_b"].astype(jnp.float32), (0, Ip - ninterm)).reshape(1, Ip)
    wd = jnp.pad(params["dec_w"].astype(jnp.float32),
                 ((0, Sp - nspeaker), (0, Ip - ninterm)))
    bd = jnp.pad(params["dec_b"].astype(jnp.float32), (0, Sp - nspeaker)).reshape(1, Sp)
    return (wp.T.astype(compute_dtype), bp,    # (Hp, Ip), (1, Ip) f32
            wd.T.astype(compute_dtype), bd)    # (Ip, Sp), (1, Sp) f32


# --------------------------------- wrapper ------------------------------------
def lstm_emb_forward(features, params, *, time_block=32, batch_block=None,
                     compute_dtype=jnp.bfloat16):
    """features: (B, T, ninp) batch-first, like the PyTorch module (eval mode)."""
    features = features.astype(jnp.float32)
    B0, T, ninp = features.shape
    nlayers = len(params["lstm"])
    nhid = params["lstm"][0]["w_hh"].shape[1]
    ninterm = params["proj_w"].shape[0]
    nspeaker = params["dec_w"].shape[0]

    # Lane/sublane-dense padded sizes (exact-preserving zero padding).
    Dp = _round_up(ninp, _LANE)
    Hp = _round_up(nhid, _LANE)
    Ip = _round_up(ninterm, _LANE)
    Sp = _round_up(nspeaker, _LANE)
    Bp = _round_up(B0, _SUBLANE)

    if batch_block is None:
        # >= 2 batch blocks whenever the padded batch allows it so v7x's second
        # TensorCore gets half the batch; a 2-long parallel axis is free on
        # v5e/v6e (single TC just iterates it).
        batch_block = _round_up(Bp // 2, _SUBLANE) if Bp >= 2 * _SUBLANE else Bp
    bb = max(_SUBLANE, _round_up(batch_block, _SUBLANE))
    Bp = _round_up(Bp, bb)

    # Time tile: M = tb*bb rows feed the hoisted input-projection matmul, so
    # the default (32 * 8 = 256) fills a 256-wide MXU row block on v6e/v7x.
    tb = _pick_time_block(T, time_block)

    # Pad batch / feature dims, go time-major once, cast matmul operand dtype.
    # TODO(synk): read the batch-first input directly with a (bb, tb, Dp) block
    # and transpose the tile in-kernel to drop this (small, post-fusion) extra
    # HBM pass; kept wrapper-side for lowering robustness of the tile relayout.
    x = jnp.pad(features, ((0, Bp - B0), (0, 0), (0, Dp - ninp)))
    x = jnp.transpose(x, (1, 0, 2)).astype(compute_dtype)   # (T, Bp, Dp)

    # Assemble inputs + specs: x, then per-layer (W_ih^T, W_hh^T, bias), then head.
    def _const_spec(shape):
        return pl.BlockSpec(shape, lambda bi, ti, _n=len(shape): (0,) * _n)

    inputs = [x]
    in_specs = [pl.BlockSpec((tb, bb, Dp), lambda bi, ti: (ti, bi, 0))]
    # TODO(synk): mark the constant weight specs pipeline_mode=pl.Buffered(1)
    # (or verify Mosaic collapses them) to halve their VMEM residency on v7x.
    for li, lp in enumerate(params["lstm"]):
        d_in, d_in_p = (ninp, Dp) if li == 0 else (nhid, Hp)
        wih_t, whh_t, b = _pad_lstm_weights(lp, nhid, Hp, d_in, d_in_p, compute_dtype)
        inputs += [wih_t, whh_t, b]
        in_specs += [_const_spec(wih_t.shape), _const_spec(whh_t.shape),
                     _const_spec(b.shape)]
    # TODO(synk): for very large nspeaker/ninterm, split the head into its own
    # tiny pallas_call instead of keeping wd resident for the whole T loop.
    head = _pad_head_weights(params, nhid, Hp, ninterm, Ip, nspeaker, Sp,
                             compute_dtype)
    inputs += list(head)
    in_specs += [_const_spec(w.shape) for w in head]

    scratch_shapes = [
        pltpu.VMEM((nlayers, bb, Hp), jnp.float32),   # h carry (per layer), f32
        pltpu.VMEM((nlayers, bb, Hp), jnp.float32),   # c carry (per layer), f32
        pltpu.VMEM((tb, bb, Hp), compute_dtype),      # inter-layer hidden seq
        pltpu.VMEM((tb, bb, 4 * Hp), jnp.float32),    # hoisted gate preacts
    ]

    # Explicit VMEM budget from the actual footprint (inputs/weights double-
    # buffered by default + scratch), with headroom; capped below physical.
    wbytes = jnp.dtype(compute_dtype).itemsize
    weight_bytes = 0
    for li in range(nlayers):
        d_in_p = Dp if li == 0 else Hp
        weight_bytes += (d_in_p + Hp) * 4 * Hp * wbytes + 4 * Hp * 4
    weight_bytes += (Hp * Ip + Ip * Sp) * wbytes + (Ip + Sp) * 4
    io_bytes = tb * bb * Dp * wbytes + bb * Sp * 4
    scratch_bytes = (2 * nlayers * bb * Hp * 4
                     + tb * bb * Hp * wbytes
                     + tb * bb * 4 * Hp * 4)
    footprint = 2 * (io_bytes + weight_bytes) + scratch_bytes
    vmem_limit = int(min(128 << 20, max(16 << 20, 2 * footprint + (2 << 20))))

    grid = (Bp // bb, T // tb)          # (parallel batch, arbitrary/innermost time)
    out = pl.pallas_call(
        functools.partial(_fused_lstm_kernel, nlayers=nlayers,
                          compute_dtype=compute_dtype),
        out_shape=jax.ShapeDtypeStruct((Bp, Sp), jnp.float32),
        grid=grid,
        in_specs=in_specs,
        out_specs=pl.BlockSpec((bb, Sp), lambda bi, ti: (bi, 0)),
        scratch_shapes=scratch_shapes,
        compiler_params=pltpu.CompilerParams(
            dimension_semantics=("parallel", "arbitrary"),
            vmem_limit_bytes=vmem_limit),
    )(*inputs)
    return out[:B0, :nspeaker]


# ----------------------------- reference (JAX) ---------------------------------
def reference_forward(features, params, *, matmul_dtype=jnp.float32):
    """Pure-JAX/XLA reference; matmul_dtype mirrors the kernel's operand dtype."""
    cast = lambda a: a.astype(matmul_dtype)
    x = jnp.transpose(features.astype(jnp.float32), (1, 0, 2))   # (T, B, D)
    for lp in params["lstm"]:
        H = lp["w_hh"].shape[1]
        wih_t = cast(lp["w_ih"].T)
        whh_t = cast(lp["w_hh"].T)
        b = (lp["b_ih"] + lp["b_hh"]).astype(jnp.float32)

        def step(carry, x_t, wih_t=wih_t, whh_t=whh_t, b=b, H=H):
            h, c = carry
            gates = (jnp.dot(cast(x_t), wih_t, preferred_element_type=jnp.float32)
                     + jnp.dot(cast(h), whh_t, preferred_element_type=jnp.float32)
                     + b)
            i = jax.nn.sigmoid(gates[:, :H])
            f = jax.nn.sigmoid(gates[:, H:2 * H])
            g = jnp.tanh(gates[:, 2 * H:3 * H])
            o = jax.nn.sigmoid(gates[:, 3 * H:])
            c = f * c + i * g
            h = o * jnp.tanh(c)
            return (h, c), h

        B = x.shape[1]
        h0 = jnp.zeros((B, H), jnp.float32)
        (_, _), x = lax.scan(step, (h0, h0), x)
    h_last = x[-1]
    z = jnp.maximum(
        jnp.dot(cast(h_last), cast(params["proj_w"].T),
                preferred_element_type=jnp.float32) + params["proj_b"], 0.0)
    return (jnp.dot(cast(z), cast(params["dec_w"].T),
                    preferred_element_type=jnp.float32) + params["dec_b"])


# ----------------------------------- params ------------------------------------
def make_params(key, ninp, nhid, ninterm, nlayers, nspeaker):
    params = {"lstm": []}
    initrange = 0.1
    lstm_range = 1.0 / jnp.sqrt(nhid)
    keys = jax.random.split(key, 4 * nlayers + 2)
    for layer in range(nlayers):
        d_in = ninp if layer == 0 else nhid
        k0, k1, k2, k3 = keys[4 * layer:4 * layer + 4]
        params["lstm"].append({
            "w_ih": jax.random.uniform(k0, (4 * nhid, d_in), jnp.float32,
                                       -lstm_range, lstm_range),
            "w_hh": jax.random.uniform(k1, (4 * nhid, nhid), jnp.float32,
                                       -lstm_range, lstm_range),
            "b_ih": jax.random.uniform(k2, (4 * nhid,), jnp.float32,
                                       -lstm_range, lstm_range),
            "b_hh": jax.random.uniform(k3, (4 * nhid,), jnp.float32,
                                       -lstm_range, lstm_range),
        })
    kp, kd = keys[-2], keys[-1]
    params["proj_w"] = jax.random.uniform(kp, (ninterm, nhid), jnp.float32,
                                          -initrange, initrange)
    params["proj_b"] = jnp.zeros((ninterm,), jnp.float32)
    params["dec_w"] = jax.random.uniform(kd, (nspeaker, ninterm), jnp.float32,
                                         -initrange, initrange)
    params["dec_b"] = jnp.zeros((nspeaker,), jnp.float32)
    return params


# ------------------------------------ main --------------------------------------
if __name__ == "__main__":
    B, T = 2, 16
    ninp, nhid, ninterm, nlayers, nspeaker = 16, 32, 32, 2, 8

    key = jax.random.PRNGKey(0)
    kx, kp, kx2 = jax.random.split(key, 3)
    features = jax.random.normal(kx, (B, T, ninp), jnp.float32)
    params = make_params(kp, ninp, nhid, ninterm, nlayers, nspeaker)

    # Config 1: bf16 matmul operands, two time blocks (exercises the h/c carry
    # across time blocks plus the pl.when-guarded reset / fused head epilogue).
    out = jax.block_until_ready(
        lstm_emb_forward(features, params, time_block=8,
                         compute_dtype=jnp.bfloat16))
    ref_bf16 = jax.block_until_ready(
        reference_forward(features, params, matmul_dtype=jnp.bfloat16))
    ref_f32 = jax.block_until_ready(reference_forward(features, params))
    assert out.shape == (B, nspeaker)
    assert jnp.allclose(out, ref_bf16, atol=2e-3, rtol=2e-3), \
        "mismatch vs bf16-policy reference (cfg 1)"
    assert jnp.allclose(out, ref_f32, atol=5e-2, rtol=5e-2), \
        "bf16 kernel drifted too far from f32 reference (cfg 1)"

    # Config 2: f32 matmuls, ragged batch (10 -> padded 16) -> two batch blocks
    # on the parallel axis and two time blocks on the arbitrary axis.
    B2 = 10
    features2 = jax.random.normal(kx2, (B2, T, ninp), jnp.float32)
    out2 = jax.block_until_ready(
        lstm_emb_forward(features2, params, time_block=8,
                         compute_dtype=jnp.float32))
    ref2 = jax.block_until_ready(reference_forward(features2, params))
    assert out2.shape == (B2, nspeaker)
    assert jnp.allclose(out2, ref2, atol=1e-3, rtol=1e-3), \
        "mismatch vs f32 reference (cfg 2)"

    print("KERNEL_OK")
</pallas_src>

<mosaic_0001>
module attributes {stable_mosaic.version = 11 : i64} {
  func.func @_fused_lstm_kernel(%arg0: i32, %arg1: i32, %arg2: memref<8x8x128xbf16, #tpu.memory_space<vmem>>, %arg3: memref<128x512xbf16, #tpu.memory_space<vmem>>, %arg4: memref<128x512xbf16, #tpu.memory_space<vmem>>, %arg5: memref<1x512xf32, #tpu.memory_space<vmem>>, %arg6: memref<128x512xbf16, #tpu.memory_space<vmem>>, %arg7: memref<128x512xbf16, #tpu.memory_space<vmem>>, %arg8: memref<1x512xf32, #tpu.memory_space<vmem>>, %arg9: memref<128x128xbf16, #tpu.memory_space<vmem>>, %arg10: memref<1x128xf32, #tpu.memory_space<vmem>>, %arg11: memref<128x128xbf16, #tpu.memory_space<vmem>>, %arg12: memref<1x128xf32, #tpu.memory_space<vmem>>, %arg13: memref<8x128xf32, #tpu.memory_space<vmem>>, %arg14: memref<2x8x128xf32, #tpu.memory_space<vmem>>, %arg15: memref<2x8x128xf32, #tpu.memory_space<vmem>>, %arg16: memref<8x8x128xbf16, #tpu.memory_space<vmem>>, %arg17: memref<8x8x512xf32, #tpu.memory_space<vmem>>) attributes {dimension_semantics = [#tpu.dimension_semantics<parallel>, #tpu.dimension_semantics<arbitrary>], iteration_bounds = array<i64: 1, 2>, scalar_prefetch = 0 : i64, scratch_operands = 4 : i64, tpu.core_type = #tpu.core_type<tc>, window_params = [{transform_indices = @transform_0, window_bounds = array<i64: 8, 8, 128>}, {pipeline_mode = #tpu.pipeline_mode<synchronous>, transform_indices = @transform_1, window_bounds = array<i64: 128, 512>}, {pipeline_mode = #tpu.pipeline_mode<synchronous>, transform_indices = @transform_2, window_bounds = array<i64: 128, 512>}, {pipeline_mode = #tpu.pipeline_mode<synchronous>, transform_indices = @transform_3, window_bounds = array<i64: 1, 512>}, {pipeline_mode = #tpu.pipeline_mode<synchronous>, transform_indices = @transform_4, window_bounds = array<i64: 128, 512>}, {pipeline_mode = #tpu.pipeline_mode<synchronous>, transform_indices = @transform_5, window_bounds = array<i64: 128, 512>}, {pipeline_mode = #tpu.pipeline_mode<synchronous>, transform_indices = @transform_6, window_bounds = array<i64: 1, 512>}, {pipeline_mode = #tpu.pipeline_mode<synchronous>, transform_indices = @transform_7, window_bounds = array<i64: 128, 128>}, {pipeline_mode = #tpu.pipeline_mode<synchronous>, transform_indices = @transform_8, window_bounds = array<i64: 1, 128>}, {pipeline_mode = #tpu.pipeline_mode<synchronous>, transform_indices = @transform_9, window_bounds = array<i64: 128, 128>}, {pipeline_mode = #tpu.pipeline_mode<synchronous>, transform_indices = @transform_10, window_bounds = array<i64: 1, 128>}, {transform_indices = @transform_11, window_bounds = array<i64: 8, 128>}]} {
    %c0_i32 = arith.constant 0 : i32
    %0 = arith.cmpi eq, %arg1, %c0_i32 : i32
    %1 = arith.extui %0 : i1 to i32
    %c0_i32_0 = arith.constant 0 : i32
    %2 = arith.cmpi ne, %1, %c0_i32_0 : i32
    scf.if %2 {
      %cst_275 = arith.constant 0.000000e+00 : f32
      %654 = vector.broadcast %cst_275 : f32 to vector<2x8x128xf32>
      %c0_276 = arith.constant 0 : index
      %c0_277 = arith.constant 0 : index
      %c0_278 = arith.constant 0 : index
      %655 = vector.load %arg14[%c0_276, %c0_277, %c0_278] : memref<2x8x128xf32, #tpu.memory_space<vmem>>, vector<2x8x128xf32>
      tpu.vector_store %arg14[%c0_276, %c0_277, %c0_278], %654 {strides = array<i32>} : memref<2x8x128xf32, #tpu.memory_space<vmem>>, vector<2x8x128xf32>,
      %cst_279 = arith.constant 0.000000e+00 : f32
      %656 = vector.broadcast %cst_279 : f32 to vector<2x8x128xf32>
      %c0_280 = arith.constant 0 : index
      %c0_281 = arith.constant 0 : index
      %c0_282 = arith.constant 0 : index
      %657 = vector.load %arg15[%c0_280, %c0_281, %c0_282] : memref<2x8x128xf32, #tpu.memory_space<vmem>>, vector<2x8x128xf32>
      tpu.vector_store %arg15[%c0_280, %c0_281, %c0_282], %656 {strides = array<i32>} : memref<2x8x128xf32, #tpu.memory_space<vmem>>, vector<2x8x128xf32>,
    } else {
    }
    %c0 = arith.constant 0 : index
    %c0_1 = arith.constant 0 : index
    %c0_2 = arith.constant 0 : index
    %3 = vector.load %arg2[%c0, %c0_1, %c0_2] : memref<8x8x128xbf16, #tpu.memory_space<vmem>>, vector<8x8x128xbf16>
    %4 = vector.shape_cast %3 : vector<8x8x128xbf16> to vector<64x128xbf16>
    %c0_3 = arith.constant 0 : index
    %c0_4 = arith.constant 0 : index
    %5 = vector.load %arg3[%c0_3, %c0_4] : memref<128x512xbf16, #tpu.memory_space<vmem>>, vector<128x512xbf16>
    %cst = arith.constant dense<0.000000e+00> : vector<64x512xf32>
    %6 = tpu.matmul %4, %5, %cst {dimension_numbers = #tpu.dot_dimension_numbers<[1], [0], [0], [1], [0, 0, 1, 1], [], []>} : vector<64x128xbf16>, vector<128x512xbf16>, vector<64x512xf32> -> vector<64x512xf32>
    %c0_5 = arith.constant 0 : index
    %c0_6 = arith.constant 0 : index
    %7 = vector.load %arg5[%c0_5, %c0_6] : memref<1x512xf32, #tpu.memory_space<vmem>>, vector<1x512xf32>
    %8 = vector.broadcast %7 : vector<1x512xf32> to vector<64x512xf32>
    %9 = arith.addf %6, %8 : vector<64x512xf32>
    %10 = vector.shape_cast %9 : vector<64x512xf32> to vector<8x8x512xf32>
    %c0_7 = arith.constant 0 : index
    %c0_8 = arith.constant 0 : index
    %c0_9 = arith.constant 0 : index
    %11 = vector.load %arg17[%c0_7, %c0_8, %c0_9] : memref<8x8x512xf32, #tpu.memory_space<vmem>>, vector<8x8x512xf32>
    tpu.vector_store %arg17[%c0_7, %c0_8, %c0_9], %10 {strides = array<i32>} : memref<8x8x512xf32, #tpu.memory_space<vmem>>, vector<8x8x512xf32>,
    %c0_10 = arith.constant 0 : index
    %c0_11 = arith.constant 0 : index
    %12 = vector.load %arg4[%c0_10, %c0_11] : memref<128x512xbf16, #tpu.memory_space<vmem>>, vector<128x512xbf16>
    %c0_12 = arith.constant 0 : index
    %c0_13 = arith.constant 0 : index
    %c0_14 = arith.constant 0 : index
    %13 = vector.load %arg14[%c0_12, %c0_13, %c0_14] : memref<2x8x128xf32, #tpu.memory_space<vmem>>, vector<1x8x128xf32>
    %14 = vector.shape_cast %13 : vector<1x8x128xf32> to vector<8x128xf32>
    %c0_15 = arith.constant 0 : index
    %c0_16 = arith.constant 0 : index
    %c0_17 = arith.constant 0 : index
    %15 = vector.load %arg15[%c0_15, %c0_16, %c0_17] : memref<2x8x128xf32, #tpu.memory_space<vmem>>, vector<1x8x128xf32>
    %16 = vector.shape_cast %15 : vector<1x8x128xf32> to vector<8x128xf32>
    %c0_18 = arith.constant 0 : index
    %c0_19 = arith.constant 0 : index
    %c0_20 = arith.constant 0 : index
    %17 = vector.load %arg17[%c0_18, %c0_19, %c0_20] : memref<8x8x512xf32, #tpu.memory_space<vmem>>, vector<1x8x512xf32>
    %18 = vector.shape_cast %17 : vector<1x8x512xf32> to vector<8x512xf32>
    %19 = arith.truncf %14 : vector<8x128xf32> to vector<8x128xbf16>
    %cst_21 = arith.constant dense<0.000000e+00> : vector<8x512xf32>
    %20 = tpu.matmul %19, %12, %cst_21 {dimension_numbers = #tpu.dot_dimension_numbers<[1], [0], [0], [1], [0, 0, 1, 1], [], []>} : vector<8x128xbf16>, vector<128x512xbf16>, vector<8x512xf32> -> vector<8x512xf32>
    %21 = arith.addf %18, %20 : vector<8x512xf32>
    %22 = vector.extract_strided_slice %21 {offsets = [0, 0], sizes = [8, 128], strides = [1, 1]} : vector<8x512xf32> to vector<8x128xf32>
    %cst_22 = arith.constant 5.000000e-01 : f32
    %23 = vector.broadcast %cst_22 : f32 to vector<8x128xf32>
    %24 = arith.mulf %23, %22 : vector<8x128xf32>
    %25 = math.tanh %24 : vector<8x128xf32>
    %cst_23 = arith.constant 5.000000e-01 : f32
    %26 = vector.broadcast %cst_23 : f32 to vector<8x128xf32>
    %27 = arith.mulf %26, %25 : vector<8x128xf32>
    %cst_24 = arith.constant 5.000000e-01 : f32
    %28 = vector.broadcast %cst_24 : f32 to vector<8x128xf32>
    %29 = arith.addf %27, %28 : vector<8x128xf32>
    %30 = vector.extract_strided_slice %21 {offsets = [0, 128], sizes = [8, 128], strides = [1, 1]} : vector<8x512xf32> to vector<8x128xf32>
    %cst_25 = arith.constant 5.000000e-01 : f32
    %31 = vector.broadcast %cst_25 : f32 to vector<8x128xf32>
    %32 = arith.mulf %31, %30 : vector<8x128xf32>
    %33 = math.tanh %32 : vector<8x128xf32>
    %cst_26 = arith.constant 5.000000e-01 : f32
    %34 = vector.broadcast %cst_26 : f32 to vector<8x128xf32>
    %35 = arith.mulf %34, %33 : vector<8x128xf32>
    %cst_27 = arith.constant 5.000000e-01 : f32
    %36 = vector.broadcast %cst_27 : f32 to vector<8x128xf32>
    %37 = arith.addf %35, %36 : vector<8x128xf32>
    %38 = vector.extract_strided_slice %21 {offsets = [0, 256], sizes = [8, 128], strides = [1, 1]} : vector<8x512xf32> to vector<8x128xf32>
    %39 = math.tanh %38 : vector<8x128xf32>
    %40 = vector.extract_strided_slice %21 {offsets = [0, 384], sizes = [8, 128], strides = [1, 1]} : vector<8x512xf32> to vector<8x128xf32>
    %cst_28 = arith.constant 5.000000e-01 : f32
    %41 = vector.broadcast %cst_28 : f32 to vector<8x128xf32>
    %42 = arith.mulf %41, %40 : vector<8x128xf32>
    %43 = math.tanh %42 : vector<8x128xf32>
    %cst_29 = arith.constant 5.000000e-01 : f32
    %44 = vector.broadcast %cst_29 : f32 to vector<8x128xf32>
    %45 = arith.mulf %44, %43 : vector<8x128xf32>
    %cst_30 = arith.constant 5.000000e-01 : f32
    %46 = vector.broadcast %cst_30 : f32 to vector<8x128xf32>
    %47 = arith.addf %45, %46 : vector<8x128xf32>
    %48 = arith.mulf %37, %16 : vector<8x128xf32>
    %49 = arith.mulf %29, %39 : vector<8x128xf32>
    %50 = arith.addf %48, %49 : vector<8x128xf32>
    %51 = math.tanh %50 : vector<8x128xf32>
    %52 = arith.mulf %47, %51 : vector<8x128xf32>
    %53 = arith.truncf %52 : vector<8x128xf32> to vector<8x128xbf16>
    %c0_31 = arith.constant 0 : index
    %c0_32 = arith.constant 0 : index
    %c0_33 = arith.constant 0 : index
    %54 = vector.load %arg16[%c0_31, %c0_32, %c0_33] : memref<8x8x128xbf16, #tpu.memory_space<vmem>>, vector<1x8x128xbf16>
    %55 = vector.shape_cast %54 : vector<1x8x128xbf16> to vector<8x128xbf16>
    %56 = vector.shape_cast %53 : vector<8x128xbf16> to vector<1x8x128xbf16>
    tpu.vector_store %arg16[%c0_31, %c0_32, %c0_33], %56 {strides = array<i32>} : memref<8x8x128xbf16, #tpu.memory_space<vmem>>, vector<1x8x128xbf16>,
    %c1 = arith.constant 1 : index
    %c0_34 = arith.constant 0 : index
    %c0_35 = arith.constant 0 : index
    %57 = vector.load %arg17[%c1, %c0_34, %c0_35] : memref<8x8x512xf32, #tpu.memory_space<vmem>>, vector<1x8x512xf32>
    %58 = vector.shape_cast %57 : vector<1x8x512xf32> to vector<8x512xf32>
    %59 = arith.truncf %52 : vector<8x128xf32> to vector<8x128xbf16>
    %cst_36 = arith.constant dense<0.000000e+00> : vector<8x512xf32>
    %60 = tpu.matmul %59, %12, %cst_36 {dimension_numbers = #tpu.dot_dimension_numbers<[1], [0], [0], [1], [0, 0, 1, 1], [], []>} : vector<8x128xbf16>, vector<128x512xbf16>, vector<8x512xf32> -> vector<8x512xf32>
    %61 = arith.addf %58, %60 : vector<8x512xf32>
    %62 = vector.extract_strided_slice %61 {offsets = [0, 0], sizes = [8, 128], strides = [1, 1]} : vector<8x512xf32> to vector<8x128xf32>
    %cst_37 = arith.constant 5.000000e-01 : f32
    %63 = vector.broadcast %cst_37 : f32 to vector<8x128xf32>
    %64 = arith.mulf %63, %62 : vector<8x128xf32>
    %65 = math.tanh %64 : vector<8x128xf32>
    %cst_38 = arith.constant 5.000000e-01 : f32
    %66 = vector.broadcast %cst_38 : f32 to vector<8x128xf32>
    %67 = arith.mulf %66, %65 : vector<8x128xf32>
    %cst_39 = arith.constant 5.000000e-01 : f32
    %68 = vector.broadcast %cst_39 : f32 to vector<8x128xf32>
    %69 = arith.addf %67, %68 : vector<8x128xf32>
    %70 = vector.extract_strided_slice %61 {offsets = [0, 128], sizes = [8, 128], strides = [1, 1]} : vector<8x512xf32> to vector<8x128xf32>
    %cst_40 = arith.constant 5.000000e-01 : f32
    %71 = vector.broadcast %cst_40 : f32 to vector<8x128xf32>
    %72 = arith.mulf %71, %70 : vector<8x128xf32>
    %73 = math.tanh %72 : vector<8x128xf32>
    %cst_41 = arith.constant 5.000000e-01 : f32
    %74 = vector.broadcast %cst_41 : f32 to vector<8x128xf32>
    %75 = arith.mulf %74, %73 : vector<8x128xf32>
    %cst_42 = arith.constant 5.000000e-01 : f32
    %76 = vector.broadcast %cst_42 : f32 to vector<8x128xf32>
    %77 = arith.addf %75, %76 : vector<8x128xf32>
    %78 = vector.extract_strided_slice %61 {offsets = [0, 256], sizes = [8, 128], strides = [1, 1]} : vector<8x512xf32> to vector<8x128xf32>
    %79 = math.tanh %78 : vector<8x128xf32>
    %80 = vector.extract_strided_slice %61 {offsets = [0, 384], sizes = [8, 128], strides = [1, 1]} : vector<8x512xf32> to vector<8x128xf32>
    %cst_43 = arith.constant 5.000000e-01 : f32
    %81 = vector.broadcast %cst_43 : f32 to vector<8x128xf32>
    %82 = arith.mulf %81, %80 : vector<8x128xf32>
    %83 = math.tanh %82 : vector<8x128xf32>
    %cst_44 = arith.constant 5.000000e-01 : f32
    %84 = vector.broadcast %cst_44 : f32 to vector<8x128xf32>
    %85 = arith.mulf %84, %83 : vector<8x128xf32>
    %cst_45 = arith.constant 5.000000e-01 : f32
    %86 = vector.broadcast %cst_45 : f32 to vector<8x128xf32>
    %87 = arith.addf %85, %86 : vector<8x128xf32>
    %88 = arith.mulf %77, %50 : vector<8x128xf32>
    %89 = arith.mulf %69, %79 : vector<8x128xf32>
    %90 = arith.addf %88, %89 : vector<8x128xf32>
    %91 = math.tanh %90 : vector<8x128xf32>
    %92 = arith.mulf %87, %91 : vector<8x128xf32>
    %93 = arith.truncf %92 : vector<8x128xf32> to vector<8x128xbf16>
    %c1_46 = arith.constant 1 : index
    %c0_47 = arith.constant 0 : index
    %c0_48 = arith.constant 0 : index
    %94 = vector.load %arg16[%c1_46, %c0_47, %c0_48] : memref<8x8x128xbf16, #tpu.memory_space<vmem>>, vector<1x8x128xbf16>
    %95 = vector.shape_cast %94 : vector<1x8x128xbf16> to vector<8x128xbf16>
    %96 = vector.shape_cast %93 : vector<8x128xbf16> to vector<1x8x128xbf16>
    tpu.vector_store %arg16[%c1_46, %c0_47, %c0_48], %96 {strides = array<i32>} : memref<8x8x128xbf16, #tpu.memory_space<vmem>>, vector<1x8x128xbf16>,
    %c2 = arith.constant 2 : index
    %c0_49 = arith.constant 0 : index
    %c0_50 = arith.constant 0 : index
    %97 = vector.load %arg17[%c2, %c0_49, %c0_50] : memref<8x8x512xf32, #tpu.memory_space<vmem>>, vector<1x8x512xf32>
    %98 = vector.shape_cast %97 : vector<1x8x512xf32> to vector<8x512xf32>
    %99 = arith.truncf %92 : vector<8x128xf32> to vector<8x128xbf16>
    %cst_51 = arith.constant dense<0.000000e+00> : vector<8x512xf32>
    %100 = tpu.matmul %99, %12, %cst_51 {dimension_numbers = #tpu.dot_dimension_numbers<[1], [0], [0], [1], [0, 0, 1, 1], [], []>} : vector<8x128xbf16>, vector<128x512xbf16>, vector<8x512xf32> -> vector<8x512xf32>
    %101 = arith.addf %98, %100 : vector<8x512xf32>
    %102 = vector.extract_strided_slice %101 {offsets = [0, 0], sizes = [8, 128], strides = [1, 1]} : vector<8x512xf32> to vector<8x128xf32>
    %cst_52 = arith.constant 5.000000e-01 : f32
    %103 = vector.broadcast %cst_52 : f32 to vector<8x128xf32>
    %104 = arith.mulf %103, %102 : vector<8x128xf32>
    %105 = math.tanh %104 : vector<8x128xf32>
    %cst_53 = arith.constant 5.000000e-01 : f32
    %106 = vector.broadcast %cst_53 : f32 to vector<8x128xf32>
    %107 = arith.mulf %106, %105 : vector<8x128xf32>
    %cst_54 = arith.constant 5.000000e-01 : f32
    %108 = vector.broadcast %cst_54 : f32 to vector<8x128xf32>
    %109 = arith.addf %107, %108 : vector<8x128xf32>
    %110 = vector.extract_strided_slice %101 {offsets = [0, 128], sizes = [8, 128], strides = [1, 1]} : vector<8x512xf32> to vector<8x128xf32>
    %cst_55 = arith.constant 5.000000e-01 : f32
    %111 = vector.broadcast %cst_55 : f32 to vector<8x128xf32>
    %112 = arith.mulf %111, %110 : vector<8x128xf32>
    %113 = math.tanh %112 : vector<8x128xf32>
    %cst_56 = arith.constant 5.000000e-01 : f32
    %114 = vector.broadcast %cst_56 : f32 to vector<8x128xf32>
    %115 = arith.mulf %114, %113 : vector<8x128xf32>
    %cst_57 = arith.constant 5.000000e-01 : f32
    %116 = vector.broadcast %cst_57 : f32 to vector<8x128xf32>
    %117 = arith.addf %115, %116 : vector<8x128xf32>
    %118 = vector.extract_strided_slice %101 {offsets = [0, 256], sizes = [8, 128], strides = [1, 1]} : vector<8x512xf32> to vector<8x128xf32>
    %119 = math.tanh %118 : vector<8x128xf32>
    %120 = vector.extract_strided_slice %101 {offsets = [0, 384], sizes = [8, 128], strides = [1, 1]} : vector<8x512xf32> to vector<8x128xf32>
    %cst_58 = arith.constant 5.000000e-01 : f32
    %121 = vector.broadcast %cst_58 : f32 to vector<8x128xf32>
    %122 = arith.mulf %121, %120 : vector<8x128xf32>
    %123 = math.tanh %122 : vector<8x128xf32>
    %cst_59 = arith.constant 5.000000e-01 : f32
    %124 = vector.broadcast %cst_59 : f32 to vector<8x128xf32>
    %125 = arith.mulf %124, %123 : vector<8x128xf32>
    %cst_60 = arith.constant 5.000000e-01 : f32
    %126 = vector.broadcast %cst_60 : f32 to vector<8x128xf32>
    %127 = arith.addf %125, %126 : vector<8x128xf32>
    %128 = arith.mulf %117, %90 : vector<8x128xf32>
    %129 = arith.mulf %109, %119 : vector<8x128xf32>
    %130 = arith.addf %128, %129 : vector<8x128xf32>
    %131 = math.tanh %130 : vector<8x128xf32>
    %132 = arith.mulf %127, %131 : vector<8x128xf32>
    %133 = arith.truncf %132 : vector<8x128xf32> to vector<8x128xbf16>
    %c2_61 = arith.constant 2 : index
    %c0_62 = arith.constant 0 : index
    %c0_63 = arith.constant 0 : index
    %134 = vector.load %arg16[%c2_61, %c0_62, %c0_63] : memref<8x8x128xbf16, #tpu.memory_space<vmem>>, vector<1x8x128xbf16>
    %135 = vector.shape_cast %134 : vector<1x8x128xbf16> to vector<8x128xbf16>
    %136 = vector.shape_cast %133 : vector<8x128xbf16> to vector<1x8x128xbf16>
    tpu.vector_store %arg16[%c2_61, %c0_62, %c0_63], %136 {strides = array<i32>} : memref<8x8x128xbf16, #tpu.memory_space<vmem>>, vector<1x8x128xbf16>,
    %c3 = arith.constant 3 : index
    %c0_64 = arith.constant 0 : index
    %c0_65 = arith.constant 0 : index
    %137 = vector.load %arg17[%c3, %c0_64, %c0_65] : memref<8x8x512xf32, #tpu.memory_space<vmem>>, vector<1x8x512xf32>
    %138 = vector.shape_cast %137 : vector<1x8x512xf32> to vector<8x512xf32>
    %139 = arith.truncf %132 : vector<8x128xf32> to vector<8x128xbf16>
    %cst_66 = arith.constant dense<0.000000e+00> : vector<8x512xf32>
    %140 = tpu.matmul %139, %12, %cst_66 {dimension_numbers = #tpu.dot_dimension_numbers<[1], [0], [0], [1], [0, 0, 1, 1], [], []>} : vector<8x128xbf16>, vector<128x512xbf16>, vector<8x512xf32> -> vector<8x512xf32>
    %141 = arith.addf %138, %140 : vector<8x512xf32>
    %142 = vector.extract_strided_slice %141 {offsets = [0, 0], sizes = [8, 128], strides = [1, 1]} : vector<8x512xf32> to vector<8x128xf32>
    %cst_67 = arith.constant 5.000000e-01 : f32
    %143 = vector.broadcast %cst_67 : f32 to vector<8x128xf32>
    %144 = arith.mulf %143, %142 : vector<8x128xf32>
    %145 = math.tanh %144 : vector<8x128xf32>
    %cst_68 = arith.constant 5.000000e-01 : f32
    %146 = vector.broadcast %cst_68 : f32 to vector<8x128xf32>
    %147 = arith.mulf %146, %145 : vector<8x128xf32>
    %cst_69 = arith.constant 5.000000e-01 : f32
    %148 = vector.broadcast %cst_69 : f32 to vector<8x128xf32>
    %149 = arith.addf %147, %148 : vector<8x128xf32>
    %150 = vector.extract_strided_slice %141 {offsets = [0, 128], sizes = [8, 128], strides = [1, 1]} : vector<8x512xf32> to vector<8x128xf32>
    %cst_70 = arith.constant 5.000000e-01 : f32
    %151 = vector.broadcast %cst_70 : f32 to vector<8x128xf32>
    %152 = arith.mulf %151, %150 : vector<8x128xf32>
    %153 = math.tanh %152 : vector<8x128xf32>
    %cst_71 = arith.constant 5.000000e-01 : f32
    %154 = vector.broadcast %cst_71 : f32 to vector<8x128xf32>
    %155 = arith.mulf %154, %153 : vector<8x128xf32>
    %cst_72 = arith.constant 5.000000e-01 : f32
    %156 = vector.broadcast %cst_72 : f32 to vector<8x128xf32>
    %157 = arith.addf %155, %156 : vector<8x128xf32>
    %158 = vector.extract_strided_slice %141 {offsets = [0, 256], sizes = [8, 128], strides = [1, 1]} : vector<8x512xf32> to vector<8x128xf32>
    %159 = math.tanh %158 : vector<8x128xf32>
    %160 = vector.extract_strided_slice %141 {offsets = [0, 384], sizes = [8, 128], strides = [1, 1]} : vector<8x512xf32> to vector<8x128xf32>
    %cst_73 = arith.constant 5.000000e-01 : f32
    %161 = vector.broadcast %cst_73 : f32 to vector<8x128xf32>
    %162 = arith.mulf %161, %160 : vector<8x128xf32>
    %163 = math.tanh %162 : vector<8x128xf32>
    %cst_74 = arith.constant 5.000000e-01 : f32
    %164 = vector.broadcast %cst_74 : f32 to vector<8x128xf32>
    %165 = arith.mulf %164, %163 : vector<8x128xf32>
    %cst_75 = arith.constant 5.000000e-01 : f32
    %166 = vector.broadcast %cst_75 : f32 to vector<8x128xf32>
    %167 = arith.addf %165, %166 : vector<8x128xf32>
    %168 = arith.mulf %157, %130 : vector<8x128xf32>
    %169 = arith.mulf %149, %159 : vector<8x128xf32>
    %170 = arith.addf %168, %169 : vector<8x128xf32>
    %171 = math.tanh %170 : vector<8x128xf32>
    %172 = arith.mulf %167, %171 : vector<8x128xf32>
    %173 = arith.truncf %172 : vector<8x128xf32> to vector<8x128xbf16>
    %c3_76 = arith.constant 3 : index
    %c0_77 = arith.constant 0 : index
    %c0_78 = arith.constant 0 : index
    %174 = vector.load %arg16[%c3_76, %c0_77, %c0_78] : memref<8x8x128xbf16, #tpu.memory_space<vmem>>, vector<1x8x128xbf16>
    %175 = vector.shape_cast %174 : vector<1x8x128xbf16> to vector<8x128xbf16>
    %176 = vector.shape_cast %173 : vector<8x128xbf16> to vector<1x8x128xbf16>
    tpu.vector_store %arg16[%c3_76, %c0_77, %c0_78], %176 {strides = array<i32>} : memref<8x8x128xbf16, #tpu.memory_space<vmem>>, vector<1x8x128xbf16>,
    %c4 = arith.constant 4 : index
    %c0_79 = arith.constant 0 : index
    %c0_80 = arith.constant 0 : index
    %177 = vector.load %arg17[%c4, %c0_79, %c0_80] : memref<8x8x512xf32, #tpu.memory_space<vmem>>, vector<1x8x512xf32>
    %178 = vector.shape_cast %177 : vector<1x8x512xf32> to vector<8x512xf32>
    %179 = arith.truncf %172 : vector<8x128xf32> to vector<8x128xbf16>
    %cst_81 = arith.constant dense<0.000000e+00> : vector<8x512xf32>
    %180 = tpu.matmul %179, %12, %cst_81 {dimension_numbers = #tpu.dot_dimension_numbers<[1], [0], [0], [1], [0, 0, 1, 1], [], []>} : vector<8x128xbf16>, vector<128x512xbf16>, vector<8x512xf32> -> vector<8x512xf32>
    %181 = arith.addf %178, %180 : vector<8x512xf32>
    %182 = vector.extract_strided_slice %181 {offsets = [0, 0], sizes = [8, 128], strides = [1, 1]} : vector<8x512xf32> to vector<8x128xf32>
    %cst_82 = arith.constant 5.000000e-01 : f32
    %183 = vector.broadcast %cst_82 : f32 to vector<8x128xf32>
    %184 = arith.mulf %183, %182 : vector<8x128xf32>
    %185 = math.tanh %184 : vector<8x128xf32>
    %cst_83 = arith.constant 5.000000e-01 : f32
    %186 = vector.broadcast %cst_83 : f32 to vector<8x128xf32>
    %187 = arith.mulf %186, %185 : vector<8x128xf32>
    %cst_84 = arith.constant 5.000000e-01 : f32
    %188 = vector.broadcast %cst_84 : f32 to vector<8x128xf32>
    %189 = arith.addf %187, %188 : vector<8x128xf32>
    %190 = vector.extract_strided_slice %181 {offsets = [0, 128], sizes = [8, 128], strides = [1, 1]} : vector<8x512xf32> to vector<8x128xf32>
    %cst_85 = arith.constant 5.000000e-01 : f32
    %191 = vector.broadcast %cst_85 : f32 to vector<8x128xf32>
    %192 = arith.mulf %191, %190 : vector<8x128xf32>
    %193 = math.tanh %192 : vector<8x128xf32>
    %cst_86 = arith.constant 5.000000e-01 : f32
    %194 = vector.broadcast %cst_86 : f32 to vector<8x128xf32>
    %195 = arith.mulf %194, %193 : vector<8x128xf32>
    %cst_87 = arith.constant 5.000000e-01 : f32
    %196 = vector.broadcast %cst_87 : f32 to vector<8x128xf32>
    %197 = arith.addf %195, %196 : vector<8x128xf32>
    %198 = vector.extract_strided_slice %181 {offsets = [0, 256], sizes = [8, 128], strides = [1, 1]} : vector<8x512xf32> to vector<8x128xf32>
    %199 = math.tanh %198 : vector<8x128xf32>
    %200 = vector.extract_strided_slice %181 {offsets = [0, 384], sizes = [8, 128], strides = [1, 1]} : vector<8x512xf32> to vector<8x128xf32>
    %cst_88 = arith.constant 5.000000e-01 : f32
    %201 = vector.broadcast %cst_88 : f32 to vector<8x128xf32>
    %202 = arith.mulf %201, %200 : vector<8x128xf32>
    %203 = math.tanh %202 : vector<8x128xf32>
    %cst_89 = arith.constant 5.000000e-01 : f32
    %204 = vector.broadcast %cst_89 : f32 to vector<8x128xf32>
    %205 = arith.mulf %204, %203 : vector<8x128xf32>
    %cst_90 = arith.constant 5.000000e-01 : f32
    %206 = vector.broadcast %cst_90 : f32 to vector<8x128xf32>
    %207 = arith.addf %205, %206 : vector<8x128xf32>
    %208 = arith.mulf %197, %170 : vector<8x128xf32>
    %209 = arith.mulf %189, %199 : vector<8x128xf32>
    %210 = arith.addf %208, %209 : vector<8x128xf32>
    %211 = math.tanh %210 : vector<8x128xf32>
    %212 = arith.mulf %207, %211 : vector<8x128xf32>
    %213 = arith.truncf %212 : vector<8x128xf32> to vector<8x128xbf16>
    %c4_91 = arith.constant 4 : index
    %c0_92 = arith.constant 0 : index
    %c0_93 = arith.constant 0 : index
    %214 = vector.load %arg16[%c4_91, %c0_92, %c0_93] : memref<8x8x128xbf16, #tpu.memory_space<vmem>>, vector<1x8x128xbf16>
    %215 = vector.shape_cast %214 : vector<1x8x128xbf16> to vector<8x128xbf16>
    %216 = vector.shape_cast %213 : vector<8x128xbf16> to vector<1x8x128xbf16>
    tpu.vector_store %arg16[%c4_91, %c0_92, %c0_93], %216 {strides = array<i32>} : memref<8x8x128xbf16, #tpu.memory_space<vmem>>, vector<1x8x128xbf16>,
    %c5 = arith.constant 5 : index
    %c0_94 = arith.constant 0 : index
    %c0_95 = arith.constant 0 : index
    %217 = vector.load %arg17[%c5, %c0_94, %c0_95] : memref<8x8x512xf32, #tpu.memory_space<vmem>>, vector<1x8x512xf32>
    %218 = vector.shape_cast %217 : vector<1x8x512xf32> to vector<8x512xf32>
    %219 = arith.truncf %212 : vector<8x128xf32> to vector<8x128xbf16>
    %cst_96 = arith.constant dense<0.000000e+00> : vector<8x512xf32>
    %220 = tpu.matmul %219, %12, %cst_96 {dimension_numbers = #tpu.dot_dimension_numbers<[1], [0], [0], [1], [0, 0, 1, 1], [], []>} : vector<8x128xbf16>, vector<128x512xbf16>, vector<8x512xf32> -> vector<8x512xf32>
    %221 = arith.addf %218, %220 : vector<8x512xf32>
    %222 = vector.extract_strided_slice %221 {offsets = [0, 0], sizes = [8, 128], strides = [1, 1]} : vector<8x512xf32> to vector<8x128xf32>
    %cst_97 = arith.constant 5.000000e-01 : f32
    %223 = vector.broadcast %cst_97 : f32 to vector<8x128xf32>
    %224 = arith.mulf %223, %222 : vector<8x128xf32>
    %225 = math.tanh %224 : vector<8x128xf32>
    %cst_98 = arith.constant 5.000000e-01 : f32
    %226 = vector.broadcast %cst_98 : f32 to vector<8x128xf32>
    %227 = arith.mulf %226, %225 : vector<8x128xf32>
    %cst_99 = arith.constant 5.000000e-01 : f32
    %228 = vector.broadcast %cst_99 : f32 to vector<8x128xf32>
    %229 = arith.addf %227, %228 : vector<8x128xf32>
    %230 = vector.extract_strided_slice %221 {offsets = [0, 128], sizes = [8, 128], strides = [1, 1]} : vector<8x512xf32> to vector<8x128xf32>
    %cst_100 = arith.constant 5.000000e-01 : f32
    %231 = vector.broadcast %cst_100 : f32 to vector<8x128xf32>
    %232 = arith.mulf %231, %230 : vector<8x128xf32>
    %233 = math.tanh %232 : vector<8x128xf32>
    %cst_101 = arith.constant 5.000000e-01 : f32
    %234 = vector.broadcast %cst_101 : f32 to vector<8x128xf32>
    %235 = arith.mulf %234, %233 : vector<8x128xf32>
    %cst_102 = arith.constant 5.000000e-01 : f32
    %236 = vector.broadcast %cst_102 : f32 to vector<8x128xf32>
    %237 = arith.addf %235, %236 : vector<8x128xf32>
    %238 = vector.extract_strided_slice %221 {offsets = [0, 256], sizes = [8, 128], strides = [1, 1]} : vector<8x512xf32> to vector<8x128xf32>
    %239 = math.tanh %238 : vector<8x128xf32>
    %240 = vector.extract_strided_slice %221 {offsets = [0, 384], sizes = [8, 128], strides = [1, 1]} : vector<8x512xf32> to vector<8x128xf32>
    %cst_103 = arith.constant 5.000000e-01 : f32
    %241 = vector.broadcast %cst_103 : f32 to vector<8x128xf32>
    %242 = arith.mulf %241, %240 : vector<8x128xf32>
    %243 = math.tanh %242 : vector<8x128xf32>
    %cst_104 = arith.constant 5.000000e-01 : f32
    %244 = vector.broadcast %cst_104 : f32 to vector<8x128xf32>
    %245 = arith.mulf %244, %243 : vector<8x128xf32>
    %cst_105 = arith.constant 5.000000e-01 : f32
    %246 = vector.broadcast %cst_105 : f32 to vector<8x128xf32>
    %247 = arith.addf %245, %246 : vector<8x128xf32>
    %248 = arith.mulf %237, %210 : vector<8x128xf32>
    %249 = arith.mulf %229, %239 : vector<8x128xf32>
    %250 = arith.addf %248, %249 : vector<8x128xf32>
    %251 = math.tanh %250 : vector<8x128xf32>
    %252 = arith.mulf %247, %251 : vector<8x128xf32>
    %253 = arith.truncf %252 : vector<8x128xf32> to vector<8x128xbf16>
    %c5_106 = arith.constant 5 : index
    %c0_107 = arith.constant 0 : index
    %c0_108 = arith.constant 0 : index
    %254 = vector.load %arg16[%c5_106, %c0_107, %c0_108] : memref<8x8x128xbf16, #tpu.memory_space<vmem>>, vector<1x8x128xbf16>
    %255 = vector.shape_cast %254 : vector<1x8x128xbf16> to vector<8x128xbf16>
    %256 = vector.shape_cast %253 : vector<8x128xbf16> to vector<1x8x128xbf16>
    tpu.vector_store %arg16[%c5_106, %c0_107, %c0_108], %256 {strides = array<i32>} : memref<8x8x128xbf16, #tpu.memory_space<vmem>>, vector<1x8x128xbf16>,
    %c6 = arith.constant 6 : index
    %c0_109 = arith.constant 0 : index
    %c0_110 = arith.constant 0 : index
    %257 = vector.load %arg17[%c6, %c0_109, %c0_110] : memref<8x8x512xf32, #tpu.memory_space<vmem>>, vector<1x8x512xf32>
    %258 = vector.shape_cast %257 : vector<1x8x512xf32> to vector<8x512xf32>
    %259 = arith.truncf %252 : vector<8x128xf32> to vector<8x128xbf16>
    %cst_111 = arith.constant dense<0.000000e+00> : vector<8x512xf32>
    %260 = tpu.matmul %259, %12, %cst_111 {dimension_numbers = #tpu.dot_dimension_numbers<[1], [0], [0], [1], [0, 0, 1, 1], [], []>} : vector<8x128xbf16>, vector<128x512xbf16>, vector<8x512xf32> -> vector<8x512xf32>
    %261 = arith.addf %258, %260 : vector<8x512xf32>
    %262 = vector.extract_strided_slice %261 {offsets = [0, 0], sizes = [8, 128], strides = [1, 1]} : vector<8x512xf32> to vector<8x128xf32>
    %cst_112 = arith.constant 5.000000e-01 : f32
    %263 = vector.broadcast %cst_112 : f32 to vector<8x128xf32>
    %264 = arith.mulf %263, %262 : vector<8x128xf32>
    %265 = math.tanh %264 : vector<8x128xf32>
    %cst_113 = arith.constant 5.000000e-01 : f32
    %266 = vector.broadcast %cst_113 : f32 to vector<8x128xf32>
    %267 = arith.mulf %266, %265 : vector<8x128xf32>
    %cst_114 = arith.constant 5.000000e-01 : f32
    %268 = vector.broadcast %cst_114 : f32 to vector<8x128xf32>
    %269 = arith.addf %267, %268 : vector<8x128xf32>
    %270 = vector.extract_strided_slice %261 {offsets = [0, 128], sizes = [8, 128], strides = [1, 1]} : vector<8x512xf32> to vector<8x128xf32>
    %cst_115 = arith.constant 5.000000e-01 : f32
    %271 = vector.broadcast %cst_115 : f32 to vector<8x128xf32>
    %272 = arith.mulf %271, %270 : vector<8x128xf32>
    %273 = math.tanh %272 : vector<8x128xf32>
    %cst_116 = arith.constant 5.000000e-01 : f32
    %274 = vector.broadcast %cst_116 : f32 to vector<8x128xf32>
    %275 = arith.mulf %274, %273 : vector<8x128xf32>
    %cst_117 = arith.constant 5.000000e-01 : f32
    %276 = vector.broadcast %cst_117 : f32 to vector<8x128xf32>
    %277 = arith.addf %275, %276 : vector<8x128xf32>
    %278 = vector.extract_strided_slice %261 {offsets = [0, 256], sizes = [8, 128], strides = [1, 1]} : vector<8x512xf32> to vector<8x128xf32>
    %279 = math.tanh %278 : vector<8x128xf32>
    %280 = vector.extract_strided_slice %261 {offsets = [0, 384], sizes = [8, 128], strides = [1, 1]} : vector<8x512xf32> to vector<8x128xf32>
    %cst_118 = arith.constant 5.000000e-01 : f32
    %281 = vector.broadcast %cst_118 : f32 to vector<8x128xf32>
    %282 = arith.mulf %281, %280 : vector<8x128xf32>
    %283 = math.tanh %282 : vector<8x128xf32>
    %cst_119 = arith.constant 5.000000e-01 : f32
    %284 = vector.broadcast %cst_119 : f32 to vector<8x128xf32>
    %285 = arith.mulf %284, %283 : vector<8x128xf32>
    %cst_120 = arith.constant 5.000000e-01 : f32
    %286 = vector.broadcast %cst_120 : f32 to vector<8x128xf32>
    %287 = arith.addf %285, %286 : vector<8x128xf32>
    %288 = arith.mulf %277, %250 : vector<8x128xf32>
    %289 = arith.mulf %269, %279 : vector<8x128xf32>
    %290 = arith.addf %288, %289 : vector<8x128xf32>
    %291 = math.tanh %290 : vector<8x128xf32>
    %292 = arith.mulf %287, %291 : vector<8x128xf32>
    %293 = arith.truncf %292 : vector<8x128xf32> to vector<8x128xbf16>
    %c6_121 = arith.constant 6 : index
    %c0_122 = arith.constant 0 : index
    %c0_123 = arith.constant 0 : index
    %294 = vector.load %arg16[%c6_121, %c0_122, %c0_123] : memref<8x8x128xbf16, #tpu.memory_space<vmem>>, vector<1x8x128xbf16>
    %295 = vector.shape_cast %294 : vector<1x8x128xbf16> to vector<8x128xbf16>
    %296 = vector.shape_cast %293 : vector<8x128xbf16> to vector<1x8x128xbf16>
    tpu.vector_store %arg16[%c6_121, %c0_122, %c0_123], %296 {strides = array<i32>} : memref<8x8x128xbf16, #tpu.memory_space<vmem>>, vector<1x8x128xbf16>,
    %c7 = arith.constant 7 : index
    %c0_124 = arith.constant 0 : index
    %c0_125 = arith.constant 0 : index
    %297 = vector.load %arg17[%c7, %c0_124, %c0_125] : memref<8x8x512xf32, #tpu.memory_space<vmem>>, vector<1x8x512xf32>
    %298 = vector.shape_cast %297 : vector<1x8x512xf32> to vector<8x512xf32>
    %299 = arith.truncf %292 : vector<8x128xf32> to vector<8x128xbf16>
    %cst_126 = arith.constant dense<0.000000e+00> : vector<8x512xf32>
    %300 = tpu.matmul %299, %12, %cst_126 {dimension_numbers = #tpu.dot_dimension_numbers<[1], [0], [0], [1], [0, 0, 1, 1], [], []>} : vector<8x128xbf16>, vector<128x512xbf16>, vector<8x512xf32> -> vector<8x512xf32>
    %301 = arith.addf %298, %300 : vector<8x512xf32>
    %302 = vector.extract_strided_slice %301 {offsets = [0, 0], sizes = [8, 128], strides = [1, 1]} : vector<8x512xf32> to vector<8x128xf32>
    %cst_127 = arith.constant 5.000000e-01 : f32
    %303 = vector.broadcast %cst_127 : f32 to vector<8x128xf32>
    %304 = arith.mulf %303, %302 : vector<8x128xf32>
    %305 = math.tanh %304 : vector<8x128xf32>
    %cst_128 = arith.constant 5.000000e-01 : f32
    %306 = vector.broadcast %cst_128 : f32 to vector<8x128xf32>
    %307 = arith.mulf %306, %305 : vector<8x128xf32>
    %cst_129 = arith.constant 5.000000e-01 : f32
    %308 = vector.broadcast %cst_129 : f32 to vector<8x128xf32>
    %309 = arith.addf %307, %308 : vector<8x128xf32>
    %310 = vector.extract_strided_slice %301 {offsets = [0, 128], sizes = [8, 128], strides = [1, 1]} : vector<8x512xf32> to vector<8x128xf32>
    %cst_130 = arith.constant 5.000000e-01 : f32
    %311 = vector.broadcast %cst_130 : f32 to vector<8x128xf32>
    %312 = arith.mulf %311, %310 : vector<8x128xf32>
    %313 = math.tanh %312 : vector<8x128xf32>
    %cst_131 = arith.constant 5.000000e-01 : f32
    %314 = vector.broadcast %cst_131 : f32 to vector<8x128xf32>
    %315 = arith.mulf %314, %313 : vector<8x128xf32>
    %cst_132 = arith.constant 5.000000e-01 : f32
    %316 = vector.broadcast %cst_132 : f32 to vector<8x128xf32>
    %317 = arith.addf %315, %316 : vector<8x128xf32>
    %318 = vector.extract_strided_slice %301 {offsets = [0, 256], sizes = [8, 128], strides = [1, 1]} : vector<8x512xf32> to vector<8x128xf32>
    %319 = math.tanh %318 : vector<8x128xf32>
    %320 = vector.extract_strided_slice %301 {offsets = [0, 384], sizes = [8, 128], strides = [1, 1]} : vector<8x512xf32> to vector<8x128xf32>
    %cst_133 = arith.constant 5.000000e-01 : f32
    %321 = vector.broadcast %cst_133 : f32 to vector<8x128xf32>
    %322 = arith.mulf %321, %320 : vector<8x128xf32>
    %323 = math.tanh %322 : vector<8x128xf32>
    %cst_134 = arith.constant 5.000000e-01 : f32
    %324 = vector.broadcast %cst_134 : f32 to vector<8x128xf32>
    %325 = arith.mulf %324, %323 : vector<8x128xf32>
    %cst_135 = arith.constant 5.000000e-01 : f32
    %326 = vector.broadcast %cst_135 : f32 to vector<8x128xf32>
    %327 = arith.addf %325, %326 : vector<8x128xf32>
    %328 = arith.mulf %317, %290 : vector<8x128xf32>
    %329 = arith.mulf %309, %319 : vector<8x128xf32>
    %330 = arith.addf %328, %329 : vector<8x128xf32>
    %331 = math.tanh %330 : vector<8x128xf32>
    %332 = arith.mulf %327, %331 : vector<8x128xf32>
    %333 = arith.truncf %332 : vector<8x128xf32> to vector<8x128xbf16>
    %c7_136 = arith.constant 7 : index
    %c0_137 = arith.constant 0 : index
    %c0_138 = arith.constant 0 : index
    %334 = vector.load %arg16[%c7_136, %c0_137, %c0_138] : memref<8x8x128xbf16, #tpu.memory_space<vmem>>, vector<1x8x128xbf16>
    %335 = vector.shape_cast %334 : vector<1x8x128xbf16> to vector<8x128xbf16>
    %336 = vector.shape_cast %333 : vector<8x128xbf16> to vector<1x8x128xbf16>
    tpu.vector_store %arg16[%c7_136, %c0_137, %c0_138], %336 {strides = array<i32>} : memref<8x8x128xbf16, #tpu.memory_space<vmem>>, vector<1x8x128xbf16>,
    %c0_139 = arith.constant 0 : index
    %c0_140 = arith.constant 0 : index
    %c0_141 = arith.constant 0 : index
    %337 = vector.load %arg14[%c0_139, %c0_140, %c0_141] : memref<2x8x128xf32, #tpu.memory_space<vmem>>, vector<1x8x128xf32>
    %338 = vector.shape_cast %337 : vector<1x8x128xf32> to vector<8x128xf32>
    %339 = vector.shape_cast %332 : vector<8x128xf32> to vector<1x8x128xf32>
    tpu.vector_store %arg14[%c0_139, %c0_140, %c0_141], %339 {strides = array<i32>} : memref<2x8x128xf32, #tpu.memory_space<vmem>>, vector<1x8x128xf32>,
    %c0_142 = arith.constant 0 : index
    %c0_143 = arith.constant 0 : index
    %c0_144 = arith.constant 0 : index
    %340 = vector.load %arg15[%c0_142, %c0_143, %c0_144] : memref<2x8x128xf32, #tpu.memory_space<vmem>>, vector<1x8x128xf32>
    %341 = vector.shape_cast %340 : vector<1x8x128xf32> to vector<8x128xf32>
    %342 = vector.shape_cast %330 : vector<8x128xf32> to vector<1x8x128xf32>
    tpu.vector_store %arg15[%c0_142, %c0_143, %c0_144], %342 {strides = array<i32>} : memref<2x8x128xf32, #tpu.memory_space<vmem>>, vector<1x8x128xf32>,
    %c0_145 = arith.constant 0 : index
    %c0_146 = arith.constant 0 : index
    %c0_147 = arith.constant 0 : index
    %343 = vector.load %arg16[%c0_145, %c0_146, %c0_147] : memref<8x8x128xbf16, #tpu.memory_space<vmem>>, vector<8x8x128xbf16>
    %344 = vector.shape_cast %343 : vector<8x8x128xbf16> to vector<64x128xbf16>
    %c0_148 = arith.constant 0 : index
    %c0_149 = arith.constant 0 : index
    %345 = vector.load %arg6[%c0_148, %c0_149] : memref<128x512xbf16, #tpu.memory_space<vmem>>, vector<128x512xbf16>
    %cst_150 = arith.constant dense<0.000000e+00> : vector<64x512xf32>
    %346 = tpu.matmul %344, %345, %cst_150 {dimension_numbers = #tpu.dot_dimension_numbers<[1], [0], [0], [1], [0, 0, 1, 1], [], []>} : vector<64x128xbf16>, vector<128x512xbf16>, vector<64x512xf32> -> vector<64x512xf32>
    %c0_151 = arith.constant 0 : index
    %c0_152 = arith.constant 0 : index
    %347 = vector.load %arg8[%c0_151, %c0_152] : memref<1x512xf32, #tpu.memory_space<vmem>>, vector<1x512xf32>
    %348 = vector.broadcast %347 : vector<1x512xf32> to vector<64x512xf32>
    %349 = arith.addf %346, %348 : vector<64x512xf32>
    %350 = vector.shape_cast %349 : vector<64x512xf32> to vector<8x8x512xf32>
    %c0_153 = arith.constant 0 : index
    %c0_154 = arith.constant 0 : index
    %c0_155 = arith.constant 0 : index
    %351 = vector.load %arg17[%c0_153, %c0_154, %c0_155] : memref<8x8x512xf32, #tpu.memory_space<vmem>>, vector<8x8x512xf32>
    tpu.vector_store %arg17[%c0_153, %c0_154, %c0_155], %350 {strides = array<i32>} : memref<8x8x512xf32, #tpu.memory_space<vmem>>, vector<8x8x512xf32>,
    %c0_156 = arith.constant 0 : index
    %c0_157 = arith.constant 0 : index
    %352 = vector.load %arg7[%c0_156, %c0_157] : memref<128x512xbf16, #tpu.memory_space<vmem>>, vector<128x512xbf16>
    %c1_158 = arith.constant 1 : index
    %c0_159 = arith.constant 0 : index
    %c0_160 = arith.constant 0 : index
    %353 = vector.load %arg14[%c1_158, %c0_159, %c0_160] : memref<2x8x128xf32, #tpu.memory_space<vmem>>, vector<1x8x128xf32>
    %354 = vector.shape_cast %353 : vector<1x8x128xf32> to vector<8x128xf32>
    %c1_161 = arith.constant 1 : index
    %c0_162 = arith.constant 0 : index
    %c0_163 = arith.constant 0 : index
    %355 = vector.load %arg15[%c1_161, %c0_162, %c0_163] : memref<2x8x128xf32, #tpu.memory_space<vmem>>, vector<1x8x128xf32>
    %356 = vector.shape_cast %355 : vector<1x8x128xf32> to vector<8x128xf32>
    %c0_164 = arith.constant 0 : index
    %c0_165 = arith.constant 0 : index
    %c0_166 = arith.constant 0 : index
    %357 = vector.load %arg17[%c0_164, %c0_165, %c0_166] : memref<8x8x512xf32, #tpu.memory_space<vmem>>, vector<1x8x512xf32>
    %358 = vector.shape_cast %357 : vector<1x8x512xf32> to vector<8x512xf32>
    %359 = arith.truncf %354 : vector<8x128xf32> to vector<8x128xbf16>
    %cst_167 = arith.constant dense<0.000000e+00> : vector<8x512xf32>
    %360 = tpu.matmul %359, %352, %cst_167 {dimension_numbers = #tpu.dot_dimension_numbers<[1], [0], [0], [1], [0, 0, 1, 1], [], []>} : vector<8x128xbf16>, vector<128x512xbf16>, vector<8x512xf32> -> vector<8x512xf32>
    %361 = arith.addf %358, %360 : vector<8x512xf32>
    %362 = vector.extract_strided_slice %361 {offsets = [0, 0], sizes = [8, 128], strides = [1, 1]} : vector<8x512xf32> to vector<8x128xf32>
    %cst_168 = arith.constant 5.000000e-01 : f32
    %363 = vector.broadcast %cst_168 : f32 to vector<8x128xf32>
    %364 = arith.mulf %363, %362 : vector<8x128xf32>
    %365 = math.tanh %364 : vector<8x128xf32>
    %cst_169 = arith.constant 5.000000e-01 : f32
    %366 = vector.broadcast %cst_169 : f32 to vector<8x128xf32>
    %367 = arith.mulf %366, %365 : vector<8x128xf32>
    %cst_170 = arith.constant 5.000000e-01 : f32
    %368 = vector.broadcast %cst_170 : f32 to vector<8x128xf32>
    %369 = arith.addf %367, %368 : vector<8x128xf32>
    %370 = vector.extract_strided_slice %361 {offsets = [0, 128], sizes = [8, 128], strides = [1, 1]} : vector<8x512xf32> to vector<8x128xf32>
    %cst_171 = arith.constant 5.000000e-01 : f32
    %371 = vector.broadcast %cst_171 : f32 to vector<8x128xf32>
    %372 = arith.mulf %371, %370 : vector<8x128xf32>
    %373 = math.tanh %372 : vector<8x128xf32>
    %cst_172 = arith.constant 5.000000e-01 : f32
    %374 = vector.broadcast %cst_172 : f32 to vector<8x128xf32>
    %375 = arith.mulf %374, %373 : vector<8x128xf32>
    %cst_173 = arith.constant 5.000000e-01 : f32
    %376 = vector.broadcast %cst_173 : f32 to vector<8x128xf32>
    %377 = arith.addf %375, %376 : vector<8x128xf32>
    %378 = vector.extract_strided_slice %361 {offsets = [0, 256], sizes = [8, 128], strides = [1, 1]} : vector<8x512xf32> to vector<8x128xf32>
    %379 = math.tanh %378 : vector<8x128xf32>
    %380 = vector.extract_strided_slice %361 {offsets = [0, 384], sizes = [8, 128], strides = [1, 1]} : vector<8x512xf32> to vector<8x128xf32>
    %cst_174 = arith.constant 5.000000e-01 : f32
    %381 = vector.broadcast %cst_174 : f32 to vector<8x128xf32>
    %382 = arith.mulf %381, %380 : vector<8x128xf32>
    %383 = math.tanh %382 : vector<8x128xf32>
    %cst_175 = arith.constant 5.000000e-01 : f32
    %384 = vector.broadcast %cst_175 : f32 to vector<8x128xf32>
    %385 = arith.mulf %384, %383 : vector<8x128xf32>
    %cst_176 = arith.constant 5.000000e-01 : f32
    %386 = vector.broadcast %cst_176 : f32 to vector<8x128xf32>
    %387 = arith.addf %385, %386 : vector<8x128xf32>
    %388 = arith.mulf %377, %356 : vector<8x128xf32>
    %389 = arith.mulf %369, %379 : vector<8x128xf32>
    %390 = arith.addf %388, %389 : vector<8x128xf32>
    %391 = math.tanh %390 : vector<8x128xf32>
    %392 = arith.mulf %387, %391 : vector<8x128xf32>
    %c1_177 = arith.constant 1 : index
    %c0_178 = arith.constant 0 : index
    %c0_179 = arith.constant 0 : index
    %393 = vector.load %arg17[%c1_177, %c0_178, %c0_179] : memref<8x8x512xf32, #tpu.memory_space<vmem>>, vector<1x8x512xf32>
    %394 = vector.shape_cast %393 : vector<1x8x512xf32> to vector<8x512xf32>
    %395 = arith.truncf %392 : vector<8x128xf32> to vector<8x128xbf16>
    %cst_180 = arith.constant dense<0.000000e+00> : vector<8x512xf32>
    %396 = tpu.matmul %395, %352, %cst_180 {dimension_numbers = #tpu.dot_dimension_numbers<[1], [0], [0], [1], [0, 0, 1, 1], [], []>} : vector<8x128xbf16>, vector<128x512xbf16>, vector<8x512xf32> -> vector<8x512xf32>
    %397 = arith.addf %394, %396 : vector<8x512xf32>
    %398 = vector.extract_strided_slice %397 {offsets = [0, 0], sizes = [8, 128], strides = [1, 1]} : vector<8x512xf32> to vector<8x128xf32>
    %cst_181 = arith.constant 5.000000e-01 : f32
    %399 = vector.broadcast %cst_181 : f32 to vector<8x128xf32>
    %400 = arith.mulf %399, %398 : vector<8x128xf32>
    %401 = math.tanh %400 : vector<8x128xf32>
    %cst_182 = arith.constant 5.000000e-01 : f32
    %402 = vector.broadcast %cst_182 : f32 to vector<8x128xf32>
    %403 = arith.mulf %402, %401 : vector<8x128xf32>
    %cst_183 = arith.constant 5.000000e-01 : f32
    %404 = vector.broadcast %cst_183 : f32 to vector<8x128xf32>
    %405 = arith.addf %403, %404 : vector<8x128xf32>
    %406 = vector.extract_strided_slice %397 {offsets = [0, 128], sizes = [8, 128], strides = [1, 1]} : vector<8x512xf32> to vector<8x128xf32>
    %cst_184 = arith.constant 5.000000e-01 : f32
    %407 = vector.broadcast %cst_184 : f32 to vector<8x128xf32>
    %408 = arith.mulf %407, %406 : vector<8x128xf32>
    %409 = math.tanh %408 : vector<8x128xf32>
    %cst_185 = arith.constant 5.000000e-01 : f32
    %410 = vector.broadcast %cst_185 : f32 to vector<8x128xf32>
    %411 = arith.mulf %410, %409 : vector<8x128xf32>
    %cst_186 = arith.constant 5.000000e-01 : f32
    %412 = vector.broadcast %cst_186 : f32 to vector<8x128xf32>
    %413 = arith.addf %411, %412 : vector<8x128xf32>
    %414 = vector.extract_strided_slice %397 {offsets = [0, 256], sizes = [8, 128], strides = [1, 1]} : vector<8x512xf32> to vector<8x128xf32>
    %415 = math.tanh %414 : vector<8x128xf32>
    %416 = vector.extract_strided_slice %397 {offsets = [0, 384], sizes = [8, 128], strides = [1, 1]} : vector<8x512xf32> to vector<8x128xf32>
    %cst_187 = arith.constant 5.000000e-01 : f32
    %417 = vector.broadcast %cst_187 : f32 to vector<8x128xf32>
    %418 = arith.mulf %417, %416 : vector<8x128xf32>
    %419 = math.tanh %418 : vector<8x128xf32>
    %cst_188 = arith.constant 5.000000e-01 : f32
    %420 = vector.broadcast %cst_188 : f32 to vector<8x128xf32>
    %421 = arith.mulf %420, %419 : vector<8x128xf32>
    %cst_189 = arith.constant 5.000000e-01 : f32
    %422 = vector.broadcast %cst_189 : f32 to vector<8x128xf32>
    %423 = arith.addf %421, %422 : vector<8x128xf32>
    %424 = arith.mulf %413, %390 : vector<8x128xf32>
    %425 = arith.mulf %405, %415 : vector<8x128xf32>
    %426 = arith.addf %424, %425 : vector<8x128xf32>
    %427 = math.tanh %426 : vector<8x128xf32>
    %428 = arith.mulf %423, %427 : vector<8x128xf32>
    %c2_190 = arith.constant 2 : index
    %c0_191 = arith.constant 0 : index
    %c0_192 = arith.constant 0 : index
    %429 = vector.load %arg17[%c2_190, %c0_191, %c0_192] : memref<8x8x512xf32, #tpu.memory_space<vmem>>, vector<1x8x512xf32>
    %430 = vector.shape_cast %429 : vector<1x8x512xf32> to vector<8x512xf32>
    %431 = arith.truncf %428 : vector<8x128xf32> to vector<8x128xbf16>
    %cst_193 = arith.constant dense<0.000000e+00> : vector<8x512xf32>
    %432 = tpu.matmul %431, %352, %cst_193 {dimension_numbers = #tpu.dot_dimension_numbers<[1], [0], [0], [1], [0, 0, 1, 1], [], []>} : vector<8x128xbf16>, vector<128x512xbf16>, vector<8x512xf32> -> vector<8x512xf32>
    %433 = arith.addf %430, %432 : vector<8x512xf32>
    %434 = vector.extract_strided_slice %433 {offsets = [0, 0], sizes = [8, 128], strides = [1, 1]} : vector<8x512xf32> to vector<8x128xf32>
    %cst_194 = arith.constant 5.000000e-01 : f32
    %435 = vector.broadcast %cst_194 : f32 to vector<8x128xf32>
    %436 = arith.mulf %435, %434 : vector<8x128xf32>
    %437 = math.tanh %436 : vector<8x128xf32>
    %cst_195 = arith.constant 5.000000e-01 : f32
    %438 = vector.broadcast %cst_195 : f32 to vector<8x128xf32>
    %439 = arith.mulf %438, %437 : vector<8x128xf32>
    %cst_196 = arith.constant 5.000000e-01 : f32
    %440 = vector.broadcast %cst_196 : f32 to vector<8x128xf32>
    %441 = arith.addf %439, %440 : vector<8x128xf32>
    %442 = vector.extract_strided_slice %433 {offsets = [0, 128], sizes = [8, 128], strides = [1, 1]} : vector<8x512xf32> to vector<8x128xf32>
    %cst_197 = arith.constant 5.000000e-01 : f32
    %443 = vector.broadcast %cst_197 : f32 to vector<8x128xf32>
    %444 = arith.mulf %443, %442 : vector<8x128xf32>
    %445 = math.tanh %444 : vector<8x128xf32>
    %cst_198 = arith.constant 5.000000e-01 : f32
    %446 = vector.broadcast %cst_198 : f32 to vector<8x128xf32>
    %447 = arith.mulf %446, %445 : vector<8x128xf32>
    %cst_199 = arith.constant 5.000000e-01 : f32
    %448 = vector.broadcast %cst_199 : f32 to vector<8x128xf32>
    %449 = arith.addf %447, %448 : vector<8x128xf32>
    %450 = vector.extract_strided_slice %433 {offsets = [0, 256], sizes = [8, 128], strides = [1, 1]} : vector<8x512xf32> to vector<8x128xf32>
    %451 = math.tanh %450 : vector<8x128xf32>
    %452 = vector.extract_strided_slice %433 {offsets = [0, 384], sizes = [8, 128], strides = [1, 1]} : vector<8x512xf32> to vector<8x128xf32>
    %cst_200 = arith.constant 5.000000e-01 : f32
    %453 = vector.broadcast %cst_200 : f32 to vector<8x128xf32>
    %454 = arith.mulf %453, %452 : vector<8x128xf32>
    %455 = math.tanh %454 : vector<8x128xf32>
    %cst_201 = arith.constant 5.000000e-01 : f32
    %456 = vector.broadcast %cst_201 : f32 to vector<8x128xf32>
    %457 = arith.mulf %456, %455 : vector<8x128xf32>
    %cst_202 = arith.constant 5.000000e-01 : f32
    %458 = vector.broadcast %cst_202 : f32 to vector<8x128xf32>
    %459 = arith.addf %457, %458 : vector<8x128xf32>
    %460 = arith.mulf %449, %426 : vector<8x128xf32>
    %461 = arith.mulf %441, %451 : vector<8x128xf32>
    %462 = arith.addf %460, %461 : vector<8x128xf32>
    %463 = math.tanh %462 : vector<8x128xf32>
    %464 = arith.mulf %459, %463 : vector<8x128xf32>
    %c3_203 = arith.constant 3 : index
    %c0_204 = arith.constant 0 : index
    %c0_205 = arith.constant 0 : index
    %465 = vector.load %arg17[%c3_203, %c0_204, %c0_205] : memref<8x8x512xf32, #tpu.memory_space<vmem>>, vector<1x8x512xf32>
    %466 = vector.shape_cast %465 : vector<1x8x512xf32> to vector<8x512xf32>
    %467 = arith.truncf %464 : vector<8x128xf32> to vector<8x128xbf16>
    %cst_206 = arith.constant dense<0.000000e+00> : vector<8x512xf32>
    %468 = tpu.matmul %467, %352, %cst_206 {dimension_numbers = #tpu.dot_dimension_numbers<[1], [0], [0], [1], [0, 0, 1, 1], [], []>} : vector<8x128xbf16>, vector<128x512xbf16>, vector<8x512xf32> -> vector<8x512xf32>
    %469 = arith.addf %466, %468 : vector<8x512xf32>
    %470 = vector.extract_strided_slice %469 {offsets = [0, 0], sizes = [8, 128], strides = [1, 1]} : vector<8x512xf32> to vector<8x128xf32>
    %cst_207 = arith.constant 5.000000e-01 : f32
    %471 = vector.broadcast %cst_207 : f32 to vector<8x128xf32>
    %472 = arith.mulf %471, %470 : vector<8x128xf32>
    %473 = math.tanh %472 : vector<8x128xf32>
    %cst_208 = arith.constant 5.000000e-01 : f32
    %474 = vector.broadcast %cst_208 : f32 to vector<8x128xf32>
    %475 = arith.mulf %474, %473 : vector<8x128xf32>
    %cst_209 = arith.constant 5.000000e-01 : f32
    %476 = vector.broadcast %cst_209 : f32 to vector<8x128xf32>
    %477 = arith.addf %475, %476 : vector<8x128xf32>
    %478 = vector.extract_strided_slice %469 {offsets = [0, 128], sizes = [8, 128], strides = [1, 1]} : vector<8x512xf32> to vector<8x128xf32>
    %cst_210 = arith.constant 5.000000e-01 : f32
    %479 = vector.broadcast %cst_210 : f32 to vector<8x128xf32>
    %480 = arith.mulf %479, %478 : vector<8x128xf32>
    %481 = math.tanh %480 : vector<8x128xf32>
    %cst_211 = arith.constant 5.000000e-01 : f32
    %482 = vector.broadcast %cst_211 : f32 to vector<8x128xf32>
    %483 = arith.mulf %482, %481 : vector<8x128xf32>
    %cst_212 = arith.constant 5.000000e-01 : f32
    %484 = vector.broadcast %cst_212 : f32 to vector<8x128xf32>
    %485 = arith.addf %483, %484 : vector<8x128xf32>
    %486 = vector.extract_strided_slice %469 {offsets = [0, 256], sizes = [8, 128], strides = [1, 1]} : vector<8x512xf32> to vector<8x128xf32>
    %487 = math.tanh %486 : vector<8x128xf32>
    %488 = vector.extract_strided_slice %469 {offsets = [0, 384], sizes = [8, 128], strides = [1, 1]} : vector<8x512xf32> to vector<8x128xf32>
    %cst_213 = arith.constant 5.000000e-01 : f32
    %489 = vector.broadcast %cst_213 : f32 to vector<8x128xf32>
    %490 = arith.mulf %489, %488 : vector<8x128xf32>
    %491 = math.tanh %490 : vector<8x128xf32>
    %cst_214 = arith.constant 5.000000e-01 : f32
    %492 = vector.broadcast %cst_214 : f32 to vector<8x128xf32>
    %493 = arith.mulf %492, %491 : vector<8x128xf32>
    %cst_215 = arith.constant 5.000000e-01 : f32
    %494 = vector.broadcast %cst_215 : f32 to vector<8x128xf32>
    %495 = arith.addf %493, %494 : vector<8x128xf32>
    %496 = arith.mulf %485, %462 : vector<8x128xf32>
    %497 = arith.mulf %477, %487 : vector<8x128xf32>
    %498 = arith.addf %496, %497 : vector<8x128xf32>
    %499 = math.tanh %498 : vector<8x128xf32>
    %500 = arith.mulf %495, %499 : vector<8x128xf32>
    %c4_216 = arith.constant 4 : index
    %c0_217 = arith.constant 0 : index
    %c0_218 = arith.constant 0 : index
    %501 = vector.load %arg17[%c4_216, %c0_217, %c0_218] : memref<8x8x512xf32, #tpu.memory_space<vmem>>, vector<1x8x512xf32>
    %502 = vector.shape_cast %501 : vector<1x8x512xf32> to vector<8x512xf32>
    %503 = arith.truncf %500 : vector<8x128xf32> to vector<8x128xbf16>
    %cst_219 = arith.constant dense<0.000000e+00> : vector<8x512xf32>
    %504 = tpu.matmul %503, %352, %cst_219 {dimension_numbers = #tpu.dot_dimension_numbers<[1], [0], [0], [1], [0, 0, 1, 1], [], []>} : vector<8x128xbf16>, vector<128x512xbf16>, vector<8x512xf32> -> vector<8x512xf32>
    %505 = arith.addf %502, %504 : vector<8x512xf32>
    %506 = vector.extract_strided_slice %505 {offsets = [0, 0], sizes = [8, 128], strides = [1, 1]} : vector<8x512xf32> to vector<8x128xf32>
    %cst_220 = arith.constant 5.000000e-01 : f32
    %507 = vector.broadcast %cst_220 : f32 to vector<8x128xf32>
    %508 = arith.mulf %507, %506 : vector<8x128xf32>
    %509 = math.tanh %508 : vector<8x128xf32>
    %cst_221 = arith.constant 5.000000e-01 : f32
    %510 = vector.broadcast %cst_221 : f32 to vector<8x128xf32>
    %511 = arith.mulf %510, %509 : vector<8x128xf32>
    %cst_222 = arith.constant 5.000000e-01 : f32
    %512 = vector.broadcast %cst_222 : f32 to vector<8x128xf32>
    %513 = arith.addf %511, %512 : vector<8x128xf32>
    %514 = vector.extract_strided_slice %505 {offsets = [0, 128], sizes = [8, 128], strides = [1, 1]} : vector<8x512xf32> to vector<8x128xf32>
    %cst_223 = arith.constant 5.000000e-01 : f32
    %515 = vector.broadcast %cst_223 : f32 to vector<8x128xf32>
    %516 = arith.mulf %515, %514 : vector<8x128xf32>
    %517 = math.tanh %516 : vector<8x128xf32>
    %cst_224 = arith.constant 5.000000e-01 : f32
    %518 = vector.broadcast %cst_224 : f32 to vector<8x128xf32>
    %519 = arith.mulf %518, %517 : vector<8x128xf32>
    %cst_225 = arith.constant 5.000000e-01 : f32
    %520 = vector.broadcast %cst_225 : f32 to vector<8x128xf32>
    %521 = arith.addf %519, %520 : vector<8x128xf32>
    %522 = vector.extract_strided_slice %505 {offsets = [0, 256], sizes = [8, 128], strides = [1, 1]} : vector<8x512xf32> to vector<8x128xf32>
    %523 = math.tanh %522 : vector<8x128xf32>
    %524 = vector.extract_strided_slice %505 {offsets = [0, 384], sizes = [8, 128], strides = [1, 1]} : vector<8x512xf32> to vector<8x128xf32>
    %cst_226 = arith.constant 5.000000e-01 : f32
    %525 = vector.broadcast %cst_226 : f32 to vector<8x128xf32>
    %526 = arith.mulf %525, %524 : vector<8x128xf32>
    %527 = math.tanh %526 : vector<8x128xf32>
    %cst_227 = arith.constant 5.000000e-01 : f32
    %528 = vector.broadcast %cst_227 : f32 to vector<8x128xf32>
    %529 = arith.mulf %528, %527 : vector<8x128xf32>
    %cst_228 = arith.constant 5.000000e-01 : f32
    %530 = vector.broadcast %cst_228 : f32 to vector<8x128xf32>
    %531 = arith.addf %529, %530 : vector<8x128xf32>
    %532 = arith.mulf %521, %498 : vector<8x128xf32>
    %533 = arith.mulf %513, %523 : vector<8x128xf32>
    %534 = arith.addf %532, %533 : vector<8x128xf32>
    %535 = math.tanh %534 : vector<8x128xf32>
    %536 = arith.mulf %531, %535 : vector<8x128xf32>
    %c5_229 = arith.constant 5 : index
    %c0_230 = arith.constant 0 : index
    %c0_231 = arith.constant 0 : index
    %537 = vector.load %arg17[%c5_229, %c0_230, %c0_231] : memref<8x8x512xf32, #tpu.memory_space<vmem>>, vector<1x8x512xf32>
    %538 = vector.shape_cast %537 : vector<1x8x512xf32> to vector<8x512xf32>
    %539 = arith.truncf %536 : vector<8x128xf32> to vector<8x128xbf16>
    %cst_232 = arith.constant dense<0.000000e+00> : vector<8x512xf32>
    %540 = tpu.matmul %539, %352, %cst_232 {dimension_numbers = #tpu.dot_dimension_numbers<[1], [0], [0], [1], [0, 0, 1, 1], [], []>} : vector<8x128xbf16>, vector<128x512xbf16>, vector<8x512xf32> -> vector<8x512xf32>
    %541 = arith.addf %538, %540 : vector<8x512xf32>
    %542 = vector.extract_strided_slice %541 {offsets = [0, 0], sizes = [8, 128], strides = [1, 1]} : vector<8x512xf32> to vector<8x128xf32>
    %cst_233 = arith.constant 5.000000e-01 : f32
    %543 = vector.broadcast %cst_233 : f32 to vector<8x128xf32>
    %544 = arith.mulf %543, %542 : vector<8x128xf32>
    %545 = math.tanh %544 : vector<8x128xf32>
    %cst_234 = arith.constant 5.000000e-01 : f32
    %546 = vector.broadcast %cst_234 : f32 to vector<8x128xf32>
    %547 = arith.mulf %546, %545 : vector<8x128xf32>
    %cst_235 = arith.constant 5.000000e-01 : f32
    %548 = vector.broadcast %cst_235 : f32 to vector<8x128xf32>
    %549 = arith.addf %547, %548 : vector<8x128xf32>
    %550 = vector.extract_strided_slice %541 {offsets = [0, 128], sizes = [8, 128], strides = [1, 1]} : vector<8x512xf32> to vector<8x128xf32>
    %cst_236 = arith.constant 5.000000e-01 : f32
    %551 = vector.broadcast %cst_236 : f32 to vector<8x128xf32>
    %552 = arith.mulf %551, %550 : vector<8x128xf32>
    %553 = math.tanh %552 : vector<8x128xf32>
    %cst_237 = arith.constant 5.000000e-01 : f32
    %554 = vector.broadcast %cst_237 : f32 to vector<8x128xf32>
    %555 = arith.mulf %554, %553 : vector<8x128xf32>
    %cst_238 = arith.constant 5.000000e-01 : f32
    %556 = vector.broadcast %cst_238 : f32 to vector<8x128xf32>
    %557 = arith.addf %555, %556 : vector<8x128xf32>
    %558 = vector.extract_strided_slice %541 {offsets = [0, 256], sizes = [8, 128], strides = [1, 1]} : vector<8x512xf32> to vector<8x128xf32>
    %559 = math.tanh %558 : vector<8x128xf32>
    %560 = vector.extract_strided_slice %541 {offsets = [0, 384], sizes = [8, 128], strides = [1, 1]} : vector<8x512xf32> to vector<8x128xf32>
    %cst_239 = arith.constant 5.000000e-01 : f32
    %561 = vector.broadcast %cst_239 : f32 to vector<8x128xf32>
    %562 = arith.mulf %561, %560 : vector<8x128xf32>
    %563 = math.tanh %562 : vector<8x128xf32>
    %cst_240 = arith.constant 5.000000e-01 : f32
    %564 = vector.broadcast %cst_240 : f32 to vector<8x128xf32>
    %565 = arith.mulf %564, %563 : vector<8x128xf32>
    %cst_241 = arith.constant 5.000000e-01 : f32
    %566 = vector.broadcast %cst_241 : f32 to vector<8x128xf32>
    %567 = arith.addf %565, %566 : vector<8x128xf32>
    %568 = arith.mulf %557, %534 : vector<8x128xf32>
    %569 = arith.mulf %549, %559 : vector<8x128xf32>
    %570 = arith.addf %568, %569 : vector<8x128xf32>
    %571 = math.tanh %570 : vector<8x128xf32>
    %572 = arith.mulf %567, %571 : vector<8x128xf32>
    %c6_242 = arith.constant 6 : index
    %c0_243 = arith.constant 0 : index
    %c0_244 = arith.constant 0 : index
    %573 = vector.load %arg17[%c6_242, %c0_243, %c0_244] : memref<8x8x512xf32, #tpu.memory_space<vmem>>, vector<1x8x512xf32>
    %574 = vector.shape_cast %573 : vector<1x8x512xf32> to vector<8x512xf32>
    %575 = arith.truncf %572 : vector<8x128xf32> to vector<8x128xbf16>
    %cst_245 = arith.constant dense<0.000000e+00> : vector<8x512xf32>
    %576 = tpu.matmul %575, %352, %cst_245 {dimension_numbers = #tpu.dot_dimension_numbers<[1], [0], [0], [1], [0, 0, 1, 1], [], []>} : vector<8x128xbf16>, vector<128x512xbf16>, vector<8x512xf32> -> vector<8x512xf32>
    %577 = arith.addf %574, %576 : vector<8x512xf32>
    %578 = vector.extract_strided_slice %577 {offsets = [0, 0], sizes = [8, 128], strides = [1, 1]} : vector<8x512xf32> to vector<8x128xf32>
    %cst_246 = arith.constant 5.000000e-01 : f32
    %579 = vector.broadcast %cst_246 : f32 to vector<8x128xf32>
    %580 = arith.mulf %579, %578 : vector<8x128xf32>
    %581 = math.tanh %580 : vector<8x128xf32>
    %cst_247 = arith.constant 5.000000e-01 : f32
    %582 = vector.broadcast %cst_247 : f32 to vector<8x128xf32>
    %583 = arith.mulf %582, %581 : vector<8x128xf32>
    %cst_248 = arith.constant 5.000000e-01 : f32
    %584 = vector.broadcast %cst_248 : f32 to vector<8x128xf32>
    %585 = arith.addf %583, %584 : vector<8x128xf32>
    %586 = vector.extract_strided_slice %577 {offsets = [0, 128], sizes = [8, 128], strides = [1, 1]} : vector<8x512xf32> to vector<8x128xf32>
    %cst_249 = arith.constant 5.000000e-01 : f32
    %587 = vector.broadcast %cst_249 : f32 to vector<8x128xf32>
    %588 = arith.mulf %587, %586 : vector<8x128xf32>
    %589 = math.tanh %588 : vector<8x128xf32>
    %cst_250 = arith.constant 5.000000e-01 : f32
    %590 = vector.broadcast %cst_250 : f32 to vector<8x128xf32>
    %591 = arith.mulf %590, %589 : vector<8x128xf32>
    %cst_251 = arith.constant 5.000000e-01 : f32
    %592 = vector.broadcast %cst_251 : f32 to vector<8x128xf32>
    %593 = arith.addf %591, %592 : vector<8x128xf32>
    %594 = vector.extract_strided_slice %577 {offsets = [0, 256], sizes = [8, 128], strides = [1, 1]} : vector<8x512xf32> to vector<8x128xf32>
    %595 = math.tanh %594 : vector<8x128xf32>
    %596 = vector.extract_strided_slice %577 {offsets = [0, 384], sizes = [8, 128], strides = [1, 1]} : vector<8x512xf32> to vector<8x128xf32>
    %cst_252 = arith.constant 5.000000e-01 : f32
    %597 = vector.broadcast %cst_252 : f32 to vector<8x128xf32>
    %598 = arith.mulf %597, %596 : vector<8x128xf32>
    %599 = math.tanh %598 : vector<8x128xf32>
    %cst_253 = arith.constant 5.000000e-01 : f32
    %600 = vector.broadcast %cst_253 : f32 to vector<8x128xf32>
    %601 = arith.mulf %600, %599 : vector<8x128xf32>
    %cst_254 = arith.constant 5.000000e-01 : f32
    %602 = vector.broadcast %cst_254 : f32 to vector<8x128xf32>
    %603 = arith.addf %601, %602 : vector<8x128xf32>
    %604 = arith.mulf %593, %570 : vector<8x128xf32>
    %605 = arith.mulf %585, %595 : vector<8x128xf32>
    %606 = arith.addf %604, %605 : vector<8x128xf32>
    %607 = math.tanh %606 : vector<8x128xf32>
    %608 = arith.mulf %603, %607 : vector<8x128xf32>
    %c7_255 = arith.constant 7 : index
    %c0_256 = arith.constant 0 : index
    %c0_257 = arith.constant 0 : index
    %609 = vector.load %arg17[%c7_255, %c0_256, %c0_257] : memref<8x8x512xf32, #tpu.memory_space<vmem>>, vector<1x8x512xf32>
    %610 = vector.shape_cast %609 : vector<1x8x512xf32> to vector<8x512xf32>
    %611 = arith.truncf %608 : vector<8x128xf32> to vector<8x128xbf16>
    %cst_258 = arith.constant dense<0.000000e+00> : vector<8x512xf32>
    %612 = tpu.matmul %611, %352, %cst_258 {dimension_numbers = #tpu.dot_dimension_numbers<[1], [0], [0], [1], [0, 0, 1, 1], [], []>} : vector<8x128xbf16>, vector<128x512xbf16>, vector<8x512xf32> -> vector<8x512xf32>
    %613 = arith.addf %610, %612 : vector<8x512xf32>
    %614 = vector.extract_strided_slice %613 {offsets = [0, 0], sizes = [8, 128], strides = [1, 1]} : vector<8x512xf32> to vector<8x128xf32>
    %cst_259 = arith.constant 5.000000e-01 : f32
    %615 = vector.broadcast %cst_259 : f32 to vector<8x128xf32>
    %616 = arith.mulf %615, %614 : vector<8x128xf32>
    %617 = math.tanh %616 : vector<8x128xf32>
    %cst_260 = arith.constant 5.000000e-01 : f32
    %618 = vector.broadcast %cst_260 : f32 to vector<8x128xf32>
    %619 = arith.mulf %618, %617 : vector<8x128xf32>
    %cst_261 = arith.constant 5.000000e-01 : f32
    %620 = vector.broadcast %cst_261 : f32 to vector<8x128xf32>
    %621 = arith.addf %619, %620 : vector<8x128xf32>
    %622 = vector.extract_strided_slice %613 {offsets = [0, 128], sizes = [8, 128], strides = [1, 1]} : vector<8x512xf32> to vector<8x128xf32>
    %cst_262 = arith.constant 5.000000e-01 : f32
    %623 = vector.broadcast %cst_262 : f32 to vector<8x128xf32>
    %624 = arith.mulf %623, %622 : vector<8x128xf32>
    %625 = math.tanh %624 : vector<8x128xf32>
    %cst_263 = arith.constant 5.000000e-01 : f32
    %626 = vector.broadcast %cst_263 : f32 to vector<8x128xf32>
    %627 = arith.mulf %626, %625 : vector<8x128xf32>
    %cst_264 = arith.constant 5.000000e-01 : f32
    %628 = vector.broadcast %cst_264 : f32 to vector<8x128xf32>
    %629 = arith.addf %627, %628 : vector<8x128xf32>
    %630 = vector.extract_strided_slice %613 {offsets = [0, 256], sizes = [8, 128], strides = [1, 1]} : vector<8x512xf32> to vector<8x128xf32>
    %631 = math.tanh %630 : vector<8x128xf32>
    %632 = vector.extract_strided_slice %613 {offsets = [0, 384], sizes = [8, 128], strides = [1, 1]} : vector<8x512xf32> to vector<8x128xf32>
    %cst_265 = arith.constant 5.000000e-01 : f32
    %633 = vector.broadcast %cst_265 : f32 to vector<8x128xf32>
    %634 = arith.mulf %633, %632 : vector<8x128xf32>
    %635 = math.tanh %634 : vector<8x128xf32>
    %cst_266 = arith.constant 5.000000e-01 : f32
    %636 = vector.broadcast %cst_266 : f32 to vector<8x128xf32>
    %637 = arith.mulf %636, %635 : vector<8x128xf32>
    %cst_267 = arith.constant 5.000000e-01 : f32
    %638 = vector.broadcast %cst_267 : f32 to vector<8x128xf32>
    %639 = arith.addf %637, %638 : vector<8x128xf32>
    %640 = arith.mulf %629, %606 : vector<8x128xf32>
    %641 = arith.mulf %621, %631 : vector<8x128xf32>
    %642 = arith.addf %640, %641 : vector<8x128xf32>
    %643 = math.tanh %642 : vector<8x128xf32>
    %644 = arith.mulf %639, %643 : vector<8x128xf32>
    %c1_268 = arith.constant 1 : index
    %c0_269 = arith.constant 0 : index
    %c0_270 = arith.constant 0 : index
    %645 = vector.load %arg14[%c1_268, %c0_269, %c0_270] : memref<2x8x128xf32, #tpu.memory_space<vmem>>, vector<1x8x128xf32>
    %646 = vector.shape_cast %645 : vector<1x8x128xf32> to vector<8x128xf32>
    %647 = vector.shape_cast %644 : vector<8x128xf32> to vector<1x8x128xf32>
    tpu.vector_store %arg14[%c1_268, %c0_269, %c0_270], %647 {strides = array<i32>} : memref<2x8x128xf32, #tpu.memory_space<vmem>>, vector<1x8x128xf32>,
    %c1_271 = arith.constant 1 : index
    %c0_272 = arith.constant 0 : index
    %c0_273 = arith.constant 0 : index
    %648 = vector.load %arg15[%c1_271, %c0_272, %c0_273] : memref<2x8x128xf32, #tpu.memory_space<vmem>>, vector<1x8x128xf32>
    %649 = vector.shape_cast %648 : vector<1x8x128xf32> to vector<8x128xf32>
    %650 = vector.shape_cast %642 : vector<8x128xf32> to vector<1x8x128xf32>
    tpu.vector_store %arg15[%c1_271, %c0_272, %c0_273], %650 {strides = array<i32>} : memref<2x8x128xf32, #tpu.memory_space<vmem>>, vector<1x8x128xf32>,
    %c1_i32 = arith.constant 1 : i32
    %651 = arith.cmpi eq, %arg1, %c1_i32 : i32
    %652 = arith.extui %651 : i1 to i32
    %c0_i32_274 = arith.constant 0 : i32
    %653 = arith.cmpi ne, %652, %c0_i32_274 : i32
    scf.if %653 {
      %654 = arith.truncf %644 : vector<8x128xf32> to vector<8x128xbf16>
      %c0_275 = arith.constant 0 : index
      %c0_276 = arith.constant 0 : index
      %655 = vector.load %arg9[%c0_275, %c0_276] : memref<128x128xbf16, #tpu.memory_space<vmem>>, vector<128x128xbf16>
      %cst_277 = arith.constant dense<0.000000e+00> : vector<8x128xf32>
      %656 = tpu.matmul %654, %655, %cst_277 {dimension_numbers = #tpu.dot_dimension_numbers<[1], [0], [0], [1], [0, 0, 1, 1], [], []>} : vector<8x128xbf16>, vector<128x128xbf16>, vector<8x128xf32> -> vector<8x128xf32>
      %c0_278 = arith.constant 0 : index
      %c0_279 = arith.constant 0 : index
      %657 = vector.load %arg10[%c0_278, %c0_279] : memref<1x128xf32, #tpu.memory_space<vmem>>, vector<1x128xf32>
      %658 = vector.broadcast %657 : vector<1x128xf32> to vector<8x128xf32>
      %659 = arith.addf %656, %658 : vector<8x128xf32>
      %cst_280 = arith.constant 0.000000e+00 : f32
      %660 = vector.broadcast %cst_280 : f32 to vector<8x128xf32>
      %661 = arith.maximumf %659, %660 : vector<8x128xf32>
      %662 = arith.truncf %661 : vector<8x128xf32> to vector<8x128xbf16>
      %c0_281 = arith.constant 0 : index
      %c0_282 = arith.constant 0 : index
      %663 = vector.load %arg11[%c0_281, %c0_282] : memref<128x128xbf16, #tpu.memory_space<vmem>>, vector<128x128xbf16>
      %cst_283 = arith.constant dense<0.000000e+00> : vector<8x128xf32>
      %664 = tpu.matmul %662, %663, %cst_283 {dimension_numbers = #tpu.dot_dimension_numbers<[1], [0], [0], [1], [0, 0, 1, 1], [], []>} : vector<8x128xbf16>, vector<128x128xbf16>, vector<8x128xf32> -> vector<8x128xf32>
      %c0_284 = arith.constant 0 : index
      %c0_285 = arith.constant 0 : index
      %665 = vector.load %arg12[%c0_284, %c0_285] : memref<1x128xf32, #tpu.memory_space<vmem>>, vector<1x128xf32>
      %666 = vector.broadcast %665 : vector<1x128xf32> to vector<8x128xf32>
      %667 = arith.addf %664, %666 : vector<8x128xf32>
      %c0_286 = arith.constant 0 : index
      %c0_287 = arith.constant 0 : index
      %668 = vector.load %arg13[%c0_286, %c0_287] : memref<8x128xf32, #tpu.memory_space<vmem>>, vector<8x128xf32>
      tpu.vector_store %arg13[%c0_286, %c0_287], %667 {strides = array<i32>} : memref<8x128xf32, #tpu.memory_space<vmem>>, vector<8x128xf32>,
    } else {
    }
    return
  }
  func.func @transform_0(%arg0: i32, %arg1: i32) -> (i32, i32, i32) {
    %c0_i32 = arith.constant 0 : i32
    %c0_i32_0 = arith.constant 0 : i32
    return %arg1, %arg0, %c0_i32 : i32, i32, i32
  }
  func.func @transform_1(%arg0: i32, %arg1: i32) -> (i32, i32) {
    %c0_i32 = arith.constant 0 : i32
    %c0_i32_0 = arith.constant 0 : i32
    %c0_i32_1 = arith.constant 0 : i32
    return %c0_i32, %c0_i32_0 : i32, i32
  }
  func.func @transform_2(%arg0: i32, %arg1: i32) -> (i32, i32) {
    %c0_i32 = arith.constant 0 : i32
    %c0_i32_0 = arith.constant 0 : i32
    %c0_i32_1 = arith.constant 0 : i32
    return %c0_i32, %c0_i32_0 : i32, i32
  }
  func.func @transform_3(%arg0: i32, %arg1: i32) -> (i32, i32) {
    %c0_i32 = arith.constant 0 : i32
    %c0_i32_0 = arith.constant 0 : i32
    %c0_i32_1 = arith.constant 0 : i32
    return %c0_i32, %c0_i32_0 : i32, i32
  }
  func.func @transform_4(%arg0: i32, %arg1: i32) -> (i32, i32) {
    %c0_i32 = arith.constant 0 : i32
    %c0_i32_0 = arith.constant 0 : i32
    %c0_i32_1 = arith.constant 0 : i32
    return %c0_i32, %c0_i32_0 : i32, i32
  }
  func.func @transform_5(%arg0: i32, %arg1: i32) -> (i32, i32) {
    %c0_i32 = arith.constant 0 : i32
    %c0_i32_0 = arith.constant 0 : i32
    %c0_i32_1 = arith.constant 0 : i32
    return %c0_i32, %c0_i32_0 : i32, i32
  }
  func.func @transform_6(%arg0: i32, %arg1: i32) -> (i32, i32) {
    %c0_i32 = arith.constant 0 : i32
    %c0_i32_0 = arith.constant 0 : i32
    %c0_i32_1 = arith.constant 0 : i32
    return %c0_i32, %c0_i32_0 : i32, i32
  }
  func.func @transform_7(%arg0: i32, %arg1: i32) -> (i32, i32) {
    %c0_i32 = arith.constant 0 : i32
    %c0_i32_0 = arith.constant 0 : i32
    %c0_i32_1 = arith.constant 0 : i32
    return %c0_i32, %c0_i32_0 : i32, i32
  }
  func.func @transform_8(%arg0: i32, %arg1: i32) -> (i32, i32) {
    %c0_i32 = arith.constant 0 : i32
    %c0_i32_0 = arith.constant 0 : i32
    %c0_i32_1 = arith.constant 0 : i32
    return %c0_i32, %c0_i32_0 : i32, i32
  }
  func.func @transform_9(%arg0: i32, %arg1: i32) -> (i32, i32) {
    %c0_i32 = arith.constant 0 : i32
    %c0_i32_0 = arith.constant 0 : i32
    %c0_i32_1 = arith.constant 0 : i32
    return %c0_i32, %c0_i32_0 : i32, i32
  }
  func.func @transform_10(%arg0: i32, %arg1: i32) -> (i32, i32) {
    %c0_i32 = arith.constant 0 : i32
    %c0_i32_0 = arith.constant 0 : i32
    %c0_i32_1 = arith.constant 0 : i32
    return %c0_i32, %c0_i32_0 : i32, i32
  }
  func.func @transform_11(%arg0: i32, %arg1: i32) -> (i32, i32) {
    %c0_i32 = arith.constant 0 : i32
    %c0_i32_0 = arith.constant 0 : i32
    return %arg0, %c0_i32 : i32, i32
  }
}

</mosaic_0001>

<llo_original>
// kernel: tpu_custom_call.1
$region0: #{tpu_custom_call.1}
  #allocation0 [shape = 'u32[]', space=smem, size = 0x4, offset = 0x4, fixed_abs, tag = 'smem constant byte address 0x4 - core index']
  #allocation1 [shape = 'u32[144,128]{1,0:T(1,128)}', space=vmem, size = 0x12000, scoped, tag = 'internal scratch']
  #allocation2 [shape = 'f32[2,8,128]{2,1,0:T(8,128)}', space=vmem, size = 0x2000, scoped, tag = 'scratch operand']
  #allocation3 [shape = 'f32[2,8,128]{2,1,0:T(8,128)}', space=vmem, size = 0x2000, scoped, tag = 'scratch operand']
  #allocation4 [shape = 'bf16[8,8,128]{2,1,0:T(8,128)(2,1)}', space=vmem, size = 0x4000, scoped, tag = 'scratch operand']
  #allocation5 [shape = 'f32[8,8,512]{2,1,0:T(8,128)}', space=vmem, size = 0x20000, scoped, tag = 'scratch operand']
  %s0 = inlined_call_operand.hbm [shape: bf16[16,8,128], index: 0, kind: input, shape index: {}]
  %s1 = inlined_call_operand.hbm [shape: bf16[128,512], index: 1, kind: input, shape index: {}]
  %s2 = inlined_call_operand.hbm [shape: bf16[128,512], index: 2, kind: input, shape index: {}]
  %s3 = inlined_call_operand.vmem [shape: f32[1,512], index: 3, kind: input, shape index: {}]
  %s4 = inlined_call_operand.hbm [shape: bf16[128,512], index: 4, kind: input, shape index: {}]
  %s5 = inlined_call_operand.hbm [shape: bf16[128,512], index: 5, kind: input, shape index: {}]
  %s6 = inlined_call_operand.vmem [shape: f32[1,512], index: 6, kind: input, shape index: {}]
  %s7 = inlined_call_operand.hbm [shape: bf16[128,128], index: 7, kind: input, shape index: {}]
  %s8 = inlined_call_operand.vmem [shape: f32[1,128], index: 8, kind: input, shape index: {}]
  %s9 = inlined_call_operand.hbm [shape: bf16[128,128], index: 9, kind: input, shape index: {}]
  %s10 = inlined_call_operand.vmem [shape: f32[1,128], index: 10, kind: input, shape index: {}]
  %s11 = inlined_call_operand.hbm [shape: f32[8,128], index: 11, kind: output, shape index: {}]
  %s12 = sld [smem:[#allocation0]]
  $region113: #{tpu_custom_call.1} parent=0
    _
  %s14 = ssub.s32 1, %s12
  %s15 = scalar_select 0, %s14, %s12
  $region1: #{tpu_custom_call.1} parent=0
    #allocation6 [shape = 'u8[32768]{0}', space=vmem, size = 0x8000, scoped, tag = 'input window, operand 0']
    #allocation7 [shape = 's32[2]{0}', space=sflag, size = 0x8, scoped, tag = 'scoped memory for tpu_custom_call.1']
    #allocation8 [shape = 's32[2]{0}', space=sflag, size = 0x8, scoped, tag = 'scoped memory for tpu_custom_call.1']
    #allocation9 [shape = 'u8[131072]{0}', space=vmem, size = 0x20000, scoped, tag = 'input window, operand 1, single buffered']
    #allocation10 [shape = 's32[1]{0}', space=sflag, size = 0x4, scoped, tag = 'scoped memory for tpu_custom_call.1']
    #allocation11 [shape = 'u8[131072]{0}', space=vmem, size = 0x20000, scoped, tag = 'input window, operand 2, single buffered']
    #allocation12 [shape = 'u8[131072]{0}', space=vmem, size = 0x20000, scoped, tag = 'input window, operand 4, single buffered']
    #allocation13 [shape = 's32[1]{0}', space=sflag, size = 0x4, scoped, tag = 'scoped memory for tpu_custom_call.1']
    #allocation14 [shape = 'u8[131072]{0}', space=vmem, size = 0x20000, scoped, tag = 'input window, operand 5, single buffered']
    #allocation15 [shape = 'u8[32768]{0}', space=vmem, size = 0x8000, scoped, tag = 'input window, operand 7, single buffered']
    #allocation16 [shape = 's32[1]{0}', space=sflag, size = 0x4, scoped, tag = 'scoped memory for tpu_custom_call.1']
    #allocation17 [shape = 'u8[32768]{0}', space=vmem, size = 0x8000, scoped, tag = 'input window, operand 9, single buffered']
    #allocation18 [shape = 'u8[4096]{0}', space=vmem, size = 0x1000, scoped, tag = 'output window, operand 0, single buffered']
    %16 = vsyncpa [#allocation7], 0
    %s17 = scalar_lea.sflag [#allocation7], 1
    %18 = vsyncpa %s17, 0
    %19 = vsyncpa [#allocation10], 0
    %20 = vsyncpa [#allocation13], 0
    %21 = vsyncpa [#allocation16], 0
    %22 = vsyncpa [#allocation8], 0
    loop: start=0, step=1, limit=4
    $region2: #{tpu_custom_call.1} parent=1 // loop_pre_header
      _
    $region3: #{tpu_custom_call.1} parent=1 // loop_header
      %s24 = sphi 0, %s28
      %p25 = scmp.ge.s32.totalorder %s24, 4
      %s31 = sphi 0, %s43
      %s32 = sphi 0, %s39
      %s33 = sphi 0, %s31
      %s34 = sphi 0, %s32
      %s35 = sphi 0, %s33
      %s36 = sphi 0, %s34
      %s48 = sphi 0, %s50
      %s51 = sphi 0, %s48
      %s52 = sphi 0, %s51
      %s68 = sphi 0, %s52
      %s72 = sphi 0, %s72
      %s74 = sphi 0, %s72
      %s75 = sphi 0, %s74
      %s89 = sphi 0, %s75
      %s93 = sphi 0, %s93
      %s95 = sphi 0, %s93
      %s96 = sphi 0, %s95
      %s110 = sphi 0, %s96
      %s114 = sphi 0, %s114
      %s116 = sphi 0, %s114
      %s117 = sphi 0, %s116
      %s131 = sphi 0, %s117
      %s135 = sphi 0, %s135
      %s137 = sphi 0, %s135
      %s138 = sphi 0, %s137
      %s152 = sphi 0, %s138
      %s156 = sphi 0, %s156
      %s158 = sphi 0, %s156
      %s159 = sphi 0, %s158
      %s173 = sphi 0, %s159
      %s177 = sphi 0, %s177
      %s179 = sphi 0, %s177
      %s180 = sphi 0, %s179
      %s194 = sphi 0, %s180
      %s198 = sphi 0, %s198
      %s200 = sphi 0, %s198
      %s201 = sphi 0, %s200
      %s215 = sphi 0, %s201
      %s219 = sphi 0, %s219
      %s221 = sphi 0, %s219
      %s222 = sphi 0, %s221
      %s236 = sphi 0, %s222
      %s240 = sphi 0, %s240
      %s242 = sphi 0, %s240
      %s243 = sphi 0, %s242
      %s257 = sphi 0, %s243
      %s261 = sphi 0, %s261
      %s263 = sphi 0, %s261
      %s264 = sphi 0, %s263
      %s278 = sphi 0, %s264
      %s284 = sphi 0, %s286
      %s287 = sphi 0, %s284
      %s288 = sphi 0, %s287
      %s304 = sphi 0, %s288
    $region4: #{tpu_custom_call.1} parent=1 // loop_header_branch
      %27 = sbr.rel (%p25) target = $region8
    $region5: #{tpu_custom_call.1} parent=1 // loop_body
      %s29 = ssub.s32 %s24, 1
      %s30 = ssub.s32 %s24, 2
      %s37 = sadd.s32 1, %s32
      %p38 = scmp.ge.s32.totalorder %s37, 2
      %s39 = scalar_select %p38, 0, %s37
      %s40 = sadd.s32 1, %s31
      %s41 = scalar_select %p38, %s40, %s31
      %p42 = scmp.ge.s32.totalorder %s41, 1
      %s43 = scalar_select %p42, 0, %s41
      %s44 = ssub.s32 %s32, %s39
      %s45 = ssub.s32 %s31, %s43
      %s46 = sor.u32 %s44, %s45
      %p47 = scmp.eq.s32.totalorder %s46, 0
      %s49 = sadd.s32 %s48, 1
      %s50 = scalar_select %p47, %s48, %s49
      %p53 = pneg %p47
      %p54 = scmp.eq.s32.totalorder %s24, 1
      %p55 = por %p53, %p54
      %p56 = scmp.ne.s32.totalorder %s48, %s51
      %p57 = scmp.eq.s32.totalorder %s24, 0
      %p58 = por %p56, %p57
      %p59 = scmp.ne.s32.totalorder %s48, %s51
      %p60 = scmp.eq.s32.totalorder %s29, 1
      %p61 = por %p59, %p60
      %p62 = scmp.ne.s32.totalorder %s51, %s52
      %p63 = scmp.eq.s32.totalorder %s29, 0
      %p64 = por %p62, %p63
      %p65 = scmp.ne.s32.totalorder %s51, %s52
      %p66 = scmp.eq.s32.totalorder %s30, 1
      %p67 = por %p65, %p66
      %p69 = scmp.ne.s32.totalorder %s52, %s68
      %p70 = scmp.eq.s32.totalorder %s30, 0
      %p71 = por %p69, %p70
      %s73 = sadd.s32 %s72, 1
      %p76 = scmp.eq.s32.totalorder %s24, 1
      %p77 = scmp.ne.s32.totalorder %s72, %s74
      %p78 = scmp.eq.s32.totalorder %s24, 0
      %p79 = por %p77, %p78
      %p80 = scmp.ne.s32.totalorder %s72, %s74
      %p81 = scmp.eq.s32.totalorder %s29, 1
      %p82 = por %p80, %p81
      %p83 = scmp.ne.s32.totalorder %s74, %s75
      %p84 = scmp.eq.s32.totalorder %s29, 0
      %p85 = por %p83, %p84
      %p86 = scmp.ne.s32.totalorder %s74, %s75
      %p87 = scmp.eq.s32.totalorder %s30, 1
      %p88 = por %p86, %p87
      %p90 = scmp.ne.s32.totalorder %s75, %s89
      %p91 = scmp.eq.s32.totalorder %s30, 0
      %p92 = por %p90, %p91
      %s94 = sadd.s32 %s93, 1
      %p97 = scmp.eq.s32.totalorder %s24, 1
      %p98 = scmp.ne.s32.totalorder %s93, %s95
      %p99 = scmp.eq.s32.totalorder %s24, 0
      %p100 = por %p98, %p99
      %p101 = scmp.ne.s32.totalorder %s93, %s95
      %p102 = scmp.eq.s32.totalorder %s29, 1
      %p103 = por %p101, %p102
      %p104 = scmp.ne.s32.totalorder %s95, %s96
      %p105 = scmp.eq.s32.totalorder %s29, 0
      %p106 = por %p104, %p105
      %p107 = scmp.ne.s32.totalorder %s95, %s96
      %p108 = scmp.eq.s32.totalorder %s30, 1
      %p109 = por %p107, %p108
      %p111 = scmp.ne.s32.totalorder %s96, %s110
      %p112 = scmp.eq.s32.totalorder %s30, 0
      %p113 = por %p111, %p112
      %s115 = sadd.s32 %s114, 1
      %p118 = scmp.eq.s32.totalorder %s24, 1
      %p119 = scmp.ne.s32.totalorder %s114, %s116
      %p120 = scmp.eq.s32.totalorder %s24, 0
      %p121 = por %p119, %p120
      %p122 = scmp.ne.s32.totalorder %s114, %s116
      %p123 = scmp.eq.s32.totalorder %s29, 1
      %p124 = por %p122, %p123
      %p125 = scmp.ne.s32.totalorder %s116, %s117
      %p126 = scmp.eq.s32.totalorder %s29, 0
      %p127 = por %p125, %p126
      %p128 = scmp.ne.s32.totalorder %s116, %s117
      %p129 = scmp.eq.s32.totalorder %s30, 1
      %p130 = por %p128, %p129
      %p132 = scmp.ne.s32.totalorder %s117, %s131
      %p133 = scmp.eq.s32.totalorder %s30, 0
      %p134 = por %p132, %p133
      %s136 = sadd.s32 %s135, 1
      %p139 = scmp.eq.s32.totalorder %s24, 1
      %p140 = scmp.ne.s32.totalorder %s135, %s137
      %p141 = scmp.eq.s32.totalorder %s24, 0
      %p142 = por %p140, %p141
      %p143 = scmp.ne.s32.totalorder %s135, %s137
      %p144 = scmp.eq.s32.totalorder %s29, 1
      %p145 = por %p143, %p144
      %p146 = scmp.ne.s32.totalorder %s137, %s138
      %p147 = scmp.eq.s32.totalorder %s29, 0
      %p148 = por %p146, %p147
      %p149 = scmp.ne.s32.totalorder %s137, %s138
      %p150 = scmp.eq.s32.totalorder %s30, 1
      %p151 = por %p149, %p150
      %p153 = scmp.ne.s32.totalorder %s138, %s152
      %p154 = scmp.eq.s32.totalorder %s30, 0
      %p155 = por %p153, %p154
      %s157 = sadd.s32 %s156, 1
      %p160 = scmp.eq.s32.totalorder %s24, 1
      %p161 = scmp.ne.s32.totalorder %s156, %s158
      %p162 = scmp.eq.s32.totalorder %s24, 0
      %p163 = por %p161, %p162
      %p164 = scmp.ne.s32.totalorder %s156, %s158
      %p165 = scmp.eq.s32.totalorder %s29, 1
      %p166 = por %p164, %p165
      %p167 = scmp.ne.s32.totalorder %s158, %s159
      %p168 = scmp.eq.s32.totalorder %s29, 0
      %p169 = por %p167, %p168
      %p170 = scmp.ne.s32.totalorder %s158, %s159
      %p171 = scmp.eq.s32.totalorder %s30, 1
      %p172 = por %p170, %p171
      %p174 = scmp.ne.s32.totalorder %s159, %s173
      %p175 = scmp.eq.s32.totalorder %s30, 0
      %p176 = por %p174, %p175
      %s178 = sadd.s32 %s177, 1
      %p181 = scmp.eq.s32.totalorder %s24, 1
      %p182 = scmp.ne.s32.totalorder %s177, %s179
      %p183 = scmp.eq.s32.totalorder %s24, 0
      %p184 = por %p182, %p183
      %p185 = scmp.ne.s32.totalorder %s177, %s179
      %p186 = scmp.eq.s32.totalorder %s29, 1
      %p187 = por %p185, %p186
      %p188 = scmp.ne.s32.totalorder %s179, %s180
      %p189 = scmp.eq.s32.totalorder %s29, 0
      %p190 = por %p188, %p189
      %p191 = scmp.ne.s32.totalorder %s179, %s180
      %p192 = scmp.eq.s32.totalorder %s30, 1
      %p193 = por %p191, %p192
      %p195 = scmp.ne.s32.totalorder %s180, %s194
      %p196 = scmp.eq.s32.totalorder %s30, 0
      %p197 = por %p195, %p196
      %s199 = sadd.s32 %s198, 1
      %p202 = scmp.eq.s32.totalorder %s24, 1
      %p203 = scmp.ne.s32.totalorder %s198, %s200
      %p204 = scmp.eq.s32.totalorder %s24, 0
      %p205 = por %p203, %p204
      %p206 = scmp.ne.s32.totalorder %s198, %s200
      %p207 = scmp.eq.s32.totalorder %s29, 1
      %p208 = por %p206, %p207
      %p209 = scmp.ne.s32.totalorder %s200, %s201
      %p210 = scmp.eq.s32.totalorder %s29, 0
      %p211 = por %p209, %p210
      %p212 = scmp.ne.s32.totalorder %s200, %s201
      %p213 = scmp.eq.s32.totalorder %s30, 1
      %p214 = por %p212, %p213
      %p216 = scmp.ne.s32.totalorder %s201, %s215
      %p217 = scmp.eq.s32.totalorder %s30, 0
      %p218 = por %p216, %p217
      %s220 = sadd.s32 %s219, 1
      %p223 = scmp.eq.s32.totalorder %s24, 1
      %p224 = scmp.ne.s32.totalorder %s219, %s221
      %p225 = scmp.eq.s32.totalorder %s24, 0
      %p226 = por %p224, %p225
      %p227 = scmp.ne.s32.totalorder %s219, %s221
      %p228 = scmp.eq.s32.totalorder %s29, 1
      %p229 = por %p227, %p228
      %p230 = scmp.ne.s32.totalorder %s221, %s222
      %p231 = scmp.eq.s32.totalorder %s29, 0
      %p232 = por %p230, %p231
      %p233 = scmp.ne.s32.totalorder %s221, %s222
      %p234 = scmp.eq.s32.totalorder %s30, 1
      %p235 = por %p233, %p234
      %p237 = scmp.ne.s32.totalorder %s222, %s236
      %p238 = scmp.eq.s32.totalorder %s30, 0
      %p239 = por %p237, %p238
      %s241 = sadd.s32 %s240, 1
      %p244 = scmp.eq.s32.totalorder %s24, 1
      %p245 = scmp.ne.s32.totalorder %s240, %s242
      %p246 = scmp.eq.s32.totalorder %s24, 0
      %p247 = por %p245, %p246
      %p248 = scmp.ne.s32.totalorder %s240, %s242
      %p249 = scmp.eq.s32.totalorder %s29, 1
      %p250 = por %p248, %p249
      %p251 = scmp.ne.s32.totalorder %s242, %s243
      %p252 = scmp.eq.s32.totalorder %s29, 0
      %p253 = por %p251, %p252
      %p254 = scmp.ne.s32.totalorder %s242, %s243
      %p255 = scmp.eq.s32.totalorder %s30, 1
      %p256 = por %p254, %p255
      %p258 = scmp.ne.s32.totalorder %s243, %s257
      %p259 = scmp.eq.s32.totalorder %s30, 0
      %p260 = por %p258, %p259
      %s262 = sadd.s32 %s261, 1
      %p265 = scmp.eq.s32.totalorder %s24, 1
      %p266 = scmp.ne.s32.totalorder %s261, %s263
      %p267 = scmp.eq.s32.totalorder %s24, 0
      %p268 = por %p266, %p267
      %p269 = scmp.ne.s32.totalorder %s261, %s263
      %p270 = scmp.eq.s32.totalorder %s29, 1
      %p271 = por %p269, %p270
      %p272 = scmp.ne.s32.totalorder %s263, %s264
      %p273 = scmp.eq.s32.totalorder %s29, 0
      %p274 = por %p272, %p273
      %p275 = scmp.ne.s32.totalorder %s263, %s264
      %p276 = scmp.eq.s32.totalorder %s30, 1
      %p277 = por %p275, %p276
      %p279 = scmp.ne.s32.totalorder %s264, %s278
      %p280 = scmp.eq.s32.totalorder %s30, 0
      %p281 = por %p279, %p280
      %s282 = ssub.s32 %s31, %s43
      %p283 = scmp.eq.s32.totalorder %s282, 0
      %s285 = sadd.s32 %s284, 1
      %s286 = scalar_select %p283, %s284, %s285
      %p289 = pneg %p283
      %p290 = scmp.eq.s32.totalorder %s24, 1
      %p291 = por %p289, %p290
      %p292 = scmp.ne.s32.totalorder %s284, %s287
      %p293 = scmp.eq.s32.totalorder %s24, 0
      %p294 = por %p292, %p293
      %p295 = scmp.ne.s32.totalorder %s284, %s287
      %p296 = scmp.eq.s32.totalorder %s29, 1
      %p297 = por %p295, %p296
      %p298 = scmp.ne.s32.totalorder %s287, %s288
      %p299 = scmp.eq.s32.totalorder %s29, 0
      %p300 = por %p298, %p299
      %p301 = scmp.ne.s32.totalorder %s287, %s288
      %p302 = scmp.eq.s32.totalorder %s30, 1
      %p303 = por %p301, %p302
      %p305 = scmp.ne.s32.totalorder %s288, %s304
      %p306 = scmp.eq.s32.totalorder %s30, 0
      %p307 = por %p305, %p306
      %p308 = scmp.le.s32.totalorder 1, %s24
      %p309 = scmp.lt.s32.totalorder %s24, 3
      %p310 = pnand %p308, %p309
      %p311 = pneg %p310
      // Predicated region
      $region9: #{tpu_custom_call.1} parent=5 // pred_check
        _
      $region10: #{tpu_custom_call.1} parent=5 // pred_check_branch
        %313 = sbr.rel (%p310) target = $region12
      $region11: #{tpu_custom_call.1} parent=5 // pred_region
        %s314 = ssub.s32 %s24, 1
        // Predicated region
        $region13: #{tpu_custom_call.1} parent=11 // pred_check
          %p315 = pneg %p85
        $region14: #{tpu_custom_call.1} parent=11 // pred_check_branch
          %317 = sbr.rel (%p315) target = $region16
        $region15: #{tpu_custom_call.1} parent=11 // pred_region
          %s319 = ssub.s32 4096, 4096
          %320 = vsyncadd [#allocation10], %s319
          %s321 = sshll.u32 [#allocation9], 4
          %s322 = int_to_ptr.vmem [resolvable:$true] %s321
          %327 = dma.hbm_to_vmem [thread:$0]  %s1, 4096, %s322, [#allocation10], 256, 256, 16
        $region16: #{tpu_custom_call.1} parent=11 // pred_fallthru
          _
        // Predicated region
        $region17: #{tpu_custom_call.1} parent=11 // pred_check
          %p328 = pneg %p106
        $region18: #{tpu_custom_call.1} parent=11 // pred_check_branch
          %330 = sbr.rel (%p328) target = $region20
        $region19: #{tpu_custom_call.1} parent=11 // pred_region
          %s332 = ssub.s32 4096, 4096
          %333 = vsyncadd [#allocation10], %s332
          %s334 = sshll.u32 [#allocation11], 4
          %s335 = int_to_ptr.vmem [resolvable:$true] %s334
          %340 = dma.hbm_to_vmem [thread:$0]  %s2, 4096, %s335, [#allocation10], 256, 256, 16
        $region20: #{tpu_custom_call.1} parent=11 // pred_fallthru
          _
        // Predicated region
        $region21: #{tpu_custom_call.1} parent=11 // pred_check
          %p341 = pneg %p127
        $region22: #{tpu_custom_call.1} parent=11 // pred_check_branch
          %343 = sbr.rel (%p341) target = $region24
        $region23: #{tpu_custom_call.1} parent=11 // pred_region
          _
        $region24: #{tpu_custom_call.1} parent=11 // pred_fallthru
          _
        // Predicated region
        $region25: #{tpu_custom_call.1} parent=11 // pred_check
          %p344 = pneg %p148
        $region26: #{tpu_custom_call.1} parent=11 // pred_check_branch
          %346 = sbr.rel (%p344) target = $region28
        $region27: #{tpu_custom_call.1} parent=11 // pred_region
          %s348 = ssub.s32 4096, 4096
          %349 = vsyncadd [#allocation13], %s348
          %s350 = sshll.u32 [#allocation12], 4
          %s351 = int_to_ptr.vmem [resolvable:$true] %s350
          %356 = dma.hbm_to_vmem [thread:$0]  %s4, 4096, %s351, [#allocation13], 256, 256, 16
        $region28: #{tpu_custom_call.1} parent=11 // pred_fallthru
          _
        // Predicated region
        $region29: #{tpu_custom_call.1} parent=11 // pred_check
          %p357 = pneg %p169
        $region30: #{tpu_custom_call.1} parent=11 // pred_check_branch
          %359 = sbr.rel (%p357) target = $region32
        $region31: #{tpu_custom_call.1} parent=11 // pred_region
          %s361 = ssub.s32 4096, 4096
          %362 = vsyncadd [#allocation13], %s361
          %s363 = sshll.u32 [#allocation14], 4
          %s364 = int_to_ptr.vmem [resolvable:$true] %s363
          %369 = dma.hbm_to_vmem [thread:$0]  %s5, 4096, %s364, [#allocation13], 256, 256, 16
        $region32: #{tpu_custom_call.1} parent=11 // pred_fallthru
          _
        // Predicated region
        $region33: #{tpu_custom_call.1} parent=11 // pred_check
          %p370 = pneg %p190
        $region34: #{tpu_custom_call.1} parent=11 // pred_check_branch
          %372 = sbr.rel (%p370) target = $region36
        $region35: #{tpu_custom_call.1} parent=11 // pred_region
          _
        $region36: #{tpu_custom_call.1} parent=11 // pred_fallthru
          _
        // Predicated region
        $region37: #{tpu_custom_call.1} parent=11 // pred_check
          %p373 = pneg %p211
        $region38: #{tpu_custom_call.1} parent=11 // pred_check_branch
          %375 = sbr.rel (%p373) target = $region40
        $region39: #{tpu_custom_call.1} parent=11 // pred_region
          %s377 = ssub.s32 1024, 1024
          %378 = vsyncadd [#allocation16], %s377
          %s379 = sshll.u32 [#allocation15], 4
          %s380 = int_to_ptr.vmem [resolvable:$true] %s379
          %385 = dma.hbm_to_vmem [thread:$0]  %s7, 1024, %s380, [#allocation16], 64, 64, 4
        $region40: #{tpu_custom_call.1} parent=11 // pred_fallthru
          _
        // Predicated region
        $region41: #{tpu_custom_call.1} parent=11 // pred_check
          %p386 = pneg %p232
        $region42: #{tpu_custom_call.1} parent=11 // pred_check_branch
          %388 = sbr.rel (%p386) target = $region44
        $region43: #{tpu_custom_call.1} parent=11 // pred_region
          _
        $region44: #{tpu_custom_call.1} parent=11 // pred_fallthru
          _
        // Predicated region
        $region45: #{tpu_custom_call.1} parent=11 // pred_check
          %p389 = pneg %p253
        $region46: #{tpu_custom_call.1} parent=11 // pred_check_branch
          %391 = sbr.rel (%p389) target = $region48
        $region47: #{tpu_custom_call.1} parent=11 // pred_region
          %s393 = ssub.s32 1024, 1024
          %394 = vsyncadd [#allocation16], %s393
          %s395 = sshll.u32 [#allocation17], 4
          %s396 = int_to_ptr.vmem [resolvable:$true] %s395
          %401 = dma.hbm_to_vmem [thread:$0]  %s9, 1024, %s396, [#allocation16], 64, 64, 4
        $region48: #{tpu_custom_call.1} parent=11 // pred_fallthru
          _
        // Predicated region
        $region49: #{tpu_custom_call.1} parent=11 // pred_check
          %p402 = pneg %p274
        $region50: #{tpu_custom_call.1} parent=11 // pred_check_branch
          %404 = sbr.rel (%p402) target = $region52
        $region51: #{tpu_custom_call.1} parent=11 // pred_region
          _
        $region52: #{tpu_custom_call.1} parent=11 // pred_fallthru
          _
      $region12: #{tpu_custom_call.1} parent=5 // pred_fallthru
        _
      %p405 = scmp.lt.s32.totalorder %s24, 2
      // Predicated region
      $region53: #{tpu_custom_call.1} parent=5 // pred_check
        %p406 = pneg %p405
      $region54: #{tpu_custom_call.1} parent=5 // pred_check_branch
        %408 = sbr.rel (%p406) target = $region56
      $region55: #{tpu_custom_call.1} parent=5 // pred_region
        // Predicated region
        $region57: #{tpu_custom_call.1} parent=55 // pred_check
          %p409 = pneg %p58
        $region58: #{tpu_custom_call.1} parent=55 // pred_check_branch
          %411 = sbr.rel (%p409) target = $region60
        $region59: #{tpu_custom_call.1} parent=55 // pred_region
          %s412 = sand.u32 %s48, 1
          %s413 = scalar_lea.sflag [#allocation7], %s412
          %s414 = sand.u32 %s48, 1
          %s415 = smul.addr %s414, 32
          %s416 = scalar_lea.vmem [#allocation6], %s415
          %s417 = smul.u32 8, %s32
          %s419 = ssub.s32 512, 512
          %420 = vsyncadd %s413, %s419
          %s421 = sadd.s32 %s31, %s417
          %s422 = smul.addr %s421, 64
          %s423 = scalar_lea.hbm %s0, %s422
          %s424 = sshll.u32 %s416, 4
          %s425 = int_to_ptr.vmem [resolvable:$true] %s424
          %430 = dma.hbm_to_vmem [thread:$0]  %s423, 512, %s425, %s413, 64, 64, 4
        $region60: #{tpu_custom_call.1} parent=55 // pred_fallthru
          _
      $region56: #{tpu_custom_call.1} parent=5 // pred_fallthru
        _
      %p431 = scmp.le.s32.totalorder 1, %s24
      %p432 = scmp.lt.s32.totalorder %s24, 3
      %p433 = pnand %p431, %p432
      %p434 = pneg %p433
      // Predicated region
      $region61: #{tpu_custom_call.1} parent=5 // pred_check
        _
      $region62: #{tpu_custom_call.1} parent=5 // pred_check_branch
        %436 = sbr.rel (%p433) target = $region64
      $region63: #{tpu_custom_call.1} parent=5 // pred_region
        %s437 = ssub.s32 %s24, 1
        %s438 = sand.u32 %s51, 1
        %s439 = scalar_lea.sflag [#allocation7], %s438
        %s440 = sand.u32 %s51, 1
        %s441 = smul.addr %s440, 32
        %s442 = scalar_lea.vmem [#allocation6], %s441
        // Predicated region
        $region65: #{tpu_custom_call.1} parent=63 // pred_check
          %p443 = pneg %p64
        $region66: #{tpu_custom_call.1} parent=63 // pred_check_branch
          %445 = sbr.rel (%p443) target = $region68
        $region67: #{tpu_custom_call.1} parent=63 // pred_region
          %446 = dma.done %s439, 512
        $region68: #{tpu_custom_call.1} parent=63 // pred_fallthru
          _
        // Predicated region
        $region69: #{tpu_custom_call.1} parent=63 // pred_check
          %p447 = pneg %p85
        $region70: #{tpu_custom_call.1} parent=63 // pred_check_branch
          %449 = sbr.rel (%p447) target = $region72
        $region71: #{tpu_custom_call.1} parent=63 // pred_region
          %450 = dma.done [#allocation10], 4096
        $region72: #{tpu_custom_call.1} parent=63 // pred_fallthru
          _
        // Predicated region
        $region73: #{tpu_custom_call.1} parent=63 // pred_check
          %p451 = pneg %p106
        $region74: #{tpu_custom_call.1} parent=63 // pred_check_branch
          %453 = sbr.rel (%p451) target = $region76
        $region75: #{tpu_custom_call.1} parent=63 // pred_region
          %454 = dma.done [#allocation10], 4096
        $region76: #{tpu_custom_call.1} parent=63 // pred_fallthru
          _
        // Predicated region
        $region77: #{tpu_custom_call.1} parent=63 // pred_check
          %p455 = pneg %p148
        $region78: #{tpu_custom_call.1} parent=63 // pred_check_branch
          %457 = sbr.rel (%p455) target = $region80
        $region79: #{tpu_custom_call.1} parent=63 // pred_region
          %458 = dma.done [#allocation13], 4096
        $region80: #{tpu_custom_call.1} parent=63 // pred_fallthru
          _
        // Predicated region
        $region81: #{tpu_custom_call.1} parent=63 // pred_check
          %p459 = pneg %p169
        $region82: #{tpu_custom_call.1} parent=63 // pred_check_branch
          %461 = sbr.rel (%p459) target = $region84
        $region83: #{tpu_custom_call.1} parent=63 // pred_region
          %462 = dma.done [#allocation13], 4096
        $region84: #{tpu_custom_call.1} parent=63 // pred_fallthru
          _
        // Predicated region
        $region85: #{tpu_custom_call.1} parent=63 // pred_check
          %p463 = pneg %p211
        $region86: #{tpu_custom_call.1} parent=63 // pred_check_branch
          %465 = sbr.rel (%p463) target = $region88
        $region87: #{tpu_custom_call.1} parent=63 // pred_region
          %466 = dma.done [#allocation16], 1024
        $region88: #{tpu_custom_call.1} parent=63 // pred_fallthru
          _
        // Predicated region
        $region89: #{tpu_custom_call.1} parent=63 // pred_check
          %p467 = pneg %p253
        $region90: #{tpu_custom_call.1} parent=63 // pred_check_branch
          %469 = sbr.rel (%p467) target = $region92
        $region91: #{tpu_custom_call.1} parent=63 // pred_region
          %470 = dma.done [#allocation16], 1024
        $region92: #{tpu_custom_call.1} parent=63 // pred_fallthru
          _
        %s471 = sand.u32 %s51, 1
        %s472 = scalar_lea.sflag [#allocation7], %s471
        %s473 = sand.u32 %s51, 1
        %s474 = smul.addr %s473, 32
        %s475 = scalar_lea.vmem [#allocation6], %s474
        %p476 = pneg %p64
        %p477 = pneg %p61
        %p478 = pneg %p85
        %p479 = pneg %p82
        %p480 = pneg %p106
        %p481 = pneg %p103
        %p482 = pneg %p127
        %p483 = pneg %p124
        %p484 = pneg %p148
        %p485 = pneg %p145
        %p486 = pneg %p169
        %p487 = pneg %p166
        %p488 = pneg %p190
        %p489 = pneg %p187
        %p490 = pneg %p211
        %p491 = pneg %p208
        %p492 = pneg %p232
        %p493 = pneg %p229
        %p494 = pneg %p253
        %p495 = pneg %p250
        %p496 = pneg %p274
        %p497 = pneg %p271
        %p498 = pneg %p300
        %p499 = pneg %p297
        %s500 = smul.u32 8, %s34
        %p502 = scmp.eq.s32.totalorder %s34, 0
        // Predicated region
        $region93: #{tpu_custom_call.1} parent=63 // pred_check
          %p503 = pneg %p502
        $region94: #{tpu_custom_call.1} parent=63 // pred_check_branch
          %505 = sbr.rel (%p503) target = $region96
        $region95: #{tpu_custom_call.1} parent=63 // pred_region
          %506 = vst [vmem:[#allocation2] sm:$0xff] 0.0
          %507 = vst [vmem:[#allocation2 + $0x8] sm:$0xff] 0.0
          %508 = vst [vmem:[#allocation3] sm:$0xff] 0.0
          %509 = vst [vmem:[#allocation3 + $0x8] sm:$0xff] 0.0
        $region96: #{tpu_custom_call.1} parent=63 // pred_fallthru
          _
        %v510 = vld [vmem:[%s442] sm:$0xf]
        %v511 = vld [vmem:[%s442 + $0x4] sm:$0xf]
        %v512 = vld [vmem:[%s442 + $0x8] sm:$0xf]
        %v513 = vld [vmem:[%s442 + $0xc] sm:$0xf]
        %v514 = vld [vmem:[%s442 + $0x10] sm:$0xf]
        %v515 = vld [vmem:[%s442 + $0x14] sm:$0xf]
        %v516 = vld [vmem:[%s442 + $0x18] sm:$0xf]
        %v517 = vld [vmem:[%s442 + $0x1c] sm:$0xf]
        %v518 = vld [vmem:[#allocation9] sm:$0xff]
        %v519 = vld [vmem:[#allocation9 + $0x8] sm:$0xff]
        %v520 = vld [vmem:[#allocation9 + $0x10] sm:$0xff]
        %v521 = vld [vmem:[#allocation9 + $0x18] sm:$0xff]
        %v522 = vld [vmem:[#allocation9 + $0x20] sm:$0xff]
        %v523 = vld [vmem:[#allocation9 + $0x28] sm:$0xff]
        %v524 = vld [vmem:[#allocation9 + $0x30] sm:$0xff]
        %v525 = vld [vmem:[#allocation9 + $0x38] sm:$0xff]
        %v526 = vld [vmem:[#allocation9 + $0x40] sm:$0xff]
        %v527 = vld [vmem:[#allocation9 + $0x48] sm:$0xff]
        %v528 = vld [vmem:[#allocation9 + $0x50] sm:$0xff]
        %v529 = vld [vmem:[#allocation9 + $0x58] sm:$0xff]
        %v530 = vld [vmem:[#allocation9 + $0x60] sm:$0xff]
        %v531 = vld [vmem:[#allocation9 + $0x68] sm:$0xff]
        %v532 = vld [vmem:[#allocation9 + $0x70] sm:$0xff]
        %v533 = vld [vmem:[#allocation9 + $0x78] sm:$0xff]
        %v534 = vld [vmem:[#allocation9 + $0x80] sm:$0xff]
        %v535 = vld [vmem:[#allocation9 + $0x88] sm:$0xff]
        %v536 = vld [vmem:[#allocation9 + $0x90] sm:$0xff]
        %v537 = vld [vmem:[#allocation9 + $0x98] sm:$0xff]
        %v538 = vld [vmem:[#allocation9 + $0xa0] sm:$0xff]
        %v539 = vld [vmem:[#allocation9 + $0xa8] sm:$0xff]
        %v540 = vld [vmem:[#allocation9 + $0xb0] sm:$0xff]
        %v541 = vld [vmem:[#allocation9 + $0xb8] sm:$0xff]
        %v542 = vld [vmem:[#allocation9 + $0xc0] sm:$0xff]
        %v543 = vld [vmem:[#allocation9 + $0xc8] sm:$0xff]
        %v544 = vld [vmem:[#allocation9 + $0xd0] sm:$0xff]
        %v545 = vld [vmem:[#allocation9 + $0xd8] sm:$0xff]
        %v546 = vld [vmem:[#allocation9 + $0xe0] sm:$0xff]
        %v547 = vld [vmem:[#allocation9 + $0xe8] sm:$0xff]
        %v548 = vld [vmem:[#allocation9 + $0xf0] sm:$0xff]
        %v549 = vld [vmem:[#allocation9 + $0xf8] sm:$0xff]
        %v550 = vld [vmem:[%s3] sm:$0xf]
        %v552 = vlaneseq
        %v553 = vshrl.u32 %v552, 7
        %v554 = vsub.s32 0, %v553
        %v555 = vrot.slane %v550, %v554
        %v556 = vlaneseq
        %v557 = vshrl.u32 %v556, 7
        %v558 = vsub.s32 1, %v557
        %v559 = vrot.slane %v550, %v558
        %v560 = vlaneseq
        %v561 = vshrl.u32 %v560, 7
        %v562 = vsub.s32 2, %v561
        %v563 = vrot.slane %v550, %v562
        %v564 = vlaneseq
        %v565 = vshrl.u32 %v564, 7
        %v566 = vsub.s32 3, %v565
        %v567 = vrot.slane %v550, %v566
        %v580 = vunpack.c.l.b16 %v510
        %v581 = vunpack.c.l.b16 %v511
        %v582 = vunpack.c.l.b16 %v512
        %v583 = vunpack.c.l.b16 %v513
        %v584 = vunpack.c.l.b16 %v514
        %v585 = vunpack.c.l.b16 %v515
        %v586 = vunpack.c.l.b16 %v516
        %v587 = vunpack.c.l.b16 %v517
        %v588 = vpack.c.b16 %v581, %v580
        %v589 = vpack.c.b16 %v583, %v582
        %v590 = vpack.c.b16 %v585, %v584
        %v591 = vpack.c.b16 %v587, %v586
        %v628 = vunpack.c.l.b16 %v518
        %v629 = vunpack.c.h.b16 %v518
        %v630 = vunpack.c.l.b16 %v519
        %v631 = vunpack.c.h.b16 %v519
        %v632 = vunpack.c.l.b16 %v520
        %v633 = vunpack.c.h.b16 %v520
        %v634 = vunpack.c.l.b16 %v521
        %v635 = vunpack.c.h.b16 %v521
        %v636 = vunpack.c.l.b16 %v522
        %v637 = vunpack.c.h.b16 %v522
        %v638 = vunpack.c.l.b16 %v523
        %v639 = vunpack.c.h.b16 %v523
        %v640 = vunpack.c.l.b16 %v524
        %v641 = vunpack.c.h.b16 %v524
        %v642 = vunpack.c.l.b16 %v525
        %v643 = vunpack.c.h.b16 %v525
        %v644 = vunpack.c.l.b16 %v526
        %v645 = vunpack.c.h.b16 %v526
        %v646 = vunpack.c.l.b16 %v527
        %v647 = vunpack.c.h.b16 %v527
        %v648 = vunpack.c.l.b16 %v528
        %v649 = vunpack.c.h.b16 %v528
        %v650 = vunpack.c.l.b16 %v529
        %v651 = vunpack.c.h.b16 %v529
        %v652 = vunpack.c.l.b16 %v530
        %v653 = vunpack.c.h.b16 %v530
        %v654 = vunpack.c.l.b16 %v531
        %v655 = vunpack.c.h.b16 %v531
        %v656 = vunpack.c.l.b16 %v532
        %v657 = vunpack.c.h.b16 %v532
        %v658 = vunpack.c.l.b16 %v533
        %v659 = vunpack.c.h.b16 %v533
        %v660 = vunpack.c.l.b16 %v534
        %v661 = vunpack.c.h.b16 %v534
        %v662 = vunpack.c.l.b16 %v535
        %v663 = vunpack.c.h.b16 %v535
        %v664 = vunpack.c.l.b16 %v536
        %v665 = vunpack.c.h.b16 %v536
        %v666 = vunpack.c.l.b16 %v537
        %v667 = vunpack.c.h.b16 %v537
        %v668 = vunpack.c.l.b16 %v538
        %v669 = vunpack.c.h.b16 %v538
        %v670 = vunpack.c.l.b16 %v539
        %v671 = vunpack.c.h.b16 %v539
        %v672 = vunpack.c.l.b16 %v540
        %v673 = vunpack.c.h.b16 %v540
        %v674 = vunpack.c.l.b16 %v541
        %v675 = vunpack.c.h.b16 %v541
        %v676 = vunpack.c.l.b16 %v542
        %v677 = vunpack.c.h.b16 %v542
        %v678 = vunpack.c.l.b16 %v543
        %v679 = vunpack.c.h.b16 %v543
        %v680 = vunpack.c.l.b16 %v544
        %v681 = vunpack.c.h.b16 %v544
        %v682 = vunpack.c.l.b16 %v545
        %v683 = vunpack.c.h.b16 %v545
        %v684 = vunpack.c.l.b16 %v546
        %v685 = vunpack.c.h.b16 %v546
        %v686 = vunpack.c.l.b16 %v547
        %v687 = vunpack.c.h.b16 %v547
        %v688 = vunpack.c.l.b16 %v548
        %v689 = vunpack.c.h.b16 %v548
        %v690 = vunpack.c.l.b16 %v549
        %v691 = vunpack.c.h.b16 %v549
        %v692 = vpack.c.b16 %v632, %v628
        %v693 = vpack.c.b16 %v633, %v629
        %v694 = vpack.c.b16 %v634, %v630
        %v695 = vpack.c.b16 %v635, %v631
        %v696 = vpack.c.b16 %v640, %v636
        %v697 = vpack.c.b16 %v641, %v637
        %v698 = vpack.c.b16 %v642, %v638
        %v699 = vpack.c.b16 %v643, %v639
        %v700 = vpack.c.b16 %v648, %v644
        %v701 = vpack.c.b16 %v649, %v645
        %v702 = vpack.c.b16 %v650, %v646
        %v703 = vpack.c.b16 %v651, %v647
        %v704 = vpack.c.b16 %v656, %v652
        %v705 = vpack.c.b16 %v657, %v653
        %v706 = vpack.c.b16 %v658, %v654
        %v707 = vpack.c.b16 %v659, %v655
        %v708 = vpack.c.b16 %v664, %v660
        %v709 = vpack.c.b16 %v665, %v661
        %v710 = vpack.c.b16 %v666, %v662
        %v711 = vpack.c.b16 %v667, %v663
        %v712 = vpack.c.b16 %v672, %v668
        %v713 = vpack.c.b16 %v673, %v669
        %v714 = vpack.c.b16 %v674, %v670
        %v715 = vpack.c.b16 %v675, %v671
        %v716 = vpack.c.b16 %v680, %v676
        %v717 = vpack.c.b16 %v681, %v677
        %v718 = vpack.c.b16 %v682, %v678
        %v719 = vpack.c.b16 %v683, %v679
        %v720 = vpack.c.b16 %v688, %v684
        %v721 = vpack.c.b16 %v689, %v685
        %v722 = vpack.c.b16 %v690, %v686
        %v723 = vpack.c.b16 %v691, %v687
        %756 = vmatprep.subr.bf16.mxu0 %v693
        %757 = vmatpush1.bf16.msra.mxu0 %v692
        %758 = vmatprep.subr.bf16.mxu0 %v697
        %759 = vmatpush1.bf16.msra.mxu0 %v696
        %760 = vmatprep.subr.bf16.mxu0 %v701
        %761 = vmatpush1.bf16.msra.mxu0 %v700
        %762 = vmatprep.subr.bf16.mxu0 %v705
        %763 = vmatpush1.bf16.msra.mxu0 %v704
        %764 = vmatprep.subr.bf16.mxu0 %v709
        %765 = vmatpush1.bf16.msra.mxu0 %v708
        %766 = vmatprep.subr.bf16.mxu0 %v713
        %767 = vmatpush1.bf16.msra.mxu0 %v712
        %768 = vmatprep.subr.bf16.mxu0 %v717
        %769 = vmatpush1.bf16.msra.mxu0 %v716
        %770 = vmatprep.subr.bf16.mxu0 %v721
        %771 = vmatpush1.bf16.msra.mxu0 %v720
        %772 = vmatprep.subr.bf16.mxu0 0
        %773 = vmatpush1.bf16.msra.mxu0 0
        %774 = vmatprep.subr.bf16.mxu0 0
        %775 = vmatpush1.bf16.msra.mxu0 0
        %776 = vmatprep.subr.bf16.mxu0 0
        %777 = vmatpush1.bf16.msra.mxu0 0
        %778 = vmatprep.subr.bf16.mxu0 0
        %779 = vmatpush1.bf16.msra.mxu0 0
        %780 = vmatprep.subr.bf16.mxu0 0
        %781 = vmatpush1.bf16.msra.mxu0 0
        %782 = vmatprep.subr.bf16.mxu0 0
        %783 = vmatpush1.bf16.msra.mxu0 0
        %784 = vmatprep.subr.bf16.mxu0 0
        %785 = vmatpush1.bf16.msra.mxu0 0
        %786 = vmatprep.subr.bf16.mxu0 0
        %787 = vmatpush1.bf16.msra.mxu0 0
        %788 = vmatprep.mubr.bf16.mxu0 0
        %789 = vmatmul.mubr.bf16.gmra.mrb[0].mxu0 %v588
        %v790 = vpop.f32.mrb[0].mxu0
        %v791 = vadd.f32 %v555, %v790
        %v792 = vpop.f32.mrb[0].mxu0
        %v793 = vadd.f32 %v559, %v792
        %v794 = vpop.f32.mrb[0].mxu0
        %v795 = vadd.f32 %v555, %v794
        %v796 = vpop.f32.mrb[0].mxu0
        %v797 = vadd.f32 %v559, %v796
        %798 = vmatprep.mubr.bf16.mxu0 0
        %799 = vmatmul.mubr.bf16.gmra.mrb[0].mxu0 %v589
        %v800 = vpop.f32.mrb[0].mxu0
        %v801 = vadd.f32 %v555, %v800
        %v802 = vpop.f32.mrb[0].mxu0
        %v803 = vadd.f32 %v559, %v802
        %v804 = vpop.f32.mrb[0].mxu0
        %v805 = vadd.f32 %v555, %v804
        %v806 = vpop.f32.mrb[0].mxu0
        %v807 = vadd.f32 %v559, %v806
        %808 = vmatprep.mubr.bf16.mxu0 0
        %809 = vmatmul.mubr.bf16.gmra.mrb[0].mxu0 %v590
        %v810 = vpop.f32.mrb[0].mxu0
        %v811 = vadd.f32 %v555, %v810
        %v812 = vpop.f32.mrb[0].mxu0
        %v813 = vadd.f32 %v559, %v812
        %v814 = vpop.f32.mrb[0].mxu0
        %v815 = vadd.f32 %v555, %v814
        %v816 = vpop.f32.mrb[0].mxu0
        %v817 = vadd.f32 %v559, %v816
        %818 = vmatprep.mubr.bf16.mxu0 0
        %819 = vmatmul.mubr.bf16.gmra.mrb[0].mxu0 %v591
        %v820 = vpop.f32.mrb[0].mxu0
        %v821 = vadd.f32 %v555, %v820
        %v822 = vpop.f32.mrb[0].mxu0
        %v823 = vadd.f32 %v559, %v822
        %v824 = vpop.f32.mrb[0].mxu0
        %v825 = vadd.f32 %v555, %v824
        %v826 = vpop.f32.mrb[0].mxu0
        %v827 = vadd.f32 %v559, %v826
        %828 = vdwg.mxu0
        %829 = vmatprep.subr.bf16.mxu0 %v695
        %830 = vmatpush1.bf16.msra.mxu0 %v694
        %831 = vmatprep.subr.bf16.mxu0 %v699
        %832 = vmatpush1.bf16.msra.mxu0 %v698
        %833 = vmatprep.subr.bf16.mxu0 %v703
        %834 = vmatpush1.bf16.msra.mxu0 %v702
        %835 = vmatprep.subr.bf16.mxu0 %v707
        %836 = vmatpush1.bf16.msra.mxu0 %v706
        %837 = vmatprep.subr.bf16.mxu0 %v711
        %838 = vmatpush1.bf16.msra.mxu0 %v710
        %839 = vmatprep.subr.bf16.mxu0 %v715
        %840 = vmatpush1.bf16.msra.mxu0 %v714
        %841 = vmatprep.subr.bf16.mxu0 %v719
        %842 = vmatpush1.bf16.msra.mxu0 %v718
        %843 = vmatprep.subr.bf16.mxu0 %v723
        %844 = vmatpush1.bf16.msra.mxu0 %v722
        %845 = vmatprep.subr.bf16.mxu0 0
        %846 = vmatpush1.bf16.msra.mxu0 0
        %847 = vmatprep.subr.bf16.mxu0 0
        %848 = vmatpush1.bf16.msra.mxu0 0
        %849 = vmatprep.subr.bf16.mxu0 0
        %850 = vmatpush1.bf16.msra.mxu0 0
        %851 = vmatprep.subr.bf16.mxu0 0
        %852 = vmatpush1.bf16.msra.mxu0 0
        %853 = vmatprep.subr.bf16.mxu0 0
        %854 = vmatpush1.bf16.msra.mxu0 0
        %855 = vmatprep.subr.bf16.mxu0 0
        %856 = vmatpush1.bf16.msra.mxu0 0
        %857 = vmatprep.subr.bf16.mxu0 0
        %858 = vmatpush1.bf16.msra.mxu0 0
        %859 = vmatprep.subr.bf16.mxu0 0
        %860 = vmatpush1.bf16.msra.mxu0 0
        %861 = vmatprep.mubr.bf16.mxu0 0
        %862 = vmatmul.mubr.bf16.gmra.mrb[0].mxu0 %v588
        %v863 = vpop.f32.mrb[0].mxu0
        %v864 = vadd.f32 %v563, %v863
        %v865 = vpop.f32.mrb[0].mxu0
        %v866 = vadd.f32 %v567, %v865
        %v867 = vpop.f32.mrb[0].mxu0
        %v868 = vadd.f32 %v563, %v867
        %v869 = vpop.f32.mrb[0].mxu0
        %v870 = vadd.f32 %v567, %v869
        %871 = vmatprep.mubr.bf16.mxu0 0
        %872 = vmatmul.mubr.bf16.gmra.mrb[0].mxu0 %v589
        %v873 = vpop.f32.mrb[0].mxu0
        %v874 = vadd.f32 %v563, %v873
        %v875 = vpop.f32.mrb[0].mxu0
        %v876 = vadd.f32 %v567, %v875
        %v877 = vpop.f32.mrb[0].mxu0
        %v878 = vadd.f32 %v563, %v877
        %v879 = vpop.f32.mrb[0].mxu0
        %v880 = vadd.f32 %v567, %v879
        %881 = vmatprep.mubr.bf16.mxu0 0
        %882 = vmatmul.mubr.bf16.gmra.mrb[0].mxu0 %v590
        %v883 = vpop.f32.mrb[0].mxu0
        %v884 = vadd.f32 %v563, %v883
        %v885 = vpop.f32.mrb[0].mxu0
        %v886 = vadd.f32 %v567, %v885
        %v887 = vpop.f32.mrb[0].mxu0
        %v888 = vadd.f32 %v563, %v887
        %v889 = vpop.f32.mrb[0].mxu0
        %v890 = vadd.f32 %v567, %v889
        %891 = vmatprep.mubr.bf16.mxu0 0
        %892 = vmatmul.mubr.bf16.gmra.mrb[0].mxu0 %v591
        %v893 = vpop.f32.mrb[0].mxu0
        %v894 = vadd.f32 %v563, %v893
        %v895 = vpop.f32.mrb[0].mxu0
        %v896 = vadd.f32 %v567, %v895
        %v897 = vpop.f32.mrb[0].mxu0
        %v898 = vadd.f32 %v563, %v897
        %v899 = vpop.f32.mrb[0].mxu0
        %v900 = vadd.f32 %v567, %v899
        %901 = vdwg.mxu0
        %902 = vst [vmem:[#allocation5] sm:$0xff] %v791
        %903 = vst [vmem:[#allocation5 + $0x8] sm:$0xff] %v793
        %904 = vst [vmem:[#allocation5 + $0x10] sm:$0xff] %v864
        %905 = vst [vmem:[#allocation5 + $0x18] sm:$0xff] %v866
        %906 = vst [vmem:[#allocation5 + $0x20] sm:$0xff] %v795
        %907 = vst [vmem:[#allocation5 + $0x28] sm:$0xff] %v797
        %908 = vst [vmem:[#allocation5 + $0x30] sm:$0xff] %v868
        %909 = vst [vmem:[#allocation5 + $0x38] sm:$0xff] %v870
        %910 = vst [vmem:[#allocation5 + $0x40] sm:$0xff] %v801
        %911 = vst [vmem:[#allocation5 + $0x48] sm:$0xff] %v803
        %912 = vst [vmem:[#allocation5 + $0x50] sm:$0xff] %v874
        %913 = vst [vmem:[#allocation5 + $0x58] sm:$0xff] %v876
        %914 = vst [vmem:[#allocation5 + $0x60] sm:$0xff] %v805
        %915 = vst [vmem:[#allocation5 + $0x68] sm:$0xff] %v807
        %916 = vst [vmem:[#allocation5 + $0x70] sm:$0xff] %v878
        %917 = vst [vmem:[#allocation5 + $0x78] sm:$0xff] %v880
        %918 = vst [vmem:[#allocation5 + $0x80] sm:$0xff] %v811
        %919 = vst [vmem:[#allocation5 + $0x88] sm:$0xff] %v813
        %920 = vst [vmem:[#allocation5 + $0x90] sm:$0xff] %v884
        %921 = vst [vmem:[#allocation5 + $0x98] sm:$0xff] %v886
        %922 = vst [vmem:[#allocation5 + $0xa0] sm:$0xff] %v815
        %923 = vst [vmem:[#allocation5 + $0xa8] sm:$0xff] %v817
        %924 = vst [vmem:[#allocation5 + $0xb0] sm:$0xff] %v888
        %925 = vst [vmem:[#allocation5 + $0xb8] sm:$0xff] %v890
        %926 = vst [vmem:[#allocation5 + $0xc0] sm:$0xff] %v821
        %927 = vst [vmem:[#allocation5 + $0xc8] sm:$0xff] %v823
        %928 = vst [vmem:[#allocation5 + $0xd0] sm:$0xff] %v894
        %929 = vst [vmem:[#allocation5 + $0xd8] sm:$0xff] %v896
        %930 = vst [vmem:[#allocation5 + $0xe0] sm:$0xff] %v825
        %931 = vst [vmem:[#allocation5 + $0xe8] sm:$0xff] %v827
        %932 = vst [vmem:[#allocation5 + $0xf0] sm:$0xff] %v898
        %933 = vst [vmem:[#allocation5 + $0xf8] sm:$0xff] %v900
        %v934 = vld [vmem:[#allocation11] sm:$0xff]
        %v935 = vld [vmem:[#allocation11 + $0x8] sm:$0xff]
        %v936 = vld [vmem:[#allocation11 + $0x10] sm:$0xff]
        %v937 = vld [vmem:[#allocation11 + $0x18] sm:$0xff]
        %v938 = vld [vmem:[#allocation11 + $0x20] sm:$0xff]
        %v939 = vld [vmem:[#allocation11 + $0x28] sm:$0xff]
        %v940 = vld [vmem:[#allocation11 + $0x30] sm:$0xff]
        %v941 = vld [vmem:[#allocation11 + $0x38] sm:$0xff]
        %v942 = vld [vmem:[#allocation11 + $0x40] sm:$0xff]
        %v943 = vld [vmem:[#allocation11 + $0x48] sm:$0xff]
        %v944 = vld [vmem:[#allocation11 + $0x50] sm:$0xff]
        %v945 = vld [vmem:[#allocation11 + $0x58] sm:$0xff]
        %v946 = vld [vmem:[#allocation11 + $0x60] sm:$0xff]
        %v947 = vld [vmem:[#allocation11 + $0x68] sm:$0xff]
        %v948 = vld [vmem:[#allocation11 + $0x70] sm:$0xff]
        %v949 = vld [vmem:[#allocation11 + $0x78] sm:$0xff]
        %v950 = vld [vmem:[#allocation11 + $0x80] sm:$0xff]
        %v951 = vld [vmem:[#allocation11 + $0x88] sm:$0xff]
        %v952 = vld [vmem:[#allocation11 + $0x90] sm:$0xff]
        %v953 = vld [vmem:[#allocation11 + $0x98] sm:$0xff]
        %v954 = vld [vmem:[#allocation11 + $0xa0] sm:$0xff]
        %v955 = vld [vmem:[#allocation11 + $0xa8] sm:$0xff]
        %v956 = vld [vmem:[#allocation11 + $0xb0] sm:$0xff]
        %v957 = vld [vmem:[#allocation11 + $0xb8] sm:$0xff]
        %v958 = vld [vmem:[#allocation11 + $0xc0] sm:$0xff]
        %v959 = vld [vmem:[#allocation11 + $0xc8] sm:$0xff]
        %v960 = vld [vmem:[#allocation11 + $0xd0] sm:$0xff]
        %v961 = vld [vmem:[#allocation11 + $0xd8] sm:$0xff]
        %v962 = vld [vmem:[#allocation11 + $0xe0] sm:$0xff]
        %v963 = vld [vmem:[#allocation11 + $0xe8] sm:$0xff]
        %v964 = vld [vmem:[#allocation11 + $0xf0] sm:$0xff]
        %v965 = vld [vmem:[#allocation11 + $0xf8] sm:$0xff]
        %v966 = vld [vmem:[#allocation2] sm:$0xff]
        %v967 = vld [vmem:[#allocation3] sm:$0xff]
        %v968 = vld [vmem:[#allocation5] sm:$0xff]
        %v969 = vld [vmem:[#allocation5 + $0x8] sm:$0xff]
        %v970 = vld [vmem:[#allocation5 + $0x10] sm:$0xff]
        %v971 = vld [vmem:[#allocation5 + $0x18] sm:$0xff]
        %v972 = vpack.c.bf16 %v966, %v966
        %v1005 = vunpack.c.l.b16 %v934
        %v1006 = vunpack.c.h.b16 %v934
        %v1007 = vunpack.c.l.b16 %v935
        %v1008 = vunpack.c.h.b16 %v935
        %v1009 = vunpack.c.l.b16 %v936
        %v1010 = vunpack.c.h.b16 %v936
        %v1011 = vunpack.c.l.b16 %v937
        %v1012 = vunpack.c.h.b16 %v937
        %v1013 = vunpack.c.l.b16 %v938
        %v1014 = vunpack.c.h.b16 %v938
        %v1015 = vunpack.c.l.b16 %v939
        %v1016 = vunpack.c.h.b16 %v939
        %v1017 = vunpack.c.l.b16 %v940
        %v1018 = vunpack.c.h.b16 %v940
        %v1019 = vunpack.c.l.b16 %v941
        %v1020 = vunpack.c.h.b16 %v941
        %v1021 = vunpack.c.l.b16 %v942
        %v1022 = vunpack.c.h.b16 %v942
        %v1023 = vunpack.c.l.b16 %v943
        %v1024 = vunpack.c.h.b16 %v943
        %v1025 = vunpack.c.l.b16 %v944
        %v1026 = vunpack.c.h.b16 %v944
        %v1027 = vunpack.c.l.b16 %v945
        %v1028 = vunpack.c.h.b16 %v945
        %v1029 = vunpack.c.l.b16 %v946
        %v1030 = vunpack.c.h.b16 %v946
        %v1031 = vunpack.c.l.b16 %v947
        %v1032 = vunpack.c.h.b16 %v947
        %v1033 = vunpack.c.l.b16 %v948
        %v1034 = vunpack.c.h.b16 %v948
        %v1035 = vunpack.c.l.b16 %v949
        %v1036 = vunpack.c.h.b16 %v949
        %v1037 = vunpack.c.l.b16 %v950
        %v1038 = vunpack.c.h.b16 %v950
        %v1039 = vunpack.c.l.b16 %v951
        %v1040 = vunpack.c.h.b16 %v951
        %v1041 = vunpack.c.l.b16 %v952
        %v1042 = vunpack.c.h.b16 %v952
        %v1043 = vunpack.c.l.b16 %v953
        %v1044 = vunpack.c.h.b16 %v953
        %v1045 = vunpack.c.l.b16 %v954
        %v1046 = vunpack.c.h.b16 %v954
        %v1047 = vunpack.c.l.b16 %v955
        %v1048 = vunpack.c.h.b16 %v955
        %v1049 = vunpack.c.l.b16 %v956
        %v1050 = vunpack.c.h.b16 %v956
        %v1051 = vunpack.c.l.b16 %v957
        %v1052 = vunpack.c.h.b16 %v957
        %v1053 = vunpack.c.l.b16 %v958
        %v1054 = vunpack.c.h.b16 %v958
        %v1055 = vunpack.c.l.b16 %v959
        %v1056 = vunpack.c.h.b16 %v959
        %v1057 = vunpack.c.l.b16 %v960
        %v1058 = vunpack.c.h.b16 %v960
        %v1059 = vunpack.c.l.b16 %v961
        %v1060 = vunpack.c.h.b16 %v961
        %v1061 = vunpack.c.l.b16 %v962
        %v1062 = vunpack.c.h.b16 %v962
        %v1063 = vunpack.c.l.b16 %v963
        %v1064 = vunpack.c.h.b16 %v963
        %v1065 = vunpack.c.l.b16 %v964
        %v1066 = vunpack.c.h.b16 %v964
        %v1067 = vunpack.c.l.b16 %v965
        %v1068 = vunpack.c.h.b16 %v965
        %v1069 = vpack.c.b16 %v1009, %v1005
        %v1070 = vpack.c.b16 %v1010, %v1006
        %v1071 = vpack.c.b16 %v1011, %v1007
        %v1072 = vpack.c.b16 %v1012, %v1008
        %v1073 = vpack.c.b16 %v1017, %v1013
        %v1074 = vpack.c.b16 %v1018, %v1014
        %v1075 = vpack.c.b16 %v1019, %v1015
        %v1076 = vpack.c.b16 %v1020, %v1016
        %v1077 = vpack.c.b16 %v1025, %v1021
        %v1078 = vpack.c.b16 %v1026, %v1022
        %v1079 = vpack.c.b16 %v1027, %v1023
        %v1080 = vpack.c.b16 %v1028, %v1024
        %v1081 = vpack.c.b16 %v1033, %v1029
        %v1082 = vpack.c.b16 %v1034, %v1030
        %v1083 = vpack.c.b16 %v1035, %v1031
        %v1084 = vpack.c.b16 %v1036, %v1032
        %v1085 = vpack.c.b16 %v1041, %v1037
        %v1086 = vpack.c.b16 %v1042, %v1038
        %v1087 = vpack.c.b16 %v1043, %v1039
        %v1088 = vpack.c.b16 %v1044, %v1040
        %v1089 = vpack.c.b16 %v1049, %v1045
        %v1090 = vpack.c.b16 %v1050, %v1046
        %v1091 = vpack.c.b16 %v1051, %v1047
        %v1092 = vpack.c.b16 %v1052, %v1048
        %v1093 = vpack.c.b16 %v1057, %v1053
        %v1094 = vpack.c.b16 %v1058, %v1054
        %v1095 = vpack.c.b16 %v1059, %v1055
        %v1096 = vpack.c.b16 %v1060, %v1056
        %v1097 = vpack.c.b16 %v1065, %v1061
        %v1098 = vpack.c.b16 %v1066, %v1062
        %v1099 = vpack.c.b16 %v1067, %v1063
        %v1100 = vpack.c.b16 %v1068, %v1064
        %1133 = vmatprep.subr.bf16.mxu0 %v1070
        %1134 = vmatpush1.bf16.msra.mxu0 %v1069
        %1135 = vmatprep.subr.bf16.mxu0 %v1074
        %1136 = vmatpush1.bf16.msra.mxu0 %v1073
        %1137 = vmatprep.subr.bf16.mxu0 %v1078
        %1138 = vmatpush1.bf16.msra.mxu0 %v1077
        %1139 = vmatprep.subr.bf16.mxu0 %v1082
        %1140 = vmatpush1.bf16.msra.mxu0 %v1081
        %1141 = vmatprep.subr.bf16.mxu0 %v1086
        %1142 = vmatpush1.bf16.msra.mxu0 %v1085
        %1143 = vmatprep.subr.bf16.mxu0 %v1090
        %1144 = vmatpush1.bf16.msra.mxu0 %v1089
        %1145 = vmatprep.subr.bf16.mxu0 %v1094
        %1146 = vmatpush1.bf16.msra.mxu0 %v1093
        %1147 = vmatprep.subr.bf16.mxu0 %v1098
        %1148 = vmatpush1.bf16.msra.mxu0 %v1097
        %1149 = vmatprep.subr.bf16.mxu0 0
        %1150 = vmatpush1.bf16.msra.mxu0 0
        %1151 = vmatprep.subr.bf16.mxu0 0
        %1152 = vmatpush1.bf16.msra.mxu0 0
        %1153 = vmatprep.subr.bf16.mxu0 0
        %1154 = vmatpush1.bf16.msra.mxu0 0
        %1155 = vmatprep.subr.bf16.mxu0 0
        %1156 = vmatpush1.bf16.msra.mxu0 0
        %1157 = vmatprep.subr.bf16.mxu0 0
        %1158 = vmatpush1.bf16.msra.mxu0 0
        %1159 = vmatprep.subr.bf16.mxu0 0
        %1160 = vmatpush1.bf16.msra.mxu0 0
        %1161 = vmatprep.subr.bf16.mxu0 0
        %1162 = vmatpush1.bf16.msra.mxu0 0
        %1163 = vmatprep.subr.bf16.mxu0 0
        %1164 = vmatpush1.bf16.msra.mxu0 0
        %1165 = vmatprep.mubr.bf16.mxu0 0
        %1166 = vmatmul.mubr.bf16.gmra.mrb[0].mxu0 %v972
        %v1167 = vpop.f32.mrb[0].mxu0
        %v1168 = vadd.f32 0.0, %v1167
        %v1169 = vpop.f32.mrb[0].mxu0
        %v1170 = vadd.f32 0.0, %v1169
        %v1171 = vpop.f32.mrb[0].mxu0
        %v1172 = vpop.f32.mrb[0].mxu0
        %1173 = vdwg.mxu0
        %1174 = vmatprep.subr.bf16.mxu0 %v1072
        %1175 = vmatpush1.bf16.msra.mxu0 %v1071
        %1176 = vmatprep.subr.bf16.mxu0 %v1076
        %1177 = vmatpush1.bf16.msra.mxu0 %v1075
        %1178 = vmatprep.subr.bf16.mxu0 %v1080
        %1179 = vmatpush1.bf16.msra.mxu0 %v1079
        %1180 = vmatprep.subr.bf16.mxu0 %v1084
        %1181 = vmatpush1.bf16.msra.mxu0 %v1083
        %1182 = vmatprep.subr.bf16.mxu0 %v1088
        %1183 = vmatpush1.bf16.msra.mxu0 %v1087
        %1184 = vmatprep.subr.bf16.mxu0 %v1092
        %1185 = vmatpush1.bf16.msra.mxu0 %v1091
        %1186 = vmatprep.subr.bf16.mxu0 %v1096
        %1187 = vmatpush1.bf16.msra.mxu0 %v1095
        %1188 = vmatprep.subr.bf16.mxu0 %v1100
        %1189 = vmatpush1.bf16.msra.mxu0 %v1099
        %1190 = vmatprep.subr.bf16.mxu0 0
        %1191 = vmatpush1.bf16.msra.mxu0 0
        %1192 = vmatprep.subr.bf16.mxu0 0
        %1193 = vmatpush1.bf16.msra.mxu0 0
        %1194 = vmatprep.subr.bf16.mxu0 0
        %1195 = vmatpush1.bf16.msra.mxu0 0
        %1196 = vmatprep.subr.bf16.mxu0 0
        %1197 = vmatpush1.bf16.msra.mxu0 0
        %1198 = vmatprep.subr.bf16.mxu0 0
        %1199 = vmatpush1.bf16.msra.mxu0 0
        %1200 = vmatprep.subr.bf16.mxu0 0
        %1201 = vmatpush1.bf16.msra.mxu0 0
        %1202 = vmatprep.subr.bf16.mxu0 0
        %1203 = vmatpush1.bf16.msra.mxu0 0
        %1204 = vmatprep.subr.bf16.mxu0 0
        %1205 = vmatpush1.bf16.msra.mxu0 0
        %1206 = vmatprep.mubr.bf16.mxu0 0
        %1207 = vmatmul.mubr.bf16.gmra.mrb[0].mxu0 %v972
        %v1208 = vpop.f32.mrb[0].mxu0
        %v1209 = vadd.f32 0.0, %v1208
        %v1210 = vpop.f32.mrb[0].mxu0
        %v1211 = vadd.f32 0.0, %v1210
        %v1212 = vpop.f32.mrb[0].mxu0
        %v1213 = vpop.f32.mrb[0].mxu0
        %1214 = vdwg.mxu0
        %v1215 = vadd.f32 %v968, %v1168
        %v1216 = vadd.f32 %v969, %v1170
        %v1217 = vadd.f32 %v970, %v1209
        %v1218 = vadd.f32 %v971, %v1211
        %v1219 = vmul.f32 %v1215, 0.5
        %v1220 = vtanh.pop %v1219
        %v1221 = vmul.f32 %v1220, 0.5
        %v1222 = vadd.f32 %v1221, 0.5
        %v1223 = vmul.f32 %v1216, 0.5
        %v1224 = vtanh.pop %v1223
        %v1225 = vmul.f32 %v1224, 0.5
        %v1226 = vadd.f32 %v1225, 0.5
        %v1227 = vtanh.pop %v1217
        %v1228 = vmul.f32 %v1218, 0.5
        %v1229 = vtanh.pop %v1228
        %v1230 = vmul.f32 %v1229, 0.5
        %v1231 = vadd.f32 %v1230, 0.5
        %v1232 = vmul.f32 %v1226, %v967
        %v1233 = vmul.f32 %v1222, %v1227
        %v1234 = vadd.f32 %v1232, %v1233
        %v1235 = vtanh.pop %v1234
        %v1236 = vmul.f32 %v1231, %v1235
        %v1237 = vpack.c.bf16 %v1236, %v1236
        %1238 = vst [vmem:[#allocation4] sm:$0xf] %v1237
        %s1239 = scalar_lea.vmem [#allocation5], 32
        %v1240 = vld [vmem:[%s1239] sm:$0xff]
        %v1241 = vld [vmem:[%s1239 + $0x8] sm:$0xff]
        %v1242 = vld [vmem:[%s1239 + $0x10] sm:$0xff]
        %v1243 = vld [vmem:[%s1239 + $0x18] sm:$0xff]
        %1244 = vmatprep.subr.bf16.mxu0 %v1070
        %1245 = vmatpush1.bf16.msra.mxu0 %v1069
        %1246 = vmatprep.subr.bf16.mxu0 %v1074
        %1247 = vmatpush1.bf16.msra.mxu0 %v1073
        %1248 = vmatprep.subr.bf16.mxu0 %v1078
        %1249 = vmatpush1.bf16.msra.mxu0 %v1077
        %1250 = vmatprep.subr.bf16.mxu0 %v1082
        %1251 = vmatpush1.bf16.msra.mxu0 %v1081
        %1252 = vmatprep.subr.bf16.mxu0 %v1086
        %1253 = vmatpush1.bf16.msra.mxu0 %v1085
        %1254 = vmatprep.subr.bf16.mxu0 %v1090
        %1255 = vmatpush1.bf16.msra.mxu0 %v1089
        %1256 = vmatprep.subr.bf16.mxu0 %v1094
        %1257 = vmatpush1.bf16.msra.mxu0 %v1093
        %1258 = vmatprep.subr.bf16.mxu0 %v1098
        %1259 = vmatpush1.bf16.msra.mxu0 %v1097
        %1260 = vmatprep.subr.bf16.mxu0 0
        %1261 = vmatpush1.bf16.msra.mxu0 0
        %1262 = vmatprep.subr.bf16.mxu0 0
        %1263 = vmatpush1.bf16.msra.mxu0 0
        %1264 = vmatprep.subr.bf16.mxu0 0
        %1265 = vmatpush1.bf16.msra.mxu0 0
        %1266 = vmatprep.subr.bf16.mxu0 0
        %1267 = vmatpush1.bf16.msra.mxu0 0
        %1268 = vmatprep.subr.bf16.mxu0 0
        %1269 = vmatpush1.bf16.msra.mxu0 0
        %1270 = vmatprep.subr.bf16.mxu0 0
        %1271 = vmatpush1.bf16.msra.mxu0 0
        %1272 = vmatprep.subr.bf16.mxu0 0
        %1273 = vmatpush1.bf16.msra.mxu0 0
        %1274 = vmatprep.subr.bf16.mxu0 0
        %1275 = vmatpush1.bf16.msra.mxu0 0
        %1276 = vmatprep.mubr.bf16.mxu0 0
        %1277 = vmatmul.mubr.bf16.gmra.mrb[0].mxu0 %v1237
        %v1278 = vpop.f32.mrb[0].mxu0
        %v1279 = vadd.f32 0.0, %v1278
        %v1280 = vpop.f32.mrb[0].mxu0
        %v1281 = vadd.f32 0.0, %v1280
        %v1282 = vpop.f32.mrb[0].mxu0
        %v1283 = vpop.f32.mrb[0].mxu0
        %1284 = vdwg.mxu0
        %1285 = vmatprep.subr.bf16.mxu0 %v1072
        %1286 = vmatpush1.bf16.msra.mxu0 %v1071
        %1287 = vmatprep.subr.bf16.mxu0 %v1076
        %1288 = vmatpush1.bf16.msra.mxu0 %v1075
        %1289 = vmatprep.subr.bf16.mxu0 %v1080
        %1290 = vmatpush1.bf16.msra.mxu0 %v1079
        %1291 = vmatprep.subr.bf16.mxu0 %v1084
        %1292 = vmatpush1.bf16.msra.mxu0 %v1083
        %1293 = vmatprep.subr.bf16.mxu0 %v1088
        %1294 = vmatpush1.bf16.msra.mxu0 %v1087
        %1295 = vmatprep.subr.bf16.mxu0 %v1092
        %1296 = vmatpush1.bf16.msra.mxu0 %v1091
        %1297 = vmatprep.subr.bf16.mxu0 %v1096
        %1298 = vmatpush1.bf16.msra.mxu0 %v1095
        %1299 = vmatprep.subr.bf16.mxu0 %v1100
        %1300 = vmatpush1.bf16.msra.mxu0 %v1099
        %1301 = vmatprep.subr.bf16.mxu0 0
        %1302 = vmatpush1.bf16.msra.mxu0 0
        %1303 = vmatprep.subr.bf16.mxu0 0
        %1304 = vmatpush1.bf16.msra.mxu0 0
        %1305 = vmatprep.subr.bf16.mxu0 0
        %1306 = vmatpush1.bf16.msra.mxu0 0
        %1307 = vmatprep.subr.bf16.mxu0 0
        %1308 = vmatpush1.bf16.msra.mxu0 0
        %1309 = vmatprep.subr.bf16.mxu0 0
        %1310 = vmatpush1.bf16.msra.mxu0 0
        %1311 = vmatprep.subr.bf16.mxu0 0
        %1312 = vmatpush1.bf16.msra.mxu0 0
        %1313 = vmatprep.subr.bf16.mxu0 0
        %1314 = vmatpush1.bf16.msra.mxu0 0
        %1315 = vmatprep.subr.bf16.mxu0 0
        %1316 = vmatpush1.bf16.msra.mxu0 0
        %1317 = vmatprep.mubr.bf16.mxu0 0
        %1318 = vmatmul.mubr.bf16.gmra.mrb[0].mxu0 %v1237
        %v1319 = vpop.f32.mrb[0].mxu0
        %v1320 = vadd.f32 0.0, %v1319
        %v1321 = vpop.f32.mrb[0].mxu0
        %v1322 = vadd.f32 0.0, %v1321
        %v1323 = vpop.f32.mrb[0].mxu0
        %v1324 = vpop.f32.mrb[0].mxu0
        %1325 = vdwg.mxu0
        %v1326 = vadd.f32 %v1240, %v1279
        %v1327 = vadd.f32 %v1241, %v1281
        %v1328 = vadd.f32 %v1242, %v1320
        %v1329 = vadd.f32 %v1243, %v1322
        %v1330 = vmul.f32 %v1326, 0.5
        %v1331 = vtanh.pop %v1330
        %v1332 = vmul.f32 %v1331, 0.5
        %v1333 = vadd.f32 %v1332, 0.5
        %v1334 = vmul.f32 %v1327, 0.5
        %v1335 = vtanh.pop %v1334
        %v1336 = vmul.f32 %v1335, 0.5
        %v1337 = vadd.f32 %v1336, 0.5
        %v1338 = vtanh.pop %v1328
        %v1339 = vmul.f32 %v1329, 0.5
        %v1340 = vtanh.pop %v1339
        %v1341 = vmul.f32 %v1340, 0.5
        %v1342 = vadd.f32 %v1341, 0.5
        %v1343 = vmul.f32 %v1337, %v1234
        %v1344 = vmul.f32 %v1333, %v1338
        %v1345 = vadd.f32 %v1343, %v1344
        %v1346 = vtanh.pop %v1345
        %v1347 = vmul.f32 %v1342, %v1346
        %v1348 = vpack.c.bf16 %v1347, %v1347
        %s1349 = scalar_lea.vmem [#allocation4], 4
        %1350 = vst [vmem:[%s1349] sm:$0xf] %v1348
        %s1351 = scalar_lea.vmem [#allocation5], 64
        %v1352 = vld [vmem:[%s1351] sm:$0xff]
        %v1353 = vld [vmem:[%s1351 + $0x8] sm:$0xff]
        %v1354 = vld [vmem:[%s1351 + $0x10] sm:$0xff]
        %v1355 = vld [vmem:[%s1351 + $0x18] sm:$0xff]
        %1356 = vmatprep.subr.bf16.mxu0 %v1070
        %1357 = vmatpush1.bf16.msra.mxu0 %v1069
        %1358 = vmatprep.subr.bf16.mxu0 %v1074
        %1359 = vmatpush1.bf16.msra.mxu0 %v1073
        %1360 = vmatprep.subr.bf16.mxu0 %v1078
        %1361 = vmatpush1.bf16.msra.mxu0 %v1077
        %1362 = vmatprep.subr.bf16.mxu0 %v1082
        %1363 = vmatpush1.bf16.msra.mxu0 %v1081
        %1364 = vmatprep.subr.bf16.mxu0 %v1086
        %1365 = vmatpush1.bf16.msra.mxu0 %v1085
        %1366 = vmatprep.subr.bf16.mxu0 %v1090
        %1367 = vmatpush1.bf16.msra.mxu0 %v1089
        %1368 = vmatprep.subr.bf16.mxu0 %v1094
        %1369 = vmatpush1.bf16.msra.mxu0 %v1093
        %1370 = vmatprep.subr.bf16.mxu0 %v1098
        %1371 = vmatpush1.bf16.msra.mxu0 %v1097
        %1372 = vmatprep.subr.bf16.mxu0 0
        %1373 = vmatpush1.bf16.msra.mxu0 0
        %1374 = vmatprep.subr.bf16.mxu0 0
        %1375 = vmatpush1.bf16.msra.mxu0 0
        %1376 = vmatprep.subr.bf16.mxu0 0
        %1377 = vmatpush1.bf16.msra.mxu0 0
        %1378 = vmatprep.subr.bf16.mxu0 0
        %1379 = vmatpush1.bf16.msra.mxu0 0
        %1380 = vmatprep.subr.bf16.mxu0 0
        %1381 = vmatpush1.bf16.msra.mxu0 0
        %1382 = vmatprep.subr.bf16.mxu0 0
        %1383 = vmatpush1.bf16.msra.mxu0 0
        %1384 = vmatprep.subr.bf16.mxu0 0
        %1385 = vmatpush1.bf16.msra.mxu0 0
        %1386 = vmatprep.subr.bf16.mxu0 0
        %1387 = vmatpush1.bf16.msra.mxu0 0
        %1388 = vmatprep.mubr.bf16.mxu0 0
        %1389 = vmatmul.mubr.bf16.gmra.mrb[0].mxu0 %v1348
        %v1390 = vpop.f32.mrb[0].mxu0
        %v1391 = vadd.f32 0.0, %v1390
        %v1392 = vpop.f32.mrb[0].mxu0
        %v1393 = vadd.f32 0.0, %v1392
        %v1394 = vpop.f32.mrb[0].mxu0
        %v1395 = vpop.f32.mrb[0].mxu0
        %1396 = vdwg.mxu0
        %1397 = vmatprep.subr.bf16.mxu0 %v1072
        %1398 = vmatpush1.bf16.msra.mxu0 %v1071
        %1399 = vmatprep.subr.bf16.mxu0 %v1076
        %1400 = vmatpush1.bf16.msra.mxu0 %v1075
        %1401 = vmatprep.subr.bf16.mxu0 %v1080
        %1402 = vmatpush1.bf16.msra.mxu0 %v1079
        %1403 = vmatprep.subr.bf16.mxu0 %v1084
        %1404 = vmatpush1.bf16.msra.mxu0 %v1083
        %1405 = vmatprep.subr.bf16.mxu0 %v1088
        %1406 = vmatpush1.bf16.msra.mxu0 %v1087
        %1407 = vmatprep.subr.bf16.mxu0 %v1092
        %1408 = vmatpush1.bf16.msra.mxu0 %v1091
        %1409 = vmatprep.subr.bf16.mxu0 %v1096
        %1410 = vmatpush1.bf16.msra.mxu0 %v1095
        %1411 = vmatprep.subr.bf16.mxu0 %v1100
        %1412 = vmatpush1.bf16.msra.mxu0 %v1099
        %1413 = vmatprep.subr.bf16.mxu0 0
        %1414 = vmatpush1.bf16.msra.mxu0 0
        %1415 = vmatprep.subr.bf16.mxu0 0
        %1416 = vmatpush1.bf16.msra.mxu0 0
        %1417 = vmatprep.subr.bf16.mxu0 0
        %1418 = vmatpush1.bf16.msra.mxu0 0
        %1419 = vmatprep.subr.bf16.mxu0 0
        %1420 = vmatpush1.bf16.msra.mxu0 0
        %1421 = vmatprep.subr.bf16.mxu0 0
        %1422 = vmatpush1.bf16.msra.mxu0 0
        %1423 = vmatprep.subr.bf16.mxu0 0
        %1424 = vmatpush1.bf16.msra.mxu0 0
        %1425 = vmatprep.subr.bf16.mxu0 0
        %1426 = vmatpush1.bf16.msra.mxu0 0
        %1427 = vmatprep.subr.bf16.mxu0 0
        %1428 = vmatpush1.bf16.msra.mxu0 0
        %1429 = vmatprep.mubr.bf16.mxu0 0
        %1430 = vmatmul.mubr.bf16.gmra.mrb[0].mxu0 %v1348
        %v1431 = vpop.f32.mrb[0].mxu0
        %v1432 = vadd.f32 0.0, %v1431
        %v1433 = vpop.f32.mrb[0].mxu0
        %v1434 = vadd.f32 0.0, %v1433
        %v1435 = vpop.f32.mrb[0].mxu0
        %v1436 = vpop.f32.mrb[0].mxu0
        %1437 = vdwg.mxu0
        %v1438 = vadd.f32 %v1352, %v1391
        %v1439 = vadd.f32 %v1353, %v1393
        %v1440 = vadd.f32 %v1354, %v1432
        %v1441 = vadd.f32 %v1355, %v1434
        %v1442 = vmul.f32 %v1438, 0.5
        %v1443 = vtanh.pop %v1442
        %v1444 = vmul.f32 %v1443, 0.5
        %v1445 = vadd.f32 %v1444, 0.5
        %v1446 = vmul.f32 %v1439, 0.5
        %v1447 = vtanh.pop %v1446
        %v1448 = vmul.f32 %v1447, 0.5
        %v1449 = vadd.f32 %v1448, 0.5
        %v1450 = vtanh.pop %v1440
        %v1451 = vmul.f32 %v1441, 0.5
        %v1452 = vtanh.pop %v1451
        %v1453 = vmul.f32 %v1452, 0.5
        %v1454 = vadd.f32 %v1453, 0.5
        %v1455 = vmul.f32 %v1449, %v1345
        %v1456 = vmul.f32 %v1445, %v1450
        %v1457 = vadd.f32 %v1455, %v1456
        %v1458 = vtanh.pop %v1457
        %v1459 = vmul.f32 %v1454, %v1458
        %v1460 = vpack.c.bf16 %v1459, %v1459
        %s1461 = scalar_lea.vmem [#allocation4], 8
        %1462 = vst [vmem:[%s1461] sm:$0xf] %v1460
        %s1463 = scalar_lea.vmem [#allocation5], 96
        %v1464 = vld [vmem:[%s1463] sm:$0xff]
        %v1465 = vld [vmem:[%s1463 + $0x8] sm:$0xff]
        %v1466 = vld [vmem:[%s1463 + $0x10] sm:$0xff]
        %v1467 = vld [vmem:[%s1463 + $0x18] sm:$0xff]
        %1468 = vmatprep.subr.bf16.mxu0 %v1070
        %1469 = vmatpush1.bf16.msra.mxu0 %v1069
        %1470 = vmatprep.subr.bf16.mxu0 %v1074
        %1471 = vmatpush1.bf16.msra.mxu0 %v1073
        %1472 = vmatprep.subr.bf16.mxu0 %v1078
        %1473 = vmatpush1.bf16.msra.mxu0 %v1077
        %1474 = vmatprep.subr.bf16.mxu0 %v1082
        %1475 = vmatpush1.bf16.msra.mxu0 %v1081
        %1476 = vmatprep.subr.bf16.mxu0 %v1086
        %1477 = vmatpush1.bf16.msra.mxu0 %v1085
        %1478 = vmatprep.subr.bf16.mxu0 %v1090
        %1479 = vmatpush1.bf16.msra.mxu0 %v1089
        %1480 = vmatprep.subr.bf16.mxu0 %v1094
        %1481 = vmatpush1.bf16.msra.mxu0 %v1093
        %1482 = vmatprep.subr.bf16.mxu0 %v1098
        %1483 = vmatpush1.bf16.msra.mxu0 %v1097
        %1484 = vmatprep.subr.bf16.mxu0 0
        %1485 = vmatpush1.bf16.msra.mxu0 0
        %1486 = vmatprep.subr.bf16.mxu0 0
        %1487 = vmatpush1.bf16.msra.mxu0 0
        %1488 = vmatprep.subr.bf16.mxu0 0
        %1489 = vmatpush1.bf16.msra.mxu0 0
        %1490 = vmatprep.subr.bf16.mxu0 0
        %1491 = vmatpush1.bf16.msra.mxu0 0
        %1492 = vmatprep.subr.bf16.mxu0 0
        %1493 = vmatpush1.bf16.msra.mxu0 0
        %1494 = vmatprep.subr.bf16.mxu0 0
        %1495 = vmatpush1.bf16.msra.mxu0 0
        %1496 = vmatprep.subr.bf16.mxu0 0
        %1497 = vmatpush1.bf16.msra.mxu0 0
        %1498 = vmatprep.subr.bf16.mxu0 0
        %1499 = vmatpush1.bf16.msra.mxu0 0
        %1500 = vmatprep.mubr.bf16.mxu0 0
        %1501 = vmatmul.mubr.bf16.gmra.mrb[0].mxu0 %v1460
        %v1502 = vpop.f32.mrb[0].mxu0
        %v1503 = vadd.f32 0.0, %v1502
        %v1504 = vpop.f32.mrb[0].mxu0
        %v1505 = vadd.f32 0.0, %v1504
        %v1506 = vpop.f32.mrb[0].mxu0
        %v1507 = vpop.f32.mrb[0].mxu0
        %1508 = vdwg.mxu0
        %1509 = vmatprep.subr.bf16.mxu0 %v1072
        %1510 = vmatpush1.bf16.msra.mxu0 %v1071
        %1511 = vmatprep.subr.bf16.mxu0 %v1076
        %1512 = vmatpush1.bf16.msra.mxu0 %v1075
        %1513 = vmatprep.subr.bf16.mxu0 %v1080
        %1514 = vmatpush1.bf16.msra.mxu0 %v1079
        %1515 = vmatprep.subr.bf16.mxu0 %v1084
        %1516 = vmatpush1.bf16.msra.mxu0 %v1083
        %1517 = vmatprep.subr.bf16.mxu0 %v1088
        %1518 = vmatpush1.bf16.msra.mxu0 %v1087
        %1519 = vmatprep.subr.bf16.mxu0 %v1092
        %1520 = vmatpush1.bf16.msra.mxu0 %v1091
        %1521 = vmatprep.subr.bf16.mxu0 %v1096
        %1522 = vmatpush1.bf16.msra.mxu0 %v1095
        %1523 = vmatprep.subr.bf16.mxu0 %v1100
        %1524 = vmatpush1.bf16.msra.mxu0 %v1099
        %1525 = vmatprep.subr.bf16.mxu0 0
        %1526 = vmatpush1.bf16.msra.mxu0 0
        %1527 = vmatprep.subr.bf16.mxu0 0
        %1528 = vmatpush1.bf16.msra.mxu0 0
        %1529 = vmatprep.subr.bf16.mxu0 0
        %1530 = vmatpush1.bf16.msra.mxu0 0
        %1531 = vmatprep.subr.bf16.mxu0 0
        %1532 = vmatpush1.bf16.msra.mxu0 0
        %1533 = vmatprep.subr.bf16.mxu0 0
        %1534 = vmatpush1.bf16.msra.mxu0 0
        %1535 = vmatprep.subr.bf16.mxu0 0
        %1536 = vmatpush1.bf16.msra.mxu0 0
        %1537 = vmatprep.subr.bf16.mxu0 0
        %1538 = vmatpush1.bf16.msra.mxu0 0
        %1539 = vmatprep.subr.bf16.mxu0 0
        %1540 = vmatpush1.bf16.msra.mxu0 0
        %1541 = vmatprep.mubr.bf16.mxu0 0
        %1542 = vmatmul.mubr.bf16.gmra.mrb[0].mxu0 %v1460
        %v1543 = vpop.f32.mrb[0].mxu0
        %v1544 = vadd.f32 0.0, %v1543
        %v1545 = vpop.f32.mrb[0].mxu0
        %v1546 = vadd.f32 0.0, %v1545
        %v1547 = vpop.f32.mrb[0].mxu0
        %v1548 = vpop.f32.mrb[0].mxu0
        %1549 = vdwg.mxu0
        %v1550 = vadd.f32 %v1464, %v1503
        %v1551 = vadd.f32 %v1465, %v1505
        %v1552 = vadd.f32 %v1466, %v1544
        %v1553 = vadd.f32 %v1467, %v1546
        %v1554 = vmul.f32 %v1550, 0.5
        %v1555 = vtanh.pop %v1554
        %v1556 = vmul.f32 %v1555, 0.5
        %v1557 = vadd.f32 %v1556, 0.5
        %v1558 = vmul.f32 %v1551, 0.5
        %v1559 = vtanh.pop %v1558
        %v1560 = vmul.f32 %v1559, 0.5
        %v1561 = vadd.f32 %v1560, 0.5
        %v1562 = vtanh.pop %v1552
        %v1563 = vmul.f32 %v1553, 0.5
        %v1564 = vtanh.pop %v1563
        %v1565 = vmul.f32 %v1564, 0.5
        %v1566 = vadd.f32 %v1565, 0.5
        %v1567 = vmul.f32 %v1561, %v1457
        %v1568 = vmul.f32 %v1557, %v1562
        %v1569 = vadd.f32 %v1567, %v1568
        %v1570 = vtanh.pop %v1569
        %v1571 = vmul.f32 %v1566, %v1570
        %v1572 = vpack.c.bf16 %v1571, %v1571
        %s1573 = scalar_lea.vmem [#allocation4], 12
        %1574 = vst [vmem:[%s1573] sm:$0xf] %v1572
        %s1575 = scalar_lea.vmem [#allocation5], 128
        %v1576 = vld [vmem:[%s1575] sm:$0xff]
        %v1577 = vld [vmem:[%s1575 + $0x8] sm:$0xff]
        %v1578 = vld [vmem:[%s1575 + $0x10] sm:$0xff]
        %v1579 = vld [vmem:[%s1575 + $0x18] sm:$0xff]
        %1580 = vmatprep.subr.bf16.mxu0 %v1070
        %1581 = vmatpush1.bf16.msra.mxu0 %v1069
        %1582 = vmatprep.subr.bf16.mxu0 %v1074
        %1583 = vmatpush1.bf16.msra.mxu0 %v1073
        %1584 = vmatprep.subr.bf16.mxu0 %v1078
        %1585 = vmatpush1.bf16.msra.mxu0 %v1077
        %1586 = vmatprep.subr.bf16.mxu0 %v1082
        %1587 = vmatpush1.bf16.msra.mxu0 %v1081
        %1588 = vmatprep.subr.bf16.mxu0 %v1086
        %1589 = vmatpush1.bf16.msra.mxu0 %v1085
        %1590 = vmatprep.subr.bf16.mxu0 %v1090
        %1591 = vmatpush1.bf16.msra.mxu0 %v1089
        %1592 = vmatprep.subr.bf16.mxu0 %v1094
        %1593 = vmatpush1.bf16.msra.mxu0 %v1093
        %1594 = vmatprep.subr.bf16.mxu0 %v1098
        %1595 = vmatpush1.bf16.msra.mxu0 %v1097
        %1596 = vmatprep.subr.bf16.mxu0 0
        %1597 = vmatpush1.bf16.msra.mxu0 0
        %1598 = vmatprep.subr.bf16.mxu0 0
        %1599 = vmatpush1.bf16.msra.mxu0 0
        %1600 = vmatprep.subr.bf16.mxu0 0
        %1601 = vmatpush1.bf16.msra.mxu0 0
        %1602 = vmatprep.subr.bf16.mxu0 0
        %1603 = vmatpush1.bf16.msra.mxu0 0
        %1604 = vmatprep.subr.bf16.mxu0 0
        %1605 = vmatpush1.bf16.msra.mxu0 0
        %1606 = vmatprep.subr.bf16.mxu0 0
        %1607 = vmatpush1.bf16.msra.mxu0 0
        %1608 = vmatprep.subr.bf16.mxu0 0
        %1609 = vmatpush1.bf16.msra.mxu0 0
        %1610 = vmatprep.subr.bf16.mxu0 0
        %1611 = vmatpush1.bf16.msra.mxu0 0
        %1612 = vmatprep.mubr.bf16.mxu0 0
        %1613 = vmatmul.mubr.bf16.gmra.mrb[0].mxu0 %v1572
        %v1614 = vpop.f32.mrb[0].mxu0
        %v1615 = vadd.f32 0.0, %v1614
        %v1616 = vpop.f32.mrb[0].mxu0
        %v1617 = vadd.f32 0.0, %v1616
        %v1618 = vpop.f32.mrb[0].mxu0
        %v1619 = vpop.f32.mrb[0].mxu0
        %1620 = vdwg.mxu0
        %1621 = vmatprep.subr.bf16.mxu0 %v1072
        %1622 = vmatpush1.bf16.msra.mxu0 %v1071
        %1623 = vmatprep.subr.bf16.mxu0 %v1076
        %1624 = vmatpush1.bf16.msra.mxu0 %v1075
        %1625 = vmatprep.subr.bf16.mxu0 %v1080
        %1626 = vmatpush1.bf16.msra.mxu0 %v1079
        %1627 = vmatprep.subr.bf16.mxu0 %v1084
        %1628 = vmatpush1.bf16.msra.mxu0 %v1083
        %1629 = vmatprep.subr.bf16.mxu0 %v1088
        %1630 = vmatpush1.bf16.msra.mxu0 %v1087
        %1631 = vmatprep.subr.bf16.mxu0 %v1092
        %1632 = vmatpush1.bf16.msra.mxu0 %v1091
        %1633 = vmatprep.subr.bf16.mxu0 %v1096
        %1634 = vmatpush1.bf16.msra.mxu0 %v1095
        %1635 = vmatprep.subr.bf16.mxu0 %v1100
        %1636 = vmatpush1.bf16.msra.mxu0 %v1099
        %1637 = vmatprep.subr.bf16.mxu0 0
        %1638 = vmatpush1.bf16.msra.mxu0 0
        %1639 = vmatprep.subr.bf16.mxu0 0
        %1640 = vmatpush1.bf16.msra.mxu0 0
        %1641 = vmatprep.subr.bf16.mxu0 0
        %1642 = vmatpush1.bf16.msra.mxu0 0
        %1643 = vmatprep.subr.bf16.mxu0 0
        %1644 = vmatpush1.bf16.msra.mxu0 0
        %1645 = vmatprep.subr.bf16.mxu0 0
        %1646 = vmatpush1.bf16.msra.mxu0 0
        %1647 = vmatprep.subr.bf16.mxu0 0
        %1648 = vmatpush1.bf16.msra.mxu0 0
        %1649 = vmatprep.subr.bf16.mxu0 0
        %1650 = vmatpush1.bf16.msra.mxu0 0
        %1651 = vmatprep.subr.bf16.mxu0 0
        %1652 = vmatpush1.bf16.msra.mxu0 0
        %1653 = vmatprep.mubr.bf16.mxu0 0
        %1654 = vmatmul.mubr.bf16.gmra.mrb[0].mxu0 %v1572
        %v1655 = vpop.f32.mrb[0].mxu0
        %v1656 = vadd.f32 0.0, %v1655
        %v1657 = vpop.f32.mrb[0].mxu0
        %v1658 = vadd.f32 0.0, %v1657
        %v1659 = vpop.f32.mrb[0].mxu0
        %v1660 = vpop.f32.mrb[0].mxu0
        %1661 = vdwg.mxu0
        %v1662 = vadd.f32 %v1576, %v1615
        %v1663 = vadd.f32 %v1577, %v1617
        %v1664 = vadd.f32 %v1578, %v1656
        %v1665 = vadd.f32 %v1579, %v1658
        %v1666 = vmul.f32 %v1662, 0.5
        %v1667 = vtanh.pop %v1666
        %v1668 = vmul.f32 %v1667, 0.5
        %v1669 = vadd.f32 %v1668, 0.5
        %v1670 = vmul.f32 %v1663, 0.5
        %v1671 = vtanh.pop %v1670
        %v1672 = vmul.f32 %v1671, 0.5
        %v1673 = vadd.f32 %v1672, 0.5
        %v1674 = vtanh.pop %v1664
        %v1675 = vmul.f32 %v1665, 0.5
        %v1676 = vtanh.pop %v1675
        %v1677 = vmul.f32 %v1676, 0.5
        %v1678 = vadd.f32 %v1677, 0.5
        %v1679 = vmul.f32 %v1673, %v1569
        %v1680 = vmul.f32 %v1669, %v1674
        %v1681 = vadd.f32 %v1679, %v1680
        %v1682 = vtanh.pop %v1681
        %v1683 = vmul.f32 %v1678, %v1682
        %v1684 = vpack.c.bf16 %v1683, %v1683
        %s1685 = scalar_lea.vmem [#allocation4], 16
        %1686 = vst [vmem:[%s1685] sm:$0xf] %v1684
        %s1687 = scalar_lea.vmem [#allocation5], 160
        %v1688 = vld [vmem:[%s1687] sm:$0xff]
        %v1689 = vld [vmem:[%s1687 + $0x8] sm:$0xff]
        %v1690 = vld [vmem:[%s1687 + $0x10] sm:$0xff]
        %v1691 = vld [vmem:[%s1687 + $0x18] sm:$0xff]
        %1692 = vmatprep.subr.bf16.mxu0 %v1070
        %1693 = vmatpush1.bf16.msra.mxu0 %v1069
        %1694 = vmatprep.subr.bf16.mxu0 %v1074
        %1695 = vmatpush1.bf16.msra.mxu0 %v1073
        %1696 = vmatprep.subr.bf16.mxu0 %v1078
        %1697 = vmatpush1.bf16.msra.mxu0 %v1077
        %1698 = vmatprep.subr.bf16.mxu0 %v1082
        %1699 = vmatpush1.bf16.msra.mxu0 %v1081
        %1700 = vmatprep.subr.bf16.mxu0 %v1086
        %1701 = vmatpush1.bf16.msra.mxu0 %v1085
        %1702 = vmatprep.subr.bf16.mxu0 %v1090
        %1703 = vmatpush1.bf16.msra.mxu0 %v1089
        %1704 = vmatprep.subr.bf16.mxu0 %v1094
        %1705 = vmatpush1.bf16.msra.mxu0 %v1093
        %1706 = vmatprep.subr.bf16.mxu0 %v1098
        %1707 = vmatpush1.bf16.msra.mxu0 %v1097
        %1708 = vmatprep.subr.bf16.mxu0 0
        %1709 = vmatpush1.bf16.msra.mxu0 0
        %1710 = vmatprep.subr.bf16.mxu0 0
        %1711 = vmatpush1.bf16.msra.mxu0 0
        %1712 = vmatprep.subr.bf16.mxu0 0
        %1713 = vmatpush1.bf16.msra.mxu0 0
        %1714 = vmatprep.subr.bf16.mxu0 0
        %1715 = vmatpush1.bf16.msra.mxu0 0
        %1716 = vmatprep.subr.bf16.mxu0 0
        %1717 = vmatpush1.bf16.msra.mxu0 0
        %1718 = vmatprep.subr.bf16.mxu0 0
        %1719 = vmatpush1.bf16.msra.mxu0 0
        %1720 = vmatprep.subr.bf16.mxu0 0
        %1721 = vmatpush1.bf16.msra.mxu0 0
        %1722 = vmatprep.subr.bf16.mxu0 0
        %1723 = vmatpush1.bf16.msra.mxu0 0
        %1724 = vmatprep.mubr.bf16.mxu0 0
        %1725 = vmatmul.mubr.bf16.gmra.mrb[0].mxu0 %v1684
        %v1726 = vpop.f32.mrb[0].mxu0
        %v1727 = vadd.f32 0.0, %v1726
        %v1728 = vpop.f32.mrb[0].mxu0
        %v1729 = vadd.f32 0.0, %v1728
        %v1730 = vpop.f32.mrb[0].mxu0
        %v1731 = vpop.f32.mrb[0].mxu0
        %1732 = vdwg.mxu0
        %1733 = vmatprep.subr.bf16.mxu0 %v1072
        %1734 = vmatpush1.bf16.msra.mxu0 %v1071
        %1735 = vmatprep.subr.bf16.mxu0 %v1076
        %1736 = vmatpush1.bf16.msra.mxu0 %v1075
        %1737 = vmatprep.subr.bf16.mxu0 %v1080
        %1738 = vmatpush1.bf16.msra.mxu0 %v1079
        %1739 = vmatprep.subr.bf16.mxu0 %v1084
        %1740 = vmatpush1.bf16.msra.mxu0 %v1083
        %1741 = vmatprep.subr.bf16.mxu0 %v1088
        %1742 = vmatpush1.bf16.msra.mxu0 %v1087
        %1743 = vmatprep.subr.bf16.mxu0 %v1092
        %1744 = vmatpush1.bf16.msra.mxu0 %v1091
        %1745 = vmatprep.subr.bf16.mxu0 %v1096
        %1746 = vmatpush1.bf16.msra.mxu0 %v1095
        %1747 = vmatprep.subr.bf16.mxu0 %v1100
        %1748 = vmatpush1.bf16.msra.mxu0 %v1099
        %1749 = vmatprep.subr.bf16.mxu0 0
        %1750 = vmatpush1.bf16.msra.mxu0 0
        %1751 = vmatprep.subr.bf16.mxu0 0
        %1752 = vmatpush1.bf16.msra.mxu0 0
        %1753 = vmatprep.subr.bf16.mxu0 0
        %1754 = vmatpush1.bf16.msra.mxu0 0
        %1755 = vmatprep.subr.bf16.mxu0 0
        %1756 = vmatpush1.bf16.msra.mxu0 0
        %1757 = vmatprep.subr.bf16.mxu0 0
        %1758 = vmatpush1.bf16.msra.mxu0 0
        %1759 = vmatprep.subr.bf16.mxu0 0
        %1760 = vmatpush1.bf16.msra.mxu0 0
        %1761 = vmatprep.subr.bf16.mxu0 0
        %1762 = vmatpush1.bf16.msra.mxu0 0
        %1763 = vmatprep.subr.bf16.mxu0 0
        %1764 = vmatpush1.bf16.msra.mxu0 0
        %1765 = vmatprep.mubr.bf16.mxu0 0
        %1766 = vmatmul.mubr.bf16.gmra.mrb[0].mxu0 %v1684
        %v1767 = vpop.f32.mrb[0].mxu0
        %v1768 = vadd.f32 0.0, %v1767
        %v1769 = vpop.f32.mrb[0].mxu0
        %v1770 = vadd.f32 0.0, %v1769
        %v1771 = vpop.f32.mrb[0].mxu0
        %v1772 = vpop.f32.mrb[0].mxu0
        %1773 = vdwg.mxu0
        %v1774 = vadd.f32 %v1688, %v1727
        %v1775 = vadd.f32 %v1689, %v1729
        %v1776 = vadd.f32 %v1690, %v1768
        %v1777 = vadd.f32 %v1691, %v1770
        %v1778 = vmul.f32 %v1774, 0.5
        %v1779 = vtanh.pop %v1778
        %v1780 = vmul.f32 %v1779, 0.5
        %v1781 = vadd.f32 %v1780, 0.5
        %v1782 = vmul.f32 %v1775, 0.5
        %v1783 = vtanh.pop %v1782
        %v1784 = vmul.f32 %v1783, 0.5
        %v1785 = vadd.f32 %v1784, 0.5
        %v1786 = vtanh.pop %v1776
        %v1787 = vmul.f32 %v1777, 0.5
        %v1788 = vtanh.pop %v1787
        %v1789 = vmul.f32 %v1788, 0.5
        %v1790 = vadd.f32 %v1789, 0.5
        %v1791 = vmul.f32 %v1785, %v1681
        %v1792 = vmul.f32 %v1781, %v1786
        %v1793 = vadd.f32 %v1791, %v1792
        %v1794 = vtanh.pop %v1793
        %v1795 = vmul.f32 %v1790, %v1794
        %v1796 = vpack.c.bf16 %v1795, %v1795
        %s1797 = scalar_lea.vmem [#allocation4], 20
        %1798 = vst [vmem:[%s1797] sm:$0xf] %v1796
        %s1799 = scalar_lea.vmem [#allocation5], 192
        %v1800 = vld [vmem:[%s1799] sm:$0xff]
        %v1801 = vld [vmem:[%s1799 + $0x8] sm:$0xff]
        %v1802 = vld [vmem:[%s1799 + $0x10] sm:$0xff]
        %v1803 = vld [vmem:[%s1799 + $0x18] sm:$0xff]
        %1804 = vmatprep.subr.bf16.mxu0 %v1070
        %1805 = vmatpush1.bf16.msra.mxu0 %v1069
        %1806 = vmatprep.subr.bf16.mxu0 %v1074
        %1807 = vmatpush1.bf16.msra.mxu0 %v1073
        %1808 = vmatprep.subr.bf16.mxu0 %v1078
        %1809 = vmatpush1.bf16.msra.mxu0 %v1077
        %1810 = vmatprep.subr.bf16.mxu0 %v1082
        %1811 = vmatpush1.bf16.msra.mxu0 %v1081
        %1812 = vmatprep.subr.bf16.mxu0 %v1086
        %1813 = vmatpush1.bf16.msra.mxu0 %v1085
        %1814 = vmatprep.subr.bf16.mxu0 %v1090
        %1815 = vmatpush1.bf16.msra.mxu0 %v1089
        %1816 = vmatprep.subr.bf16.mxu0 %v1094
        %1817 = vmatpush1.bf16.msra.mxu0 %v1093
        %1818 = vmatprep.subr.bf16.mxu0 %v1098
        %1819 = vmatpush1.bf16.msra.mxu0 %v1097
        %1820 = vmatprep.subr.bf16.mxu0 0
        %1821 = vmatpush1.bf16.msra.mxu0 0
        %1822 = vmatprep.subr.bf16.mxu0 0
        %1823 = vmatpush1.bf16.msra.mxu0 0
        %1824 = vmatprep.subr.bf16.mxu0 0
        %1825 = vmatpush1.bf16.msra.mxu0 0
        %1826 = vmatprep.subr.bf16.mxu0 0
        %1827 = vmatpush1.bf16.msra.mxu0 0
        %1828 = vmatprep.subr.bf16.mxu0 0
        %1829 = vmatpush1.bf16.msra.mxu0 0
        %1830 = vmatprep.subr.bf16.mxu0 0
        %1831 = vmatpush1.bf16.msra.mxu0 0
        %1832 = vmatprep.subr.bf16.mxu0 0
        %1833 = vmatpush1.bf16.msra.mxu0 0
        %1834 = vmatprep.subr.bf16.mxu0 0
        %1835 = vmatpush1.bf16.msra.mxu0 0
        %1836 = vmatprep.mubr.bf16.mxu0 0
        %1837 = vmatmul.mubr.bf16.gmra.mrb[0].mxu0 %v1796
        %v1838 = vpop.f32.mrb[0].mxu0
        %v1839 = vadd.f32 0.0, %v1838
        %v1840 = vpop.f32.mrb[0].mxu0
        %v1841 = vadd.f32 0.0, %v1840
        %v1842 = vpop.f32.mrb[0].mxu0
        %v1843 = vpop.f32.mrb[0].mxu0
        %1844 = vdwg.mxu0
        %1845 = vmatprep.subr.bf16.mxu0 %v1072
        %1846 = vmatpush1.bf16.msra.mxu0 %v1071
        %1847 = vmatprep.subr.bf16.mxu0 %v1076
        %1848 = vmatpush1.bf16.msra.mxu0 %v1075
        %1849 = vmatprep.subr.bf16.mxu0 %v1080
        %1850 = vmatpush1.bf16.msra.mxu0 %v1079
        %1851 = vmatprep.subr.bf16.mxu0 %v1084
        %1852 = vmatpush1.bf16.msra.mxu0 %v1083
        %1853 = vmatprep.subr.bf16.mxu0 %v1088
        %1854 = vmatpush1.bf16.msra.mxu0 %v1087
        %1855 = vmatprep.subr.bf16.mxu0 %v1092
        %1856 = vmatpush1.bf16.msra.mxu0 %v1091
        %1857 = vmatprep.subr.bf16.mxu0 %v1096
        %1858 = vmatpush1.bf16.msra.mxu0 %v1095
        %1859 = vmatprep.subr.bf16.mxu0 %v1100
        %1860 = vmatpush1.bf16.msra.mxu0 %v1099
        %1861 = vmatprep.subr.bf16.mxu0 0
        %1862 = vmatpush1.bf16.msra.mxu0 0
        %1863 = vmatprep.subr.bf16.mxu0 0
        %1864 = vmatpush1.bf16.msra.mxu0 0
        %1865 = vmatprep.subr.bf16.mxu0 0
        %1866 = vmatpush1.bf16.msra.mxu0 0
        %1867 = vmatprep.subr.bf16.mxu0 0
        %1868 = vmatpush1.bf16.msra.mxu0 0
        %1869 = vmatprep.subr.bf16.mxu0 0
        %1870 = vmatpush1.bf16.msra.mxu0 0
        %1871 = vmatprep.subr.bf16.mxu0 0
        %1872 = vmatpush1.bf16.msra.mxu0 0
        %1873 = vmatprep.subr.bf16.mxu0 0
        %1874 = vmatpush1.bf16.msra.mxu0 0
        %1875 = vmatprep.subr.bf16.mxu0 0
        %1876 = vmatpush1.bf16.msra.mxu0 0
        %1877 = vmatprep.mubr.bf16.mxu0 0
        %1878 = vmatmul.mubr.bf16.gmra.mrb[0].mxu0 %v1796
        %v1879 = vpop.f32.mrb[0].mxu0
        %v1880 = vadd.f32 0.0, %v1879
        %v1881 = vpop.f32.mrb[0].mxu0
        %v1882 = vadd.f32 0.0, %v1881
        %v1883 = vpop.f32.mrb[0].mxu0
        %v1884 = vpop.f32.mrb[0].mxu0
        %1885 = vdwg.mxu0
        %v1886 = vadd.f32 %v1800, %v1839
        %v1887 = vadd.f32 %v1801, %v1841
        %v1888 = vadd.f32 %v1802, %v1880
        %v1889 = vadd.f32 %v1803, %v1882
        %v1890 = vmul.f32 %v1886, 0.5
        %v1891 = vtanh.pop %v1890
        %v1892 = vmul.f32 %v1891, 0.5
        %v1893 = vadd.f32 %v1892, 0.5
        %v1894 = vmul.f32 %v1887, 0.5
        %v1895 = vtanh.pop %v1894
        %v1896 = vmul.f32 %v1895, 0.5
        %v1897 = vadd.f32 %v1896, 0.5
        %v1898 = vtanh.pop %v1888
        %v1899 = vmul.f32 %v1889, 0.5
        %v1900 = vtanh.pop %v1899
        %v1901 = vmul.f32 %v1900, 0.5
        %v1902 = vadd.f32 %v1901, 0.5
        %v1903 = vmul.f32 %v1897, %v1793
        %v1904 = vmul.f32 %v1893, %v1898
        %v1905 = vadd.f32 %v1903, %v1904
        %v1906 = vtanh.pop %v1905
        %v1907 = vmul.f32 %v1902, %v1906
        %v1908 = vpack.c.bf16 %v1907, %v1907
        %s1909 = scalar_lea.vmem [#allocation4], 24
        %1910 = vst [vmem:[%s1909] sm:$0xf] %v1908
        %s1911 = scalar_lea.vmem [#allocation5], 224
        %v1912 = vld [vmem:[%s1911] sm:$0xff]
        %v1913 = vld [vmem:[%s1911 + $0x8] sm:$0xff]
        %v1914 = vld [vmem:[%s1911 + $0x10] sm:$0xff]
        %v1915 = vld [vmem:[%s1911 + $0x18] sm:$0xff]
        %1916 = vmatprep.subr.bf16.mxu0 %v1070
        %1917 = vmatpush1.bf16.msra.mxu0 %v1069
        %1918 = vmatprep.subr.bf16.mxu0 %v1074
        %1919 = vmatpush1.bf16.msra.mxu0 %v1073
        %1920 = vmatprep.subr.bf16.mxu0 %v1078
        %1921 = vmatpush1.bf16.msra.mxu0 %v1077
        %1922 = vmatprep.subr.bf16.mxu0 %v1082
        %1923 = vmatpush1.bf16.msra.mxu0 %v1081
        %1924 = vmatprep.subr.bf16.mxu0 %v1086
        %1925 = vmatpush1.bf16.msra.mxu0 %v1085
        %1926 = vmatprep.subr.bf16.mxu0 %v1090
        %1927 = vmatpush1.bf16.msra.mxu0 %v1089
        %1928 = vmatprep.subr.bf16.mxu0 %v1094
        %1929 = vmatpush1.bf16.msra.mxu0 %v1093
        %1930 = vmatprep.subr.bf16.mxu0 %v1098
        %1931 = vmatpush1.bf16.msra.mxu0 %v1097
        %1932 = vmatprep.subr.bf16.mxu0 0
        %1933 = vmatpush1.bf16.msra.mxu0 0
        %1934 = vmatprep.subr.bf16.mxu0 0
        %1935 = vmatpush1.bf16.msra.mxu0 0
        %1936 = vmatprep.subr.bf16.mxu0 0
        %1937 = vmatpush1.bf16.msra.mxu0 0
        %1938 = vmatprep.subr.bf16.mxu0 0
        %1939 = vmatpush1.bf16.msra.mxu0 0
        %1940 = vmatprep.subr.bf16.mxu0 0
        %1941 = vmatpush1.bf16.msra.mxu0 0
        %1942 = vmatprep.subr.bf16.mxu0 0
        %1943 = vmatpush1.bf16.msra.mxu0 0
        %1944 = vmatprep.subr.bf16.mxu0 0
        %1945 = vmatpush1.bf16.msra.mxu0 0
        %1946 = vmatprep.subr.bf16.mxu0 0
        %1947 = vmatpush1.bf16.msra.mxu0 0
        %1948 = vmatprep.mubr.bf16.mxu0 0
        %1949 = vmatmul.mubr.bf16.gmra.mrb[0].mxu0 %v1908
        %v1950 = vpop.f32.mrb[0].mxu0
        %v1951 = vadd.f32 0.0, %v1950
        %v1952 = vpop.f32.mrb[0].mxu0
        %v1953 = vadd.f32 0.0, %v1952
        %v1954 = vpop.f32.mrb[0].mxu0
        %v1955 = vpop.f32.mrb[0].mxu0
        %1956 = vdwg.mxu0
        %1957 = vmatprep.subr.bf16.mxu0 %v1072
        %1958 = vmatpush1.bf16.msra.mxu0 %v1071
        %1959 = vmatprep.subr.bf16.mxu0 %v1076
        %1960 = vmatpush1.bf16.msra.mxu0 %v1075
        %1961 = vmatprep.subr.bf16.mxu0 %v1080
        %1962 = vmatpush1.bf16.msra.mxu0 %v1079
        %1963 = vmatprep.subr.bf16.mxu0 %v1084
        %1964 = vmatpush1.bf16.msra.mxu0 %v1083
        %1965 = vmatprep.subr.bf16.mxu0 %v1088
        %1966 = vmatpush1.bf16.msra.mxu0 %v1087
        %1967 = vmatprep.subr.bf16.mxu0 %v1092
        %1968 = vmatpush1.bf16.msra.mxu0 %v1091
        %1969 = vmatprep.subr.bf16.mxu0 %v1096
        %1970 = vmatpush1.bf16.msra.mxu0 %v1095
        %1971 = vmatprep.subr.bf16.mxu0 %v1100
        %1972 = vmatpush1.bf16.msra.mxu0 %v1099
        %1973 = vmatprep.subr.bf16.mxu0 0
        %1974 = vmatpush1.bf16.msra.mxu0 0
        %1975 = vmatprep.subr.bf16.mxu0 0
        %1976 = vmatpush1.bf16.msra.mxu0 0
        %1977 = vmatprep.subr.bf16.mxu0 0
        %1978 = vmatpush1.bf16.msra.mxu0 0
        %1979 = vmatprep.subr.bf16.mxu0 0
        %1980 = vmatpush1.bf16.msra.mxu0 0
        %1981 = vmatprep.subr.bf16.mxu0 0
        %1982 = vmatpush1.bf16.msra.mxu0 0
        %1983 = vmatprep.subr.bf16.mxu0 0
        %1984 = vmatpush1.bf16.msra.mxu0 0
        %1985 = vmatprep.subr.bf16.mxu0 0
        %1986 = vmatpush1.bf16.msra.mxu0 0
        %1987 = vmatprep.subr.bf16.mxu0 0
        %1988 = vmatpush1.bf16.msra.mxu0 0
        %1989 = vmatprep.mubr.bf16.mxu0 0
        %1990 = vmatmul.mubr.bf16.gmra.mrb[0].mxu0 %v1908
        %v1991 = vpop.f32.mrb[0].mxu0
        %v1992 = vadd.f32 0.0, %v1991
        %v1993 = vpop.f32.mrb[0].mxu0
        %v1994 = vadd.f32 0.0, %v1993
        %v1995 = vpop.f32.mrb[0].mxu0
        %v1996 = vpop.f32.mrb[0].mxu0
        %1997 = vdwg.mxu0
        %v1998 = vadd.f32 %v1912, %v1951
        %v1999 = vadd.f32 %v1913, %v1953
        %v2000 = vadd.f32 %v1914, %v1992
        %v2001 = vadd.f32 %v1915, %v1994
        %v2002 = vmul.f32 %v1998, 0.5
        %v2003 = vtanh.pop %v2002
        %v2004 = vmul.f32 %v2003, 0.5
        %v2005 = vadd.f32 %v2004, 0.5
        %v2006 = vmul.f32 %v1999, 0.5
        %v2007 = vtanh.pop %v2006
        %v2008 = vmul.f32 %v2007, 0.5
        %v2009 = vadd.f32 %v2008, 0.5
        %v2010 = vtanh.pop %v2000
        %v2011 = vmul.f32 %v2001, 0.5
        %v2012 = vtanh.pop %v2011
        %v2013 = vmul.f32 %v2012, 0.5
        %v2014 = vadd.f32 %v2013, 0.5
        %v2015 = vmul.f32 %v2009, %v1905
        %v2016 = vmul.f32 %v2005, %v2010
        %v2017 = vadd.f32 %v2015, %v2016
        %v2018 = vtanh.pop %v2017
        %v2019 = vmul.f32 %v2014, %v2018
        %v2020 = vpack.c.bf16 %v2019, %v2019
        %s2021 = scalar_lea.vmem [#allocation4], 28
        %2022 = vst [vmem:[%s2021] sm:$0xf] %v2020
        %2023 = vst [vmem:[#allocation2] sm:$0xff] %v2019
        %2024 = vst [vmem:[#allocation3] sm:$0xff] %v2017
        %v2025 = vld [vmem:[#allocation4] sm:$0xf]
        %v2026 = vld [vmem:[#allocation4 + $0x4] sm:$0xf]
        %v2027 = vld [vmem:[#allocation4 + $0x8] sm:$0xf]
        %v2028 = vld [vmem:[#allocation4 + $0xc] sm:$0xf]
        %v2029 = vld [vmem:[#allocation4 + $0x10] sm:$0xf]
        %v2030 = vld [vmem:[#allocation4 + $0x14] sm:$0xf]
        %v2031 = vld [vmem:[#allocation4 + $0x18] sm:$0xf]
        %v2032 = vld [vmem:[#allocation4 + $0x1c] sm:$0xf]
        %v2033 = vld [vmem:[#allocation12] sm:$0xff]
        %v2034 = vld [vmem:[#allocation12 + $0x8] sm:$0xff]
        %v2035 = vld [vmem:[#allocation12 + $0x10] sm:$0xff]
        %v2036 = vld [vmem:[#allocation12 + $0x18] sm:$0xff]
        %v2037 = vld [vmem:[#allocation12 + $0x20] sm:$0xff]
        %v2038 = vld [vmem:[#allocation12 + $0x28] sm:$0xff]
        %v2039 = vld [vmem:[#allocation12 + $0x30] sm:$0xff]
        %v2040 = vld [vmem:[#allocation12 + $0x38] sm:$0xff]
        %v2041 = vld [vmem:[#allocation12 + $0x40] sm:$0xff]
        %v2042 = vld [vmem:[#allocation12 + $0x48] sm:$0xff]
        %v2043 = vld [vmem:[#allocation12 + $0x50] sm:$0xff]
        %v2044 = vld [vmem:[#allocation12 + $0x58] sm:$0xff]
        %v2045 = vld [vmem:[#allocation12 + $0x60] sm:$0xff]
        %v2046 = vld [vmem:[#allocation12 + $0x68] sm:$0xff]
        %v2047 = vld [vmem:[#allocation12 + $0x70] sm:$0xff]
        %v2048 = vld [vmem:[#allocation12 + $0x78] sm:$0xff]
        %v2049 = vld [vmem:[#allocation12 + $0x80] sm:$0xff]
        %v2050 = vld [vmem:[#allocation12 + $0x88] sm:$0xff]
        %v2051 = vld [vmem:[#allocation12 + $0x90] sm:$0xff]
        %v2052 = vld [vmem:[#allocation12 + $0x98] sm:$0xff]
        %v2053 = vld [vmem:[#allocation12 + $0xa0] sm:$0xff]
        %v2054 = vld [vmem:[#allocation12 + $0xa8] sm:$0xff]
        %v2055 = vld [vmem:[#allocation12 + $0xb0] sm:$0xff]
        %v2056 = vld [vmem:[#allocation12 + $0xb8] sm:$0xff]
        %v2057 = vld [vmem:[#allocation12 + $0xc0] sm:$0xff]
        %v2058 = vld [vmem:[#allocation12 + $0xc8] sm:$0xff]
        %v2059 = vld [vmem:[#allocation12 + $0xd0] sm:$0xff]
        %v2060 = vld [vmem:[#allocation12 + $0xd8] sm:$0xff]
        %v2061 = vld [vmem:[#allocation12 + $0xe0] sm:$0xff]
        %v2062 = vld [vmem:[#allocation12 + $0xe8] sm:$0xff]
        %v2063 = vld [vmem:[#allocation12 + $0xf0] sm:$0xff]
        %v2064 = vld [vmem:[#allocation12 + $0xf8] sm:$0xff]
        %v2065 = vld [vmem:[%s6] sm:$0xf]
        %v2067 = vlaneseq
        %v2068 = vshrl.u32 %v2067, 7
        %v2069 = vsub.s32 0, %v2068
        %v2070 = vrot.slane %v2065, %v2069
        %v2071 = vlaneseq
        %v2072 = vshrl.u32 %v2071, 7
        %v2073 = vsub.s32 1, %v2072
        %v2074 = vrot.slane %v2065, %v2073
        %v2075 = vlaneseq
        %v2076 = vshrl.u32 %v2075, 7
        %v2077 = vsub.s32 2, %v2076
        %v2078 = vrot.slane %v2065, %v2077
        %v2079 = vlaneseq
        %v2080 = vshrl.u32 %v2079, 7
        %v2081 = vsub.s32 3, %v2080
        %v2082 = vrot.slane %v2065, %v2081
        %v2095 = vunpack.c.l.b16 %v2025
        %v2096 = vunpack.c.l.b16 %v2026
        %v2097 = vunpack.c.l.b16 %v2027
        %v2098 = vunpack.c.l.b16 %v2028
        %v2099 = vunpack.c.l.b16 %v2029
        %v2100 = vunpack.c.l.b16 %v2030
        %v2101 = vunpack.c.l.b16 %v2031
        %v2102 = vunpack.c.l.b16 %v2032
        %v2103 = vpack.c.b16 %v2096, %v2095
        %v2104 = vpack.c.b16 %v2098, %v2097
        %v2105 = vpack.c.b16 %v2100, %v2099
        %v2106 = vpack.c.b16 %v2102, %v2101
        %v2143 = vunpack.c.l.b16 %v2033
        %v2144 = vunpack.c.h.b16 %v2033
        %v2145 = vunpack.c.l.b16 %v2034
        %v2146 = vunpack.c.h.b16 %v2034
        %v2147 = vunpack.c.l.b16 %v2035
        %v2148 = vunpack.c.h.b16 %v2035
        %v2149 = vunpack.c.l.b16 %v2036
        %v2150 = vunpack.c.h.b16 %v2036
        %v2151 = vunpack.c.l.b16 %v2037
        %v2152 = vunpack.c.h.b16 %v2037
        %v2153 = vunpack.c.l.b16 %v2038
        %v2154 = vunpack.c.h.b16 %v2038
        %v2155 = vunpack.c.l.b16 %v2039
        %v2156 = vunpack.c.h.b16 %v2039
        %v2157 = vunpack.c.l.b16 %v2040
        %v2158 = vunpack.c.h.b16 %v2040
        %v2159 = vunpack.c.l.b16 %v2041
        %v2160 = vunpack.c.h.b16 %v2041
        %v2161 = vunpack.c.l.b16 %v2042
        %v2162 = vunpack.c.h.b16 %v2042
        %v2163 = vunpack.c.l.b16 %v2043
        %v2164 = vunpack.c.h.b16 %v2043
        %v2165 = vunpack.c.l.b16 %v2044
        %v2166 = vunpack.c.h.b16 %v2044
        %v2167 = vunpack.c.l.b16 %v2045
        %v2168 = vunpack.c.h.b16 %v2045
        %v2169 = vunpack.c.l.b16 %v2046
        %v2170 = vunpack.c.h.b16 %v2046
        %v2171 = vunpack.c.l.b16 %v2047
        %v2172 = vunpack.c.h.b16 %v2047
        %v2173 = vunpack.c.l.b16 %v2048
        %v2174 = vunpack.c.h.b16 %v2048
        %v2175 = vunpack.c.l.b16 %v2049
        %v2176 = vunpack.c.h.b16 %v2049
        %v2177 = vunpack.c.l.b16 %v2050
        %v2178 = vunpack.c.h.b16 %v2050
        %v2179 = vunpack.c.l.b16 %v2051
        %v2180 = vunpack.c.h.b16 %v2051
        %v2181 = vunpack.c.l.b16 %v2052
        %v2182 = vunpack.c.h.b16 %v2052
        %v2183 = vunpack.c.l.b16 %v2053
        %v2184 = vunpack.c.h.b16 %v2053
        %v2185 = vunpack.c.l.b16 %v2054
        %v2186 = vunpack.c.h.b16 %v2054
        %v2187 = vunpack.c.l.b16 %v2055
        %v2188 = vunpack.c.h.b16 %v2055
        %v2189 = vunpack.c.l.b16 %v2056
        %v2190 = vunpack.c.h.b16 %v2056
        %v2191 = vunpack.c.l.b16 %v2057
        %v2192 = vunpack.c.h.b16 %v2057
        %v2193 = vunpack.c.l.b16 %v2058
        %v2194 = vunpack.c.h.b16 %v2058
        %v2195 = vunpack.c.l.b16 %v2059
        %v2196 = vunpack.c.h.b16 %v2059
        %v2197 = vunpack.c.l.b16 %v2060
        %v2198 = vunpack.c.h.b16 %v2060
        %v2199 = vunpack.c.l.b16 %v2061
        %v2200 = vunpack.c.h.b16 %v2061
        %v2201 = vunpack.c.l.b16 %v2062
        %v2202 = vunpack.c.h.b16 %v2062
        %v2203 = vunpack.c.l.b16 %v2063
        %v2204 = vunpack.c.h.b16 %v2063
        %v2205 = vunpack.c.l.b16 %v2064
        %v2206 = vunpack.c.h.b16 %v2064
        %v2207 = vpack.c.b16 %v2147, %v2143
        %v2208 = vpack.c.b16 %v2148, %v2144
        %v2209 = vpack.c.b16 %v2149, %v2145
        %v2210 = vpack.c.b16 %v2150, %v2146
        %v2211 = vpack.c.b16 %v2155, %v2151
        %v2212 = vpack.c.b16 %v2156, %v2152
        %v2213 = vpack.c.b16 %v2157, %v2153
        %v2214 = vpack.c.b16 %v2158, %v2154
        %v2215 = vpack.c.b16 %v2163, %v2159
        %v2216 = vpack.c.b16 %v2164, %v2160
        %v2217 = vpack.c.b16 %v2165, %v2161
        %v2218 = vpack.c.b16 %v2166, %v2162
        %v2219 = vpack.c.b16 %v2171, %v2167
        %v2220 = vpack.c.b16 %v2172, %v2168
        %v2221 = vpack.c.b16 %v2173, %v2169
        %v2222 = vpack.c.b16 %v2174, %v2170
        %v2223 = vpack.c.b16 %v2179, %v2175
        %v2224 = vpack.c.b16 %v2180, %v2176
        %v2225 = vpack.c.b16 %v2181, %v2177
        %v2226 = vpack.c.b16 %v2182, %v2178
        %v2227 = vpack.c.b16 %v2187, %v2183
        %v2228 = vpack.c.b16 %v2188, %v2184
        %v2229 = vpack.c.b16 %v2189, %v2185
        %v2230 = vpack.c.b16 %v2190, %v2186
        %v2231 = vpack.c.b16 %v2195, %v2191
        %v2232 = vpack.c.b16 %v2196, %v2192
        %v2233 = vpack.c.b16 %v2197, %v2193
        %v2234 = vpack.c.b16 %v2198, %v2194
        %v2235 = vpack.c.b16 %v2203, %v2199
        %v2236 = vpack.c.b16 %v2204, %v2200
        %v2237 = vpack.c.b16 %v2205, %v2201
        %v2238 = vpack.c.b16 %v2206, %v2202
        %2271 = vmatprep.subr.bf16.mxu0 %v2208
        %2272 = vmatpush1.bf16.msra.mxu0 %v2207
        %2273 = vmatprep.subr.bf16.mxu0 %v2212
        %2274 = vmatpush1.bf16.msra.mxu0 %v2211
        %2275 = vmatprep.subr.bf16.mxu0 %v2216
        %2276 = vmatpush1.bf16.msra.mxu0 %v2215
        %2277 = vmatprep.subr.bf16.mxu0 %v2220
        %2278 = vmatpush1.bf16.msra.mxu0 %v2219
        %2279 = vmatprep.subr.bf16.mxu0 %v2224
        %2280 = vmatpush1.bf16.msra.mxu0 %v2223
        %2281 = vmatprep.subr.bf16.mxu0 %v2228
        %2282 = vmatpush1.bf16.msra.mxu0 %v2227
        %2283 = vmatprep.subr.bf16.mxu0 %v2232
        %2284 = vmatpush1.bf16.msra.mxu0 %v2231
        %2285 = vmatprep.subr.bf16.mxu0 %v2236
        %2286 = vmatpush1.bf16.msra.mxu0 %v2235
        %2287 = vmatprep.subr.bf16.mxu0 0
        %2288 = vmatpush1.bf16.msra.mxu0 0
        %2289 = vmatprep.subr.bf16.mxu0 0
        %2290 = vmatpush1.bf16.msra.mxu0 0
        %2291 = vmatprep.subr.bf16.mxu0 0
        %2292 = vmatpush1.bf16.msra.mxu0 0
        %2293 = vmatprep.subr.bf16.mxu0 0
        %2294 = vmatpush1.bf16.msra.mxu0 0
        %2295 = vmatprep.subr.bf16.mxu0 0
        %2296 = vmatpush1.bf16.msra.mxu0 0
        %2297 = vmatprep.subr.bf16.mxu0 0
        %2298 = vmatpush1.bf16.msra.mxu0 0
        %2299 = vmatprep.subr.bf16.mxu0 0
        %2300 = vmatpush1.bf16.msra.mxu0 0
        %2301 = vmatprep.subr.bf16.mxu0 0
        %2302 = vmatpush1.bf16.msra.mxu0 0
        %2303 = vmatprep.mubr.bf16.mxu0 0
        %2304 = vmatmul.mubr.bf16.gmra.mrb[0].mxu0 %v2103
        %v2305 = vpop.f32.mrb[0].mxu0
        %v2306 = vadd.f32 %v2070, %v2305
        %v2307 = vpop.f32.mrb[0].mxu0
        %v2308 = vadd.f32 %v2074, %v2307
        %v2309 = vpop.f32.mrb[0].mxu0
        %v2310 = vadd.f32 %v2070, %v2309
        %v2311 = vpop.f32.mrb[0].mxu0
        %v2312 = vadd.f32 %v2074, %v2311
        %2313 = vmatprep.mubr.bf16.mxu0 0
        %2314 = vmatmul.mubr.bf16.gmra.mrb[0].mxu0 %v2104
        %v2315 = vpop.f32.mrb[0].mxu0
        %v2316 = vadd.f32 %v2070, %v2315
        %v2317 = vpop.f32.mrb[0].mxu0
        %v2318 = vadd.f32 %v2074, %v2317
        %v2319 = vpop.f32.mrb[0].mxu0
        %v2320 = vadd.f32 %v2070, %v2319
        %v2321 = vpop.f32.mrb[0].mxu0
        %v2322 = vadd.f32 %v2074, %v2321
        %2323 = vmatprep.mubr.bf16.mxu0 0
        %2324 = vmatmul.mubr.bf16.gmra.mrb[0].mxu0 %v2105
        %v2325 = vpop.f32.mrb[0].mxu0
        %v2326 = vadd.f32 %v2070, %v2325
        %v2327 = vpop.f32.mrb[0].mxu0
        %v2328 = vadd.f32 %v2074, %v2327
        %v2329 = vpop.f32.mrb[0].mxu0
        %v2330 = vadd.f32 %v2070, %v2329
        %v2331 = vpop.f32.mrb[0].mxu0
        %v2332 = vadd.f32 %v2074, %v2331
        %2333 = vmatprep.mubr.bf16.mxu0 0
        %2334 = vmatmul.mubr.bf16.gmra.mrb[0].mxu0 %v2106
        %v2335 = vpop.f32.mrb[0].mxu0
        %v2336 = vadd.f32 %v2070, %v2335
        %v2337 = vpop.f32.mrb[0].mxu0
        %v2338 = vadd.f32 %v2074, %v2337
        %v2339 = vpop.f32.mrb[0].mxu0
        %v2340 = vadd.f32 %v2070, %v2339
        %v2341 = vpop.f32.mrb[0].mxu0
        %v2342 = vadd.f32 %v2074, %v2341
        %2343 = vdwg.mxu0
        %2344 = vmatprep.subr.bf16.mxu0 %v2210
        %2345 = vmatpush1.bf16.msra.mxu0 %v2209
        %2346 = vmatprep.subr.bf16.mxu0 %v2214
        %2347 = vmatpush1.bf16.msra.mxu0 %v2213
        %2348 = vmatprep.subr.bf16.mxu0 %v2218
        %2349 = vmatpush1.bf16.msra.mxu0 %v2217
        %2350 = vmatprep.subr.bf16.mxu0 %v2222
        %2351 = vmatpush1.bf16.msra.mxu0 %v2221
        %2352 = vmatprep.subr.bf16.mxu0 %v2226
        %2353 = vmatpush1.bf16.msra.mxu0 %v2225
        %2354 = vmatprep.subr.bf16.mxu0 %v2230
        %2355 = vmatpush1.bf16.msra.mxu0 %v2229
        %2356 = vmatprep.subr.bf16.mxu0 %v2234
        %2357 = vmatpush1.bf16.msra.mxu0 %v2233
        %2358 = vmatprep.subr.bf16.mxu0 %v2238
        %2359 = vmatpush1.bf16.msra.mxu0 %v2237
        %2360 = vmatprep.subr.bf16.mxu0 0
        %2361 = vmatpush1.bf16.msra.mxu0 0
        %2362 = vmatprep.subr.bf16.mxu0 0
        %2363 = vmatpush1.bf16.msra.mxu0 0
        %2364 = vmatprep.subr.bf16.mxu0 0
        %2365 = vmatpush1.bf16.msra.mxu0 0
        %2366 = vmatprep.subr.bf16.mxu0 0
        %2367 = vmatpush1.bf16.msra.mxu0 0
        %2368 = vmatprep.subr.bf16.mxu0 0
        %2369 = vmatpush1.bf16.msra.mxu0 0
        %2370 = vmatprep.subr.bf16.mxu0 0
        %2371 = vmatpush1.bf16.msra.mxu0 0
        %2372 = vmatprep.subr.bf16.mxu0 0
        %2373 = vmatpush1.bf16.msra.mxu0 0
        %2374 = vmatprep.subr.bf16.mxu0 0
        %2375 = vmatpush1.bf16.msra.mxu0 0
        %2376 = vmatprep.mubr.bf16.mxu0 0
        %2377 = vmatmul.mubr.bf16.gmra.mrb[0].mxu0 %v2103
        %v2378 = vpop.f32.mrb[0].mxu0
        %v2379 = vadd.f32 %v2078, %v2378
        %v2380 = vpop.f32.mrb[0].mxu0
        %v2381 = vadd.f32 %v2082, %v2380
        %v2382 = vpop.f32.mrb[0].mxu0
        %v2383 = vadd.f32 %v2078, %v2382
        %v2384 = vpop.f32.mrb[0].mxu0
        %v2385 = vadd.f32 %v2082, %v2384
        %2386 = vmatprep.mubr.bf16.mxu0 0
        %2387 = vmatmul.mubr.bf16.gmra.mrb[0].mxu0 %v2104
        %v2388 = vpop.f32.mrb[0].mxu0
        %v2389 = vadd.f32 %v2078, %v2388
        %v2390 = vpop.f32.mrb[0].mxu0
        %v2391 = vadd.f32 %v2082, %v2390
        %v2392 = vpop.f32.mrb[0].mxu0
        %v2393 = vadd.f32 %v2078, %v2392
        %v2394 = vpop.f32.mrb[0].mxu0
        %v2395 = vadd.f32 %v2082, %v2394
        %2396 = vmatprep.mubr.bf16.mxu0 0
        %2397 = vmatmul.mubr.bf16.gmra.mrb[0].mxu0 %v2105
        %v2398 = vpop.f32.mrb[0].mxu0
        %v2399 = vadd.f32 %v2078, %v2398
        %v2400 = vpop.f32.mrb[0].mxu0
        %v2401 = vadd.f32 %v2082, %v2400
        %v2402 = vpop.f32.mrb[0].mxu0
        %v2403 = vadd.f32 %v2078, %v2402
        %v2404 = vpop.f32.mrb[0].mxu0
        %v2405 = vadd.f32 %v2082, %v2404
        %2406 = vmatprep.mubr.bf16.mxu0 0
        %2407 = vmatmul.mubr.bf16.gmra.mrb[0].mxu0 %v2106
        %v2408 = vpop.f32.mrb[0].mxu0
        %v2409 = vadd.f32 %v2078, %v2408
        %v2410 = vpop.f32.mrb[0].mxu0
        %v2411 = vadd.f32 %v2082, %v2410
        %v2412 = vpop.f32.mrb[0].mxu0
        %v2413 = vadd.f32 %v2078, %v2412
        %v2414 = vpop.f32.mrb[0].mxu0
        %v2415 = vadd.f32 %v2082, %v2414
        %2416 = vdwg.mxu0
        %2417 = vst [vmem:[#allocation5] sm:$0xff] %v2306
        %2418 = vst [vmem:[#allocation5 + $0x8] sm:$0xff] %v2308
        %2419 = vst [vmem:[#allocation5 + $0x10] sm:$0xff] %v2379
        %2420 = vst [vmem:[#allocation5 + $0x18] sm:$0xff] %v2381
        %2421 = vst [vmem:[#allocation5 + $0x20] sm:$0xff] %v2310
        %2422 = vst [vmem:[#allocation5 + $0x28] sm:$0xff] %v2312
        %2423 = vst [vmem:[#allocation5 + $0x30] sm:$0xff] %v2383
        %2424 = vst [vmem:[#allocation5 + $0x38] sm:$0xff] %v2385
        %2425 = vst [vmem:[#allocation5 + $0x40] sm:$0xff] %v2316
        %2426 = vst [vmem:[#allocation5 + $0x48] sm:$0xff] %v2318
        %2427 = vst [vmem:[#allocation5 + $0x50] sm:$0xff] %v2389
        %2428 = vst [vmem:[#allocation5 + $0x58] sm:$0xff] %v2391
        %2429 = vst [vmem:[#allocation5 + $0x60] sm:$0xff] %v2320
        %2430 = vst [vmem:[#allocation5 + $0x68] sm:$0xff] %v2322
        %2431 = vst [vmem:[#allocation5 + $0x70] sm:$0xff] %v2393
        %2432 = vst [vmem:[#allocation5 + $0x78] sm:$0xff] %v2395
        %2433 = vst [vmem:[#allocation5 + $0x80] sm:$0xff] %v2326
        %2434 = vst [vmem:[#allocation5 + $0x88] sm:$0xff] %v2328
        %2435 = vst [vmem:[#allocation5 + $0x90] sm:$0xff] %v2399
        %2436 = vst [vmem:[#allocation5 + $0x98] sm:$0xff] %v2401
        %2437 = vst [vmem:[#allocation5 + $0xa0] sm:$0xff] %v2330
        %2438 = vst [vmem:[#allocation5 + $0xa8] sm:$0xff] %v2332
        %2439 = vst [vmem:[#allocation5 + $0xb0] sm:$0xff] %v2403
        %2440 = vst [vmem:[#allocation5 + $0xb8] sm:$0xff] %v2405
        %2441 = vst [vmem:[#allocation5 + $0xc0] sm:$0xff] %v2336
        %2442 = vst [vmem:[#allocation5 + $0xc8] sm:$0xff] %v2338
        %2443 = vst [vmem:[#allocation5 + $0xd0] sm:$0xff] %v2409
        %2444 = vst [vmem:[#allocation5 + $0xd8] sm:$0xff] %v2411
        %2445 = vst [vmem:[#allocation5 + $0xe0] sm:$0xff] %v2340
        %2446 = vst [vmem:[#allocation5 + $0xe8] sm:$0xff] %v2342
        %2447 = vst [vmem:[#allocation5 + $0xf0] sm:$0xff] %v2413
        %2448 = vst [vmem:[#allocation5 + $0xf8] sm:$0xff] %v2415
        %v2449 = vld [vmem:[#allocation14] sm:$0xff]
        %v2450 = vld [vmem:[#allocation14 + $0x8] sm:$0xff]
        %v2451 = vld [vmem:[#allocation14 + $0x10] sm:$0xff]
        %v2452 = vld [vmem:[#allocation14 + $0x18] sm:$0xff]
        %v2453 = vld [vmem:[#allocation14 + $0x20] sm:$0xff]
        %v2454 = vld [vmem:[#allocation14 + $0x28] sm:$0xff]
        %v2455 = vld [vmem:[#allocation14 + $0x30] sm:$0xff]
        %v2456 = vld [vmem:[#allocation14 + $0x38] sm:$0xff]
        %v2457 = vld [vmem:[#allocation14 + $0x40] sm:$0xff]
        %v2458 = vld [vmem:[#allocation14 + $0x48] sm:$0xff]
        %v2459 = vld [vmem:[#allocation14 + $0x50] sm:$0xff]
        %v2460 = vld [vmem:[#allocation14 + $0x58] sm:$0xff]
        %v2461 = vld [vmem:[#allocation14 + $0x60] sm:$0xff]
        %v2462 = vld [vmem:[#allocation14 + $0x68] sm:$0xff]
        %v2463 = vld [vmem:[#allocation14 + $0x70] sm:$0xff]
        %v2464 = vld [vmem:[#allocation14 + $0x78] sm:$0xff]
        %v2465 = vld [vmem:[#allocation14 + $0x80] sm:$0xff]
        %v2466 = vld [vmem:[#allocation14 + $0x88] sm:$0xff]
        %v2467 = vld [vmem:[#allocation14 + $0x90] sm:$0xff]
        %v2468 = vld [vmem:[#allocation14 + $0x98] sm:$0xff]
        %v2469 = vld [vmem:[#allocation14 + $0xa0] sm:$0xff]
        %v2470 = vld [vmem:[#allocation14 + $0xa8] sm:$0xff]
        %v2471 = vld [vmem:[#allocation14 + $0xb0] sm:$0xff]
        %v2472 = vld [vmem:[#allocation14 + $0xb8] sm:$0xff]
        %v2473 = vld [vmem:[#allocation14 + $0xc0] sm:$0xff]
        %v2474 = vld [vmem:[#allocation14 + $0xc8] sm:$0xff]
        %v2475 = vld [vmem:[#allocation14 + $0xd0] sm:$0xff]
        %v2476 = vld [vmem:[#allocation14 + $0xd8] sm:$0xff]
        %v2477 = vld [vmem:[#allocation14 + $0xe0] sm:$0xff]
        %v2478 = vld [vmem:[#allocation14 + $0xe8] sm:$0xff]
        %v2479 = vld [vmem:[#allocation14 + $0xf0] sm:$0xff]
        %v2480 = vld [vmem:[#allocation14 + $0xf8] sm:$0xff]
        %s2481 = scalar_lea.vmem [#allocation2], 8
        %v2482 = vld [vmem:[%s2481] sm:$0xff]
        %s2483 = scalar_lea.vmem [#allocation3], 8
        %v2484 = vld [vmem:[%s2483] sm:$0xff]
        %v2485 = vld [vmem:[#allocation5] sm:$0xff]
        %v2486 = vld [vmem:[#allocation5 + $0x8] sm:$0xff]
        %v2487 = vld [vmem:[#allocation5 + $0x10] sm:$0xff]
        %v2488 = vld [vmem:[#allocation5 + $0x18] sm:$0xff]
        %v2489 = vpack.c.bf16 %v2482, %v2482
        %v2522 = vunpack.c.l.b16 %v2449
        %v2523 = vunpack.c.h.b16 %v2449
        %v2524 = vunpack.c.l.b16 %v2450
        %v2525 = vunpack.c.h.b16 %v2450
        %v2526 = vunpack.c.l.b16 %v2451
        %v2527 = vunpack.c.h.b16 %v2451
        %v2528 = vunpack.c.l.b16 %v2452
        %v2529 = vunpack.c.h.b16 %v2452
        %v2530 = vunpack.c.l.b16 %v2453
        %v2531 = vunpack.c.h.b16 %v2453
        %v2532 = vunpack.c.l.b16 %v2454
        %v2533 = vunpack.c.h.b16 %v2454
        %v2534 = vunpack.c.l.b16 %v2455
        %v2535 = vunpack.c.h.b16 %v2455
        %v2536 = vunpack.c.l.b16 %v2456
        %v2537 = vunpack.c.h.b16 %v2456
        %v2538 = vunpack.c.l.b16 %v2457
        %v2539 = vunpack.c.h.b16 %v2457
        %v2540 = vunpack.c.l.b16 %v2458
        %v2541 = vunpack.c.h.b16 %v2458
        %v2542 = vunpack.c.l.b16 %v2459
        %v2543 = vunpack.c.h.b16 %v2459
        %v2544 = vunpack.c.l.b16 %v2460
        %v2545 = vunpack.c.h.b16 %v2460
        %v2546 = vunpack.c.l.b16 %v2461
        %v2547 = vunpack.c.h.b16 %v2461
        %v2548 = vunpack.c.l.b16 %v2462
        %v2549 = vunpack.c.h.b16 %v2462
        %v2550 = vunpack.c.l.b16 %v2463
        %v2551 = vunpack.c.h.b16 %v2463
        %v2552 = vunpack.c.l.b16 %v2464
        %v2553 = vunpack.c.h.b16 %v2464
        %v2554 = vunpack.c.l.b16 %v2465
        %v2555 = vunpack.c.h.b16 %v2465
        %v2556 = vunpack.c.l.b16 %v2466
        %v2557 = vunpack.c.h.b16 %v2466
        %v2558 = vunpack.c.l.b16 %v2467
        %v2559 = vunpack.c.h.b16 %v2467
        %v2560 = vunpack.c.l.b16 %v2468
        %v2561 = vunpack.c.h.b16 %v2468
        %v2562 = vunpack.c.l.b16 %v2469
        %v2563 = vunpack.c.h.b16 %v2469
        %v2564 = vunpack.c.l.b16 %v2470
        %v2565 = vunpack.c.h.b16 %v2470
        %v2566 = vunpack.c.l.b16 %v2471
        %v2567 = vunpack.c.h.b16 %v2471
        %v2568 = vunpack.c.l.b16 %v2472
        %v2569 = vunpack.c.h.b16 %v2472
        %v2570 = vunpack.c.l.b16 %v2473
        %v2571 = vunpack.c.h.b16 %v2473
        %v2572 = vunpack.c.l.b16 %v2474
        %v2573 = vunpack.c.h.b16 %v2474
        %v2574 = vunpack.c.l.b16 %v2475
        %v2575 = vunpack.c.h.b16 %v2475
        %v2576 = vunpack.c.l.b16 %v2476
        %v2577 = vunpack.c.h.b16 %v2476
        %v2578 = vunpack.c.l.b16 %v2477
        %v2579 = vunpack.c.h.b16 %v2477
        %v2580 = vunpack.c.l.b16 %v2478
        %v2581 = vunpack.c.h.b16 %v2478
        %v2582 = vunpack.c.l.b16 %v2479
        %v2583 = vunpack.c.h.b16 %v2479
        %v2584 = vunpack.c.l.b16 %v2480
        %v2585 = vunpack.c.h.b16 %v2480
        %v2586 = vpack.c.b16 %v2526, %v2522
        %v2587 = vpack.c.b16 %v2527, %v2523
        %v2588 = vpack.c.b16 %v2528, %v2524
        %v2589 = vpack.c.b16 %v2529, %v2525
        %v2590 = vpack.c.b16 %v2534, %v2530
        %v2591 = vpack.c.b16 %v2535, %v2531
        %v2592 = vpack.c.b16 %v2536, %v2532
        %v2593 = vpack.c.b16 %v2537, %v2533
        %v2594 = vpack.c.b16 %v2542, %v2538
        %v2595 = vpack.c.b16 %v2543, %v2539
        %v2596 = vpack.c.b16 %v2544, %v2540
        %v2597 = vpack.c.b16 %v2545, %v2541
        %v2598 = vpack.c.b16 %v2550, %v2546
        %v2599 = vpack.c.b16 %v2551, %v2547
        %v2600 = vpack.c.b16 %v2552, %v2548
        %v2601 = vpack.c.b16 %v2553, %v2549
        %v2602 = vpack.c.b16 %v2558, %v2554
        %v2603 = vpack.c.b16 %v2559, %v2555
        %v2604 = vpack.c.b16 %v2560, %v2556
        %v2605 = vpack.c.b16 %v2561, %v2557
        %v2606 = vpack.c.b16 %v2566, %v2562
        %v2607 = vpack.c.b16 %v2567, %v2563
        %v2608 = vpack.c.b16 %v2568, %v2564
        %v2609 = vpack.c.b16 %v2569, %v2565
        %v2610 = vpack.c.b16 %v2574, %v2570
        %v2611 = vpack.c.b16 %v2575, %v2571
        %v2612 = vpack.c.b16 %v2576, %v2572
        %v2613 = vpack.c.b16 %v2577, %v2573
        %v2614 = vpack.c.b16 %v2582, %v2578
        %v2615 = vpack.c.b16 %v2583, %v2579
        %v2616 = vpack.c.b16 %v2584, %v2580
        %v2617 = vpack.c.b16 %v2585, %v2581
        %2650 = vmatprep.subr.bf16.mxu0 %v2587
        %2651 = vmatpush1.bf16.msra.mxu0 %v2586
        %2652 = vmatprep.subr.bf16.mxu0 %v2591
        %2653 = vmatpush1.bf16.msra.mxu0 %v2590
        %2654 = vmatprep.subr.bf16.mxu0 %v2595
        %2655 = vmatpush1.bf16.msra.mxu0 %v2594
        %2656 = vmatprep.subr.bf16.mxu0 %v2599
        %2657 = vmatpush1.bf16.msra.mxu0 %v2598
        %2658 = vmatprep.subr.bf16.mxu0 %v2603
        %2659 = vmatpush1.bf16.msra.mxu0 %v2602
        %2660 = vmatprep.subr.bf16.mxu0 %v2607
        %2661 = vmatpush1.bf16.msra.mxu0 %v2606
        %2662 = vmatprep.subr.bf16.mxu0 %v2611
        %2663 = vmatpush1.bf16.msra.mxu0 %v2610
        %2664 = vmatprep.subr.bf16.mxu0 %v2615
        %2665 = vmatpush1.bf16.msra.mxu0 %v2614
        %2666 = vmatprep.subr.bf16.mxu0 0
        %2667 = vmatpush1.bf16.msra.mxu0 0
        %2668 = vmatprep.subr.bf16.mxu0 0
        %2669 = vmatpush1.bf16.msra.mxu0 0
        %2670 = vmatprep.subr.bf16.mxu0 0
        %2671 = vmatpush1.bf16.msra.mxu0 0
        %2672 = vmatprep.subr.bf16.mxu0 0
        %2673 = vmatpush1.bf16.msra.mxu0 0
        %2674 = vmatprep.subr.bf16.mxu0 0
        %2675 = vmatpush1.bf16.msra.mxu0 0
        %2676 = vmatprep.subr.bf16.mxu0 0
        %2677 = vmatpush1.bf16.msra.mxu0 0
        %2678 = vmatprep.subr.bf16.mxu0 0
        %2679 = vmatpush1.bf16.msra.mxu0 0
        %2680 = vmatprep.subr.bf16.mxu0 0
        %2681 = vmatpush1.bf16.msra.mxu0 0
        %2682 = vmatprep.mubr.bf16.mxu0 0
        %2683 = vmatmul.mubr.bf16.gmra.mrb[0].mxu0 %v2489
        %v2684 = vpop.f32.mrb[0].mxu0
        %v2685 = vadd.f32 0.0, %v2684
        %v2686 = vpop.f32.mrb[0].mxu0
        %v2687 = vadd.f32 0.0, %v2686
        %v2688 = vpop.f32.mrb[0].mxu0
        %v2689 = vpop.f32.mrb[0].mxu0
        %2690 = vdwg.mxu0
        %2691 = vmatprep.subr.bf16.mxu0 %v2589
        %2692 = vmatpush1.bf16.msra.mxu0 %v2588
        %2693 = vmatprep.subr.bf16.mxu0 %v2593
        %2694 = vmatpush1.bf16.msra.mxu0 %v2592
        %2695 = vmatprep.subr.bf16.mxu0 %v2597
        %2696 = vmatpush1.bf16.msra.mxu0 %v2596
        %2697 = vmatprep.subr.bf16.mxu0 %v2601
        %2698 = vmatpush1.bf16.msra.mxu0 %v2600
        %2699 = vmatprep.subr.bf16.mxu0 %v2605
        %2700 = vmatpush1.bf16.msra.mxu0 %v2604
        %2701 = vmatprep.subr.bf16.mxu0 %v2609
        %2702 = vmatpush1.bf16.msra.mxu0 %v2608
        %2703 = vmatprep.subr.bf16.mxu0 %v2613
        %2704 = vmatpush1.bf16.msra.mxu0 %v2612
        %2705 = vmatprep.subr.bf16.mxu0 %v2617
        %2706 = vmatpush1.bf16.msra.mxu0 %v2616
        %2707 = vmatprep.subr.bf16.mxu0 0
        %2708 = vmatpush1.bf16.msra.mxu0 0
        %2709 = vmatprep.subr.bf16.mxu0 0
        %2710 = vmatpush1.bf16.msra.mxu0 0
        %2711 = vmatprep.subr.bf16.mxu0 0
        %2712 = vmatpush1.bf16.msra.mxu0 0
        %2713 = vmatprep.subr.bf16.mxu0 0
        %2714 = vmatpush1.bf16.msra.mxu0 0
        %2715 = vmatprep.subr.bf16.mxu0 0
        %2716 = vmatpush1.bf16.msra.mxu0 0
        %2717 = vmatprep.subr.bf16.mxu0 0
        %2718 = vmatpush1.bf16.msra.mxu0 0
        %2719 = vmatprep.subr.bf16.mxu0 0
        %2720 = vmatpush1.bf16.msra.mxu0 0
        %2721 = vmatprep.subr.bf16.mxu0 0
        %2722 = vmatpush1.bf16.msra.mxu0 0
        %2723 = vmatprep.mubr.bf16.mxu0 0
        %2724 = vmatmul.mubr.bf16.gmra.mrb[0].mxu0 %v2489
        %v2725 = vpop.f32.mrb[0].mxu0
        %v2726 = vadd.f32 0.0, %v2725
        %v2727 = vpop.f32.mrb[0].mxu0
        %v2728 = vadd.f32 0.0, %v2727
        %v2729 = vpop.f32.mrb[0].mxu0
        %v2730 = vpop.f32.mrb[0].mxu0
        %2731 = vdwg.mxu0
        %v2732 = vadd.f32 %v2485, %v2685
        %v2733 = vadd.f32 %v2486, %v2687
        %v2734 = vadd.f32 %v2487, %v2726
        %v2735 = vadd.f32 %v2488, %v2728
        %v2736 = vmul.f32 %v2732, 0.5
        %v2737 = vtanh.pop %v2736
        %v2738 = vmul.f32 %v2737, 0.5
        %v2739 = vadd.f32 %v2738, 0.5
        %v2740 = vmul.f32 %v2733, 0.5
        %v2741 = vtanh.pop %v2740
        %v2742 = vmul.f32 %v2741, 0.5
        %v2743 = vadd.f32 %v2742, 0.5
        %v2744 = vtanh.pop %v2734
        %v2745 = vmul.f32 %v2735, 0.5
        %v2746 = vtanh.pop %v2745
        %v2747 = vmul.f32 %v2746, 0.5
        %v2748 = vadd.f32 %v2747, 0.5
        %v2749 = vmul.f32 %v2743, %v2484
        %v2750 = vmul.f32 %v2739, %v2744
        %v2751 = vadd.f32 %v2749, %v2750
        %v2752 = vtanh.pop %v2751
        %v2753 = vmul.f32 %v2748, %v2752
        %v2754 = vld [vmem:[%s1239] sm:$0xff]
        %v2755 = vld [vmem:[%s1239 + $0x8] sm:$0xff]
        %v2756 = vld [vmem:[%s1239 + $0x10] sm:$0xff]
        %v2757 = vld [vmem:[%s1239 + $0x18] sm:$0xff]
        %v2758 = vpack.c.bf16 %v2753, %v2753
        %2759 = vmatprep.subr.bf16.mxu0 %v2587
        %2760 = vmatpush1.bf16.msra.mxu0 %v2586
        %2761 = vmatprep.subr.bf16.mxu0 %v2591
        %2762 = vmatpush1.bf16.msra.mxu0 %v2590
        %2763 = vmatprep.subr.bf16.mxu0 %v2595
        %2764 = vmatpush1.bf16.msra.mxu0 %v2594
        %2765 = vmatprep.subr.bf16.mxu0 %v2599
        %2766 = vmatpush1.bf16.msra.mxu0 %v2598
        %2767 = vmatprep.subr.bf16.mxu0 %v2603
        %2768 = vmatpush1.bf16.msra.mxu0 %v2602
        %2769 = vmatprep.subr.bf16.mxu0 %v2607
        %2770 = vmatpush1.bf16.msra.mxu0 %v2606
        %2771 = vmatprep.subr.bf16.mxu0 %v2611
        %2772 = vmatpush1.bf16.msra.mxu0 %v2610
        %2773 = vmatprep.subr.bf16.mxu0 %v2615
        %2774 = vmatpush1.bf16.msra.mxu0 %v2614
        %2775 = vmatprep.subr.bf16.mxu0 0
        %2776 = vmatpush1.bf16.msra.mxu0 0
        %2777 = vmatprep.subr.bf16.mxu0 0
        %2778 = vmatpush1.bf16.msra.mxu0 0
        %2779 = vmatprep.subr.bf16.mxu0 0
        %2780 = vmatpush1.bf16.msra.mxu0 0
        %2781 = vmatprep.subr.bf16.mxu0 0
        %2782 = vmatpush1.bf16.msra.mxu0 0
        %2783 = vmatprep.subr.bf16.mxu0 0
        %2784 = vmatpush1.bf16.msra.mxu0 0
        %2785 = vmatprep.subr.bf16.mxu0 0
        %2786 = vmatpush1.bf16.msra.mxu0 0
        %2787 = vmatprep.subr.bf16.mxu0 0
        %2788 = vmatpush1.bf16.msra.mxu0 0
        %2789 = vmatprep.subr.bf16.mxu0 0
        %2790 = vmatpush1.bf16.msra.mxu0 0
        %2791 = vmatprep.mubr.bf16.mxu0 0
        %2792 = vmatmul.mubr.bf16.gmra.mrb[0].mxu0 %v2758
        %v2793 = vpop.f32.mrb[0].mxu0
        %v2794 = vadd.f32 0.0, %v2793
        %v2795 = vpop.f32.mrb[0].mxu0
        %v2796 = vadd.f32 0.0, %v2795
        %v2797 = vpop.f32.mrb[0].mxu0
        %v2798 = vpop.f32.mrb[0].mxu0
        %2799 = vdwg.mxu0
        %2800 = vmatprep.subr.bf16.mxu0 %v2589
        %2801 = vmatpush1.bf16.msra.mxu0 %v2588
        %2802 = vmatprep.subr.bf16.mxu0 %v2593
        %2803 = vmatpush1.bf16.msra.mxu0 %v2592
        %2804 = vmatprep.subr.bf16.mxu0 %v2597
        %2805 = vmatpush1.bf16.msra.mxu0 %v2596
        %2806 = vmatprep.subr.bf16.mxu0 %v2601
        %2807 = vmatpush1.bf16.msra.mxu0 %v2600
        %2808 = vmatprep.subr.bf16.mxu0 %v2605
        %2809 = vmatpush1.bf16.msra.mxu0 %v2604
        %2810 = vmatprep.subr.bf16.mxu0 %v2609
        %2811 = vmatpush1.bf16.msra.mxu0 %v2608
        %2812 = vmatprep.subr.bf16.mxu0 %v2613
        %2813 = vmatpush1.bf16.msra.mxu0 %v2612
        %2814 = vmatprep.subr.bf16.mxu0 %v2617
        %2815 = vmatpush1.bf16.msra.mxu0 %v2616
        %2816 = vmatprep.subr.bf16.mxu0 0
        %2817 = vmatpush1.bf16.msra.mxu0 0
        %2818 = vmatprep.subr.bf16.mxu0 0
        %2819 = vmatpush1.bf16.msra.mxu0 0
        %2820 = vmatprep.subr.bf16.mxu0 0
        %2821 = vmatpush1.bf16.msra.mxu0 0
        %2822 = vmatprep.subr.bf16.mxu0 0
        %2823 = vmatpush1.bf16.msra.mxu0 0
        %2824 = vmatprep.subr.bf16.mxu0 0
        %2825 = vmatpush1.bf16.msra.mxu0 0
        %2826 = vmatprep.subr.bf16.mxu0 0
        %2827 = vmatpush1.bf16.msra.mxu0 0
        %2828 = vmatprep.subr.bf16.mxu0 0
        %2829 = vmatpush1.bf16.msra.mxu0 0
        %2830 = vmatprep.subr.bf16.mxu0 0
        %2831 = vmatpush1.bf16.msra.mxu0 0
        %2832 = vmatprep.mubr.bf16.mxu0 0
        %2833 = vmatmul.mubr.bf16.gmra.mrb[0].mxu0 %v2758
        %v2834 = vpop.f32.mrb[0].mxu0
        %v2835 = vadd.f32 0.0, %v2834
        %v2836 = vpop.f32.mrb[0].mxu0
        %v2837 = vadd.f32 0.0, %v2836
        %v2838 = vpop.f32.mrb[0].mxu0
        %v2839 = vpop.f32.mrb[0].mxu0
        %2840 = vdwg.mxu0
        %v2841 = vadd.f32 %v2754, %v2794
        %v2842 = vadd.f32 %v2755, %v2796
        %v2843 = vadd.f32 %v2756, %v2835
        %v2844 = vadd.f32 %v2757, %v2837
        %v2845 = vmul.f32 %v2841, 0.5
        %v2846 = vtanh.pop %v2845
        %v2847 = vmul.f32 %v2846, 0.5
        %v2848 = vadd.f32 %v2847, 0.5
        %v2849 = vmul.f32 %v2842, 0.5
        %v2850 = vtanh.pop %v2849
        %v2851 = vmul.f32 %v2850, 0.5
        %v2852 = vadd.f32 %v2851, 0.5
        %v2853 = vtanh.pop %v2843
        %v2854 = vmul.f32 %v2844, 0.5
        %v2855 = vtanh.pop %v2854
        %v2856 = vmul.f32 %v2855, 0.5
        %v2857 = vadd.f32 %v2856, 0.5
        %v2858 = vmul.f32 %v2852, %v2751
        %v2859 = vmul.f32 %v2848, %v2853
        %v2860 = vadd.f32 %v2858, %v2859
        %v2861 = vtanh.pop %v2860
        %v2862 = vmul.f32 %v2857, %v2861
        %v2863 = vld [vmem:[%s1351] sm:$0xff]
        %v2864 = vld [vmem:[%s1351 + $0x8] sm:$0xff]
        %v2865 = vld [vmem:[%s1351 + $0x10] sm:$0xff]
        %v2866 = vld [vmem:[%s1351 + $0x18] sm:$0xff]
        %v2867 = vpack.c.bf16 %v2862, %v2862
        %2868 = vmatprep.subr.bf16.mxu0 %v2587
        %2869 = vmatpush1.bf16.msra.mxu0 %v2586
        %2870 = vmatprep.subr.bf16.mxu0 %v2591
        %2871 = vmatpush1.bf16.msra.mxu0 %v2590
        %2872 = vmatprep.subr.bf16.mxu0 %v2595
        %2873 = vmatpush1.bf16.msra.mxu0 %v2594
        %2874 = vmatprep.subr.bf16.mxu0 %v2599
        %2875 = vmatpush1.bf16.msra.mxu0 %v2598
        %2876 = vmatprep.subr.bf16.mxu0 %v2603
        %2877 = vmatpush1.bf16.msra.mxu0 %v2602
        %2878 = vmatprep.subr.bf16.mxu0 %v2607
        %2879 = vmatpush1.bf16.msra.mxu0 %v2606
        %2880 = vmatprep.subr.bf16.mxu0 %v2611
        %2881 = vmatpush1.bf16.msra.mxu0 %v2610
        %2882 = vmatprep.subr.bf16.mxu0 %v2615
        %2883 = vmatpush1.bf16.msra.mxu0 %v2614
        %2884 = vmatprep.subr.bf16.mxu0 0
        %2885 = vmatpush1.bf16.msra.mxu0 0
        %2886 = vmatprep.subr.bf16.mxu0 0
        %2887 = vmatpush1.bf16.msra.mxu0 0
        %2888 = vmatprep.subr.bf16.mxu0 0
        %2889 = vmatpush1.bf16.msra.mxu0 0
        %2890 = vmatprep.subr.bf16.mxu0 0
        %2891 = vmatpush1.bf16.msra.mxu0 0
        %2892 = vmatprep.subr.bf16.mxu0 0
        %2893 = vmatpush1.bf16.msra.mxu0 0
        %2894 = vmatprep.subr.bf16.mxu0 0
        %2895 = vmatpush1.bf16.msra.mxu0 0
        %2896 = vmatprep.subr.bf16.mxu0 0
        %2897 = vmatpush1.bf16.msra.mxu0 0
        %2898 = vmatprep.subr.bf16.mxu0 0
        %2899 = vmatpush1.bf16.msra.mxu0 0
        %2900 = vmatprep.mubr.bf16.mxu0 0
        %2901 = vmatmul.mubr.bf16.gmra.mrb[0].mxu0 %v2867
        %v2902 = vpop.f32.mrb[0].mxu0
        %v2903 = vadd.f32 0.0, %v2902
        %v2904 = vpop.f32.mrb[0].mxu0
        %v2905 = vadd.f32 0.0, %v2904
        %v2906 = vpop.f32.mrb[0].mxu0
        %v2907 = vpop.f32.mrb[0].mxu0
        %2908 = vdwg.mxu0
        %2909 = vmatprep.subr.bf16.mxu0 %v2589
        %2910 = vmatpush1.bf16.msra.mxu0 %v2588
        %2911 = vmatprep.subr.bf16.mxu0 %v2593
        %2912 = vmatpush1.bf16.msra.mxu0 %v2592
        %2913 = vmatprep.subr.bf16.mxu0 %v2597
        %2914 = vmatpush1.bf16.msra.mxu0 %v2596
        %2915 = vmatprep.subr.bf16.mxu0 %v2601
        %2916 = vmatpush1.bf16.msra.mxu0 %v2600
        %2917 = vmatprep.subr.bf16.mxu0 %v2605
        %2918 = vmatpush1.bf16.msra.mxu0 %v2604
        %2919 = vmatprep.subr.bf16.mxu0 %v2609
        %2920 = vmatpush1.bf16.msra.mxu0 %v2608
        %2921 = vmatprep.subr.bf16.mxu0 %v2613
        %2922 = vmatpush1.bf16.msra.mxu0 %v2612
        %2923 = vmatprep.subr.bf16.mxu0 %v2617
        %2924 = vmatpush1.bf16.msra.mxu0 %v2616
        %2925 = vmatprep.subr.bf16.mxu0 0
        %2926 = vmatpush1.bf16.msra.mxu0 0
        %2927 = vmatprep.subr.bf16.mxu0 0
        %2928 = vmatpush1.bf16.msra.mxu0 0
        %2929 = vmatprep.subr.bf16.mxu0 0
        %2930 = vmatpush1.bf16.msra.mxu0 0
        %2931 = vmatprep.subr.bf16.mxu0 0
        %2932 = vmatpush1.bf16.msra.mxu0 0
        %2933 = vmatprep.subr.bf16.mxu0 0
        %2934 = vmatpush1.bf16.msra.mxu0 0
        %2935 = vmatprep.subr.bf16.mxu0 0
        %2936 = vmatpush1.bf16.msra.mxu0 0
        %2937 = vmatprep.subr.bf16.mxu0 0
        %2938 = vmatpush1.bf16.msra.mxu0 0
        %2939 = vmatprep.subr.bf16.mxu0 0
        %2940 = vmatpush1.bf16.msra.mxu0 0
        %2941 = vmatprep.mubr.bf16.mxu0 0
        %2942 = vmatmul.mubr.bf16.gmra.mrb[0].mxu0 %v2867
        %v2943 = vpop.f32.mrb[0].mxu0
        %v2944 = vadd.f32 0.0, %v2943
        %v2945 = vpop.f32.mrb[0].mxu0
        %v2946 = vadd.f32 0.0, %v2945
        %v2947 = vpop.f32.mrb[0].mxu0
        %v2948 = vpop.f32.mrb[0].mxu0
        %2949 = vdwg.mxu0
        %v2950 = vadd.f32 %v2863, %v2903
        %v2951 = vadd.f32 %v2864, %v2905
        %v2952 = vadd.f32 %v2865, %v2944
        %v2953 = vadd.f32 %v2866, %v2946
        %v2954 = vmul.f32 %v2950, 0.5
        %v2955 = vtanh.pop %v2954
        %v2956 = vmul.f32 %v2955, 0.5
        %v2957 = vadd.f32 %v2956, 0.5
        %v2958 = vmul.f32 %v2951, 0.5
        %v2959 = vtanh.pop %v2958
        %v2960 = vmul.f32 %v2959, 0.5
        %v2961 = vadd.f32 %v2960, 0.5
        %v2962 = vtanh.pop %v2952
        %v2963 = vmul.f32 %v2953, 0.5
        %v2964 = vtanh.pop %v2963
        %v2965 = vmul.f32 %v2964, 0.5
        %v2966 = vadd.f32 %v2965, 0.5
        %v2967 = vmul.f32 %v2961, %v2860
        %v2968 = vmul.f32 %v2957, %v2962
        %v2969 = vadd.f32 %v2967, %v2968
        %v2970 = vtanh.pop %v2969
        %v2971 = vmul.f32 %v2966, %v2970
        %v2972 = vld [vmem:[%s1463] sm:$0xff]
        %v2973 = vld [vmem:[%s1463 + $0x8] sm:$0xff]
        %v2974 = vld [vmem:[%s1463 + $0x10] sm:$0xff]
        %v2975 = vld [vmem:[%s1463 + $0x18] sm:$0xff]
        %v2976 = vpack.c.bf16 %v2971, %v2971
        %2977 = vmatprep.subr.bf16.mxu0 %v2587
        %2978 = vmatpush1.bf16.msra.mxu0 %v2586
        %2979 = vmatprep.subr.bf16.mxu0 %v2591
        %2980 = vmatpush1.bf16.msra.mxu0 %v2590
        %2981 = vmatprep.subr.bf16.mxu0 %v2595
        %2982 = vmatpush1.bf16.msra.mxu0 %v2594
        %2983 = vmatprep.subr.bf16.mxu0 %v2599
        %2984 = vmatpush1.bf16.msra.mxu0 %v2598
        %2985 = vmatprep.subr.bf16.mxu0 %v2603
        %2986 = vmatpush1.bf16.msra.mxu0 %v2602
        %2987 = vmatprep.subr.bf16.mxu0 %v2607
        %2988 = vmatpush1.bf16.msra.mxu0 %v2606
        %2989 = vmatprep.subr.bf16.mxu0 %v2611
        %2990 = vmatpush1.bf16.msra.mxu0 %v2610
        %2991 = vmatprep.subr.bf16.mxu0 %v2615
        %2992 = vmatpush1.bf16.msra.mxu0 %v2614
        %2993 = vmatprep.subr.bf16.mxu0 0
        %2994 = vmatpush1.bf16.msra.mxu0 0
        %2995 = vmatprep.subr.bf16.mxu0 0
        %2996 = vmatpush1.bf16.msra.mxu0 0
        %2997 = vmatprep.subr.bf16.mxu0 0
        %2998 = vmatpush1.bf16.msra.mxu0 0
        %2999 = vmatprep.subr.bf16.mxu0 0
        %3000 = vmatpush1.bf16.msra.mxu0 0
        %3001 = vmatprep.subr.bf16.mxu0 0
        %3002 = vmatpush1.bf16.msra.mxu0 0
        %3003 = vmatprep.subr.bf16.mxu0 0
        %3004 = vmatpush1.bf16.msra.mxu0 0
        %3005 = vmatprep.subr.bf16.mxu0 0
        %3006 = vmatpush1.bf16.msra.mxu0 0
        %3007 = vmatprep.subr.bf16.mxu0 0
        %3008 = vmatpush1.bf16.msra.mxu0 0
        %3009 = vmatprep.mubr.bf16.mxu0 0
        %3010 = vmatmul.mubr.bf16.gmra.mrb[0].mxu0 %v2976
        %v3011 = vpop.f32.mrb[0].mxu0
        %v3012 = vadd.f32 0.0, %v3011
        %v3013 = vpop.f32.mrb[0].mxu0
        %v3014 = vadd.f32 0.0, %v3013
        %v3015 = vpop.f32.mrb[0].mxu0
        %v3016 = vpop.f32.mrb[0].mxu0
        %3017 = vdwg.mxu0
        %3018 = vmatprep.subr.bf16.mxu0 %v2589
        %3019 = vmatpush1.bf16.msra.mxu0 %v2588
        %3020 = vmatprep.subr.bf16.mxu0 %v2593
        %3021 = vmatpush1.bf16.msra.mxu0 %v2592
        %3022 = vmatprep.subr.bf16.mxu0 %v2597
        %3023 = vmatpush1.bf16.msra.mxu0 %v2596
        %3024 = vmatprep.subr.bf16.mxu0 %v2601
        %3025 = vmatpush1.bf16.msra.mxu0 %v2600
        %3026 = vmatprep.subr.bf16.mxu0 %v2605
        %3027 = vmatpush1.bf16.msra.mxu0 %v2604
        %3028 = vmatprep.subr.bf16.mxu0 %v2609
        %3029 = vmatpush1.bf16.msra.mxu0 %v2608
        %3030 = vmatprep.subr.bf16.mxu0 %v2613
        %3031 = vmatpush1.bf16.msra.mxu0 %v2612
        %3032 = vmatprep.subr.bf16.mxu0 %v2617
        %3033 = vmatpush1.bf16.msra.mxu0 %v2616
        %3034 = vmatprep.subr.bf16.mxu0 0
        %3035 = vmatpush1.bf16.msra.mxu0 0
        %3036 = vmatprep.subr.bf16.mxu0 0
        %3037 = vmatpush1.bf16.msra.mxu0 0
        %3038 = vmatprep.subr.bf16.mxu0 0
        %3039 = vmatpush1.bf16.msra.mxu0 0
        %3040 = vmatprep.subr.bf16.mxu0 0
        %3041 = vmatpush1.bf16.msra.mxu0 0
        %3042 = vmatprep.subr.bf16.mxu0 0
        %3043 = vmatpush1.bf16.msra.mxu0 0
        %3044 = vmatprep.subr.bf16.mxu0 0
        %3045 = vmatpush1.bf16.msra.mxu0 0
        %3046 = vmatprep.subr.bf16.mxu0 0
        %3047 = vmatpush1.bf16.msra.mxu0 0
        %3048 = vmatprep.subr.bf16.mxu0 0
        %3049 = vmatpush1.bf16.msra.mxu0 0
        %3050 = vmatprep.mubr.bf16.mxu0 0
        %3051 = vmatmul.mubr.bf16.gmra.mrb[0].mxu0 %v2976
        %v3052 = vpop.f32.mrb[0].mxu0
        %v3053 = vadd.f32 0.0, %v3052
        %v3054 = vpop.f32.mrb[0].mxu0
        %v3055 = vadd.f32 0.0, %v3054
        %v3056 = vpop.f32.mrb[0].mxu0
        %v3057 = vpop.f32.mrb[0].mxu0
        %3058 = vdwg.mxu0
        %v3059 = vadd.f32 %v2972, %v3012
        %v3060 = vadd.f32 %v2973, %v3014
        %v3061 = vadd.f32 %v2974, %v3053
        %v3062 = vadd.f32 %v2975, %v3055
        %v3063 = vmul.f32 %v3059, 0.5
        %v3064 = vtanh.pop %v3063
        %v3065 = vmul.f32 %v3064, 0.5
        %v3066 = vadd.f32 %v3065, 0.5
        %v3067 = vmul.f32 %v3060, 0.5
        %v3068 = vtanh.pop %v3067
        %v3069 = vmul.f32 %v3068, 0.5
        %v3070 = vadd.f32 %v3069, 0.5
        %v3071 = vtanh.pop %v3061
        %v3072 = vmul.f32 %v3062, 0.5
        %v3073 = vtanh.pop %v3072
        %v3074 = vmul.f32 %v3073, 0.5
        %v3075 = vadd.f32 %v3074, 0.5
        %v3076 = vmul.f32 %v3070, %v2969
        %v3077 = vmul.f32 %v3066, %v3071
        %v3078 = vadd.f32 %v3076, %v3077
        %v3079 = vtanh.pop %v3078
        %v3080 = vmul.f32 %v3075, %v3079
        %v3081 = vld [vmem:[%s1575] sm:$0xff]
        %v3082 = vld [vmem:[%s1575 + $0x8] sm:$0xff]
        %v3083 = vld [vmem:[%s1575 + $0x10] sm:$0xff]
        %v3084 = vld [vmem:[%s1575 + $0x18] sm:$0xff]
        %v3085 = vpack.c.bf16 %v3080, %v3080
        %3086 = vmatprep.subr.bf16.mxu0 %v2587
        %3087 = vmatpush1.bf16.msra.mxu0 %v2586
        %3088 = vmatprep.subr.bf16.mxu0 %v2591
        %3089 = vmatpush1.bf16.msra.mxu0 %v2590
        %3090 = vmatprep.subr.bf16.mxu0 %v2595
        %3091 = vmatpush1.bf16.msra.mxu0 %v2594
        %3092 = vmatprep.subr.bf16.mxu0 %v2599
        %3093 = vmatpush1.bf16.msra.mxu0 %v2598
        %3094 = vmatprep.subr.bf16.mxu0 %v2603
        %3095 = vmatpush1.bf16.msra.mxu0 %v2602
        %3096 = vmatprep.subr.bf16.mxu0 %v2607
        %3097 = vmatpush1.bf16.msra.mxu0 %v2606
        %3098 = vmatprep.subr.bf16.mxu0 %v2611
        %3099 = vmatpush1.bf16.msra.mxu0 %v2610
        %3100 = vmatprep.subr.bf16.mxu0 %v2615
        %3101 = vmatpush1.bf16.msra.mxu0 %v2614
        %3102 = vmatprep.subr.bf16.mxu0 0
        %3103 = vmatpush1.bf16.msra.mxu0 0
        %3104 = vmatprep.subr.bf16.mxu0 0
        %3105 = vmatpush1.bf16.msra.mxu0 0
        %3106 = vmatprep.subr.bf16.mxu0 0
        %3107 = vmatpush1.bf16.msra.mxu0 0
        %3108 = vmatprep.subr.bf16.mxu0 0
        %3109 = vmatpush1.bf16.msra.mxu0 0
        %3110 = vmatprep.subr.bf16.mxu0 0
        %3111 = vmatpush1.bf16.msra.mxu0 0
        %3112 = vmatprep.subr.bf16.mxu0 0
        %3113 = vmatpush1.bf16.msra.mxu0 0
        %3114 = vmatprep.subr.bf16.mxu0 0
        %3115 = vmatpush1.bf16.msra.mxu0 0
        %3116 = vmatprep.subr.bf16.mxu0 0
        %3117 = vmatpush1.bf16.msra.mxu0 0
        %3118 = vmatprep.mubr.bf16.mxu0 0
        %3119 = vmatmul.mubr.bf16.gmra.mrb[0].mxu0 %v3085
        %v3120 = vpop.f32.mrb[0].mxu0
        %v3121 = vadd.f32 0.0, %v3120
        %v3122 = vpop.f32.mrb[0].mxu0
        %v3123 = vadd.f32 0.0, %v3122
        %v3124 = vpop.f32.mrb[0].mxu0
        %v3125 = vpop.f32.mrb[0].mxu0
        %3126 = vdwg.mxu0
        %3127 = vmatprep.subr.bf16.mxu0 %v2589
        %3128 = vmatpush1.bf16.msra.mxu0 %v2588
        %3129 = vmatprep.subr.bf16.mxu0 %v2593
        %3130 = vmatpush1.bf16.msra.mxu0 %v2592
        %3131 = vmatprep.subr.bf16.mxu0 %v2597
        %3132 = vmatpush1.bf16.msra.mxu0 %v2596
        %3133 = vmatprep.subr.bf16.mxu0 %v2601
        %3134 = vmatpush1.bf16.msra.mxu0 %v2600
        %3135 = vmatprep.subr.bf16.mxu0 %v2605
        %3136 = vmatpush1.bf16.msra.mxu0 %v2604
        %3137 = vmatprep.subr.bf16.mxu0 %v2609
        %3138 = vmatpush1.bf16.msra.mxu0 %v2608
        %3139 = vmatprep.subr.bf16.mxu0 %v2613
        %3140 = vmatpush1.bf16.msra.mxu0 %v2612
        %3141 = vmatprep.subr.bf16.mxu0 %v2617
        %3142 = vmatpush1.bf16.msra.mxu0 %v2616
        %3143 = vmatprep.subr.bf16.mxu0 0
        %3144 = vmatpush1.bf16.msra.mxu0 0
        %3145 = vmatprep.subr.bf16.mxu0 0
        %3146 = vmatpush1.bf16.msra.mxu0 0
        %3147 = vmatprep.subr.bf16.mxu0 0
        %3148 = vmatpush1.bf16.msra.mxu0 0
        %3149 = vmatprep.subr.bf16.mxu0 0
        %3150 = vmatpush1.bf16.msra.mxu0 0
        %3151 = vmatprep.subr.bf16.mxu0 0
        %3152 = vmatpush1.bf16.msra.mxu0 0
        %3153 = vmatprep.subr.bf16.mxu0 0
        %3154 = vmatpush1.bf16.msra.mxu0 0
        %3155 = vmatprep.subr.bf16.mxu0 0
        %3156 = vmatpush1.bf16.msra.mxu0 0
        %3157 = vmatprep.subr.bf16.mxu0 0
        %3158 = vmatpush1.bf16.msra.mxu0 0
        %3159 = vmatprep.mubr.bf16.mxu0 0
        %3160 = vmatmul.mubr.bf16.gmra.mrb[0].mxu0 %v3085
        %v3161 = vpop.f32.mrb[0].mxu0
        %v3162 = vadd.f32 0.0, %v3161
        %v3163 = vpop.f32.mrb[0].mxu0
        %v3164 = vadd.f32 0.0, %v3163
        %v3165 = vpop.f32.mrb[0].mxu0
        %v3166 = vpop.f32.mrb[0].mxu0
        %3167 = vdwg.mxu0
        %v3168 = vadd.f32 %v3081, %v3121
        %v3169 = vadd.f32 %v3082, %v3123
        %v3170 = vadd.f32 %v3083, %v3162
        %v3171 = vadd.f32 %v3084, %v3164
        %v3172 = vmul.f32 %v3168, 0.5
        %v3173 = vtanh.pop %v3172
        %v3174 = vmul.f32 %v3173, 0.5
        %v3175 = vadd.f32 %v3174, 0.5
        %v3176 = vmul.f32 %v3169, 0.5
        %v3177 = vtanh.pop %v3176
        %v3178 = vmul.f32 %v3177, 0.5
        %v3179 = vadd.f32 %v3178, 0.5
        %v3180 = vtanh.pop %v3170
        %v3181 = vmul.f32 %v3171, 0.5
        %v3182 = vtanh.pop %v3181
        %v3183 = vmul.f32 %v3182, 0.5
        %v3184 = vadd.f32 %v3183, 0.5
        %v3185 = vmul.f32 %v3179, %v3078
        %v3186 = vmul.f32 %v3175, %v3180
        %v3187 = vadd.f32 %v3185, %v3186
        %v3188 = vtanh.pop %v3187
        %v3189 = vmul.f32 %v3184, %v3188
        %v3190 = vld [vmem:[%s1687] sm:$0xff]
        %v3191 = vld [vmem:[%s1687 + $0x8] sm:$0xff]
        %v3192 = vld [vmem:[%s1687 + $0x10] sm:$0xff]
        %v3193 = vld [vmem:[%s1687 + $0x18] sm:$0xff]
        %v3194 = vpack.c.bf16 %v3189, %v3189
        %3195 = vmatprep.subr.bf16.mxu0 %v2587
        %3196 = vmatpush1.bf16.msra.mxu0 %v2586
        %3197 = vmatprep.subr.bf16.mxu0 %v2591
        %3198 = vmatpush1.bf16.msra.mxu0 %v2590
        %3199 = vmatprep.subr.bf16.mxu0 %v2595
        %3200 = vmatpush1.bf16.msra.mxu0 %v2594
        %3201 = vmatprep.subr.bf16.mxu0 %v2599
        %3202 = vmatpush1.bf16.msra.mxu0 %v2598
        %3203 = vmatprep.subr.bf16.mxu0 %v2603
        %3204 = vmatpush1.bf16.msra.mxu0 %v2602
        %3205 = vmatprep.subr.bf16.mxu0 %v2607
        %3206 = vmatpush1.bf16.msra.mxu0 %v2606
        %3207 = vmatprep.subr.bf16.mxu0 %v2611
        %3208 = vmatpush1.bf16.msra.mxu0 %v2610
        %3209 = vmatprep.subr.bf16.mxu0 %v2615
        %3210 = vmatpush1.bf16.msra.mxu0 %v2614
        %3211 = vmatprep.subr.bf16.mxu0 0
        %3212 = vmatpush1.bf16.msra.mxu0 0
        %3213 = vmatprep.subr.bf16.mxu0 0
        %3214 = vmatpush1.bf16.msra.mxu0 0
        %3215 = vmatprep.subr.bf16.mxu0 0
        %3216 = vmatpush1.bf16.msra.mxu0 0
        %3217 = vmatprep.subr.bf16.mxu0 0
        %3218 = vmatpush1.bf16.msra.mxu0 0
        %3219 = vmatprep.subr.bf16.mxu0 0
        %3220 = vmatpush1.bf16.msra.mxu0 0
        %3221 = vmatprep.subr.bf16.mxu0 0
        %3222 = vmatpush1.bf16.msra.mxu0 0
        %3223 = vmatprep.subr.bf16.mxu0 0
        %3224 = vmatpush1.bf16.msra.mxu0 0
        %3225 = vmatprep.subr.bf16.mxu0 0
        %3226 = vmatpush1.bf16.msra.mxu0 0
        %3227 = vmatprep.mubr.bf16.mxu0 0
        %3228 = vmatmul.mubr.bf16.gmra.mrb[0].mxu0 %v3194
        %v3229 = vpop.f32.mrb[0].mxu0
        %v3230 = vadd.f32 0.0, %v3229
        %v3231 = vpop.f32.mrb[0].mxu0
        %v3232 = vadd.f32 0.0, %v3231
        %v3233 = vpop.f32.mrb[0].mxu0
        %v3234 = vpop.f32.mrb[0].mxu0
        %3235 = vdwg.mxu0
        %3236 = vmatprep.subr.bf16.mxu0 %v2589
        %3237 = vmatpush1.bf16.msra.mxu0 %v2588
        %3238 = vmatprep.subr.bf16.mxu0 %v2593
        %3239 = vmatpush1.bf16.msra.mxu0 %v2592
        %3240 = vmatprep.subr.bf16.mxu0 %v2597
        %3241 = vmatpush1.bf16.msra.mxu0 %v2596
        %3242 = vmatprep.subr.bf16.mxu0 %v2601
        %3243 = vmatpush1.bf16.msra.mxu0 %v2600
        %3244 = vmatprep.subr.bf16.mxu0 %v2605
        %3245 = vmatpush1.bf16.msra.mxu0 %v2604
        %3246 = vmatprep.subr.bf16.mxu0 %v2609
        %3247 = vmatpush1.bf16.msra.mxu0 %v2608
        %3248 = vmatprep.subr.bf16.mxu0 %v2613
        %3249 = vmatpush1.bf16.msra.mxu0 %v2612
        %3250 = vmatprep.subr.bf16.mxu0 %v2617
        %3251 = vmatpush1.bf16.msra.mxu0 %v2616
        %3252 = vmatprep.subr.bf16.mxu0 0
        %3253 = vmatpush1.bf16.msra.mxu0 0
        %3254 = vmatprep.subr.bf16.mxu0 0
        %3255 = vmatpush1.bf16.msra.mxu0 0
        %3256 = vmatprep.subr.bf16.mxu0 0
        %3257 = vmatpush1.bf16.msra.mxu0 0
        %3258 = vmatprep.subr.bf16.mxu0 0
        %3259 = vmatpush1.bf16.msra.mxu0 0
        %3260 = vmatprep.subr.bf16.mxu0 0
        %3261 = vmatpush1.bf16.msra.mxu0 0
        %3262 = vmatprep.subr.bf16.mxu0 0
        %3263 = vmatpush1.bf16.msra.mxu0 0
        %3264 = vmatprep.subr.bf16.mxu0 0
        %3265 = vmatpush1.bf16.msra.mxu0 0
        %3266 = vmatprep.subr.bf16.mxu0 0
        %3267 = vmatpush1.bf16.msra.mxu0 0
        %3268 = vmatprep.mubr.bf16.mxu0 0
        %3269 = vmatmul.mubr.bf16.gmra.mrb[0].mxu0 %v3194
        %v3270 = vpop.f32.mrb[0].mxu0
        %v3271 = vadd.f32 0.0, %v3270
        %v3272 = vpop.f32.mrb[0].mxu0
        %v3273 = vadd.f32 0.0, %v3272
        %v3274 = vpop.f32.mrb[0].mxu0
        %v3275 = vpop.f32.mrb[0].mxu0
        %3276 = vdwg.mxu0
        %v3277 = vadd.f32 %v3190, %v3230
        %v3278 = vadd.f32 %v3191, %v3232
        %v3279 = vadd.f32 %v3192, %v3271
        %v3280 = vadd.f32 %v3193, %v3273
        %v3281 = vmul.f32 %v3277, 0.5
        %v3282 = vtanh.pop %v3281
        %v3283 = vmul.f32 %v3282, 0.5
        %v3284 = vadd.f32 %v3283, 0.5
        %v3285 = vmul.f32 %v3278, 0.5
        %v3286 = vtanh.pop %v3285
        %v3287 = vmul.f32 %v3286, 0.5
        %v3288 = vadd.f32 %v3287, 0.5
        %v3289 = vtanh.pop %v3279
        %v3290 = vmul.f32 %v3280, 0.5
        %v3291 = vtanh.pop %v3290
        %v3292 = vmul.f32 %v3291, 0.5
        %v3293 = vadd.f32 %v3292, 0.5
        %v3294 = vmul.f32 %v3288, %v3187
        %v3295 = vmul.f32 %v3284, %v3289
        %v3296 = vadd.f32 %v3294, %v3295
        %v3297 = vtanh.pop %v3296
        %v3298 = vmul.f32 %v3293, %v3297
        %v3299 = vld [vmem:[%s1799] sm:$0xff]
        %v3300 = vld [vmem:[%s1799 + $0x8] sm:$0xff]
        %v3301 = vld [vmem:[%s1799 + $0x10] sm:$0xff]
        %v3302 = vld [vmem:[%s1799 + $0x18] sm:$0xff]
        %v3303 = vpack.c.bf16 %v3298, %v3298
        %3304 = vmatprep.subr.bf16.mxu0 %v2587
        %3305 = vmatpush1.bf16.msra.mxu0 %v2586
        %3306 = vmatprep.subr.bf16.mxu0 %v2591
        %3307 = vmatpush1.bf16.msra.mxu0 %v2590
        %3308 = vmatprep.subr.bf16.mxu0 %v2595
        %3309 = vmatpush1.bf16.msra.mxu0 %v2594
        %3310 = vmatprep.subr.bf16.mxu0 %v2599
        %3311 = vmatpush1.bf16.msra.mxu0 %v2598
        %3312 = vmatprep.subr.bf16.mxu0 %v2603
        %3313 = vmatpush1.bf16.msra.mxu0 %v2602
        %3314 = vmatprep.subr.bf16.mxu0 %v2607
        %3315 = vmatpush1.bf16.msra.mxu0 %v2606
        %3316 = vmatprep.subr.bf16.mxu0 %v2611
        %3317 = vmatpush1.bf16.msra.mxu0 %v2610
        %3318 = vmatprep.subr.bf16.mxu0 %v2615
        %3319 = vmatpush1.bf16.msra.mxu0 %v2614
        %3320 = vmatprep.subr.bf16.mxu0 0
        %3321 = vmatpush1.bf16.msra.mxu0 0
        %3322 = vmatprep.subr.bf16.mxu0 0
        %3323 = vmatpush1.bf16.msra.mxu0 0
        %3324 = vmatprep.subr.bf16.mxu0 0
        %3325 = vmatpush1.bf16.msra.mxu0 0
        %3326 = vmatprep.subr.bf16.mxu0 0
        %3327 = vmatpush1.bf16.msra.mxu0 0
        %3328 = vmatprep.subr.bf16.mxu0 0
        %3329 = vmatpush1.bf16.msra.mxu0 0
        %3330 = vmatprep.subr.bf16.mxu0 0
        %3331 = vmatpush1.bf16.msra.mxu0 0
        %3332 = vmatprep.subr.bf16.mxu0 0
        %3333 = vmatpush1.bf16.msra.mxu0 0
        %3334 = vmatprep.subr.bf16.mxu0 0
        %3335 = vmatpush1.bf16.msra.mxu0 0
        %3336 = vmatprep.mubr.bf16.mxu0 0
        %3337 = vmatmul.mubr.bf16.gmra.mrb[0].mxu0 %v3303
        %v3338 = vpop.f32.mrb[0].mxu0
        %v3339 = vadd.f32 0.0, %v3338
        %v3340 = vpop.f32.mrb[0].mxu0
        %v3341 = vadd.f32 0.0, %v3340
        %v3342 = vpop.f32.mrb[0].mxu0
        %v3343 = vpop.f32.mrb[0].mxu0
        %3344 = vdwg.mxu0
        %3345 = vmatprep.subr.bf16.mxu0 %v2589
        %3346 = vmatpush1.bf16.msra.mxu0 %v2588
        %3347 = vmatprep.subr.bf16.mxu0 %v2593
        %3348 = vmatpush1.bf16.msra.mxu0 %v2592
        %3349 = vmatprep.subr.bf16.mxu0 %v2597
        %3350 = vmatpush1.bf16.msra.mxu0 %v2596
        %3351 = vmatprep.subr.bf16.mxu0 %v2601
        %3352 = vmatpush1.bf16.msra.mxu0 %v2600
        %3353 = vmatprep.subr.bf16.mxu0 %v2605
        %3354 = vmatpush1.bf16.msra.mxu0 %v2604
        %3355 = vmatprep.subr.bf16.mxu0 %v2609
        %3356 = vmatpush1.bf16.msra.mxu0 %v2608
        %3357 = vmatprep.subr.bf16.mxu0 %v2613
        %3358 = vmatpush1.bf16.msra.mxu0 %v2612
        %3359 = vmatprep.subr.bf16.mxu0 %v2617
        %3360 = vmatpush1.bf16.msra.mxu0 %v2616
        %3361 = vmatprep.subr.bf16.mxu0 0
        %3362 = vmatpush1.bf16.msra.mxu0 0
        %3363 = vmatprep.subr.bf16.mxu0 0
        %3364 = vmatpush1.bf16.msra.mxu0 0
        %3365 = vmatprep.subr.bf16.mxu0 0
        %3366 = vmatpush1.bf16.msra.mxu0 0
        %3367 = vmatprep.subr.bf16.mxu0 0
        %3368 = vmatpush1.bf16.msra.mxu0 0
        %3369 = vmatprep.subr.bf16.mxu0 0
        %3370 = vmatpush1.bf16.msra.mxu0 0
        %3371 = vmatprep.subr.bf16.mxu0 0
        %3372 = vmatpush1.bf16.msra.mxu0 0
        %3373 = vmatprep.subr.bf16.mxu0 0
        %3374 = vmatpush1.bf16.msra.mxu0 0
        %3375 = vmatprep.subr.bf16.mxu0 0
        %3376 = vmatpush1.bf16.msra.mxu0 0
        %3377 = vmatprep.mubr.bf16.mxu0 0
        %3378 = vmatmul.mubr.bf16.gmra.mrb[0].mxu0 %v3303
        %v3379 = vpop.f32.mrb[0].mxu0
        %v3380 = vadd.f32 0.0, %v3379
        %v3381 = vpop.f32.mrb[0].mxu0
        %v3382 = vadd.f32 0.0, %v3381
        %v3383 = vpop.f32.mrb[0].mxu0
        %v3384 = vpop.f32.mrb[0].mxu0
        %3385 = vdwg.mxu0
        %v3386 = vadd.f32 %v3299, %v3339
        %v3387 = vadd.f32 %v3300, %v3341
        %v3388 = vadd.f32 %v3301, %v3380
        %v3389 = vadd.f32 %v3302, %v3382
        %v3390 = vmul.f32 %v3386, 0.5
        %v3391 = vtanh.pop %v3390
        %v3392 = vmul.f32 %v3391, 0.5
        %v3393 = vadd.f32 %v3392, 0.5
        %v3394 = vmul.f32 %v3387, 0.5
        %v3395 = vtanh.pop %v3394
        %v3396 = vmul.f32 %v3395, 0.5
        %v3397 = vadd.f32 %v3396, 0.5
        %v3398 = vtanh.pop %v3388
        %v3399 = vmul.f32 %v3389, 0.5
        %v3400 = vtanh.pop %v3399
        %v3401 = vmul.f32 %v3400, 0.5
        %v3402 = vadd.f32 %v3401, 0.5
        %v3403 = vmul.f32 %v3397, %v3296
        %v3404 = vmul.f32 %v3393, %v3398
        %v3405 = vadd.f32 %v3403, %v3404
        %v3406 = vtanh.pop %v3405
        %v3407 = vmul.f32 %v3402, %v3406
        %v3408 = vld [vmem:[%s1911] sm:$0xff]
        %v3409 = vld [vmem:[%s1911 + $0x8] sm:$0xff]
        %v3410 = vld [vmem:[%s1911 + $0x10] sm:$0xff]
        %v3411 = vld [vmem:[%s1911 + $0x18] sm:$0xff]
        %v3412 = vpack.c.bf16 %v3407, %v3407
        %3413 = vmatprep.subr.bf16.mxu0 %v2587
        %3414 = vmatpush1.bf16.msra.mxu0 %v2586
        %3415 = vmatprep.subr.bf16.mxu0 %v2591
        %3416 = vmatpush1.bf16.msra.mxu0 %v2590
        %3417 = vmatprep.subr.bf16.mxu0 %v2595
        %3418 = vmatpush1.bf16.msra.mxu0 %v2594
        %3419 = vmatprep.subr.bf16.mxu0 %v2599
        %3420 = vmatpush1.bf16.msra.mxu0 %v2598
        %3421 = vmatprep.subr.bf16.mxu0 %v2603
        %3422 = vmatpush1.bf16.msra.mxu0 %v2602
        %3423 = vmatprep.subr.bf16.mxu0 %v2607
        %3424 = vmatpush1.bf16.msra.mxu0 %v2606
        %3425 = vmatprep.subr.bf16.mxu0 %v2611
        %3426 = vmatpush1.bf16.msra.mxu0 %v2610
        %3427 = vmatprep.subr.bf16.mxu0 %v2615
        %3428 = vmatpush1.bf16.msra.mxu0 %v2614
        %3429 = vmatprep.subr.bf16.mxu0 0
        %3430 = vmatpush1.bf16.msra.mxu0 0
        %3431 = vmatprep.subr.bf16.mxu0 0
        %3432 = vmatpush1.bf16.msra.mxu0 0
        %3433 = vmatprep.subr.bf16.mxu0 0
        %3434 = vmatpush1.bf16.msra.mxu0 0
        %3435 = vmatprep.subr.bf16.mxu0 0
        %3436 = vmatpush1.bf16.msra.mxu0 0
        %3437 = vmatprep.subr.bf16.mxu0 0
        %3438 = vmatpush1.bf16.msra.mxu0 0
        %3439 = vmatprep.subr.bf16.mxu0 0
        %3440 = vmatpush1.bf16.msra.mxu0 0
        %3441 = vmatprep.subr.bf16.mxu0 0
        %3442 = vmatpush1.bf16.msra.mxu0 0
        %3443 = vmatprep.subr.bf16.mxu0 0
        %3444 = vmatpush1.bf16.msra.mxu0 0
        %3445 = vmatprep.mubr.bf16.mxu0 0
        %3446 = vmatmul.mubr.bf16.gmra.mrb[0].mxu0 %v3412
        %v3447 = vpop.f32.mrb[0].mxu0
        %v3448 = vadd.f32 0.0, %v3447
        %v3449 = vpop.f32.mrb[0].mxu0
        %v3450 = vadd.f32 0.0, %v3449
        %v3451 = vpop.f32.mrb[0].mxu0
        %v3452 = vpop.f32.mrb[0].mxu0
        %3453 = vdwg.mxu0
        %3454 = vmatprep.subr.bf16.mxu0 %v2589
        %3455 = vmatpush1.bf16.msra.mxu0 %v2588
        %3456 = vmatprep.subr.bf16.mxu0 %v2593
        %3457 = vmatpush1.bf16.msra.mxu0 %v2592
        %3458 = vmatprep.subr.bf16.mxu0 %v2597
        %3459 = vmatpush1.bf16.msra.mxu0 %v2596
        %3460 = vmatprep.subr.bf16.mxu0 %v2601
        %3461 = vmatpush1.bf16.msra.mxu0 %v2600
        %3462 = vmatprep.subr.bf16.mxu0 %v2605
        %3463 = vmatpush1.bf16.msra.mxu0 %v2604
        %3464 = vmatprep.subr.bf16.mxu0 %v2609
        %3465 = vmatpush1.bf16.msra.mxu0 %v2608
        %3466 = vmatprep.subr.bf16.mxu0 %v2613
        %3467 = vmatpush1.bf16.msra.mxu0 %v2612
        %3468 = vmatprep.subr.bf16.mxu0 %v2617
        %3469 = vmatpush1.bf16.msra.mxu0 %v2616
        %3470 = vmatprep.subr.bf16.mxu0 0
        %3471 = vmatpush1.bf16.msra.mxu0 0
        %3472 = vmatprep.subr.bf16.mxu0 0
        %3473 = vmatpush1.bf16.msra.mxu0 0
        %3474 = vmatprep.subr.bf16.mxu0 0
        %3475 = vmatpush1.bf16.msra.mxu0 0
        %3476 = vmatprep.subr.bf16.mxu0 0
        %3477 = vmatpush1.bf16.msra.mxu0 0
        %3478 = vmatprep.subr.bf16.mxu0 0
        %3479 = vmatpush1.bf16.msra.mxu0 0
        %3480 = vmatprep.subr.bf16.mxu0 0
        %3481 = vmatpush1.bf16.msra.mxu0 0
        %3482 = vmatprep.subr.bf16.mxu0 0
        %3483 = vmatpush1.bf16.msra.mxu0 0
        %3484 = vmatprep.subr.bf16.mxu0 0
        %3485 = vmatpush1.bf16.msra.mxu0 0
        %3486 = vmatprep.mubr.bf16.mxu0 0
        %3487 = vmatmul.mubr.bf16.gmra.mrb[0].mxu0 %v3412
        %v3488 = vpop.f32.mrb[0].mxu0
        %v3489 = vadd.f32 0.0, %v3488
        %v3490 = vpop.f32.mrb[0].mxu0
        %v3491 = vadd.f32 0.0, %v3490
        %v3492 = vpop.f32.mrb[0].mxu0
        %v3493 = vpop.f32.mrb[0].mxu0
        %3494 = vdwg.mxu0
        %v3495 = vadd.f32 %v3408, %v3448
        %v3496 = vadd.f32 %v3409, %v3450
        %v3497 = vadd.f32 %v3410, %v3489
        %v3498 = vadd.f32 %v3411, %v3491
        %v3499 = vmul.f32 %v3495, 0.5
        %v3500 = vtanh.pop %v3499
        %v3501 = vmul.f32 %v3500, 0.5
        %v3502 = vadd.f32 %v3501, 0.5
        %v3503 = vmul.f32 %v3496, 0.5
        %v3504 = vtanh.pop %v3503
        %v3505 = vmul.f32 %v3504, 0.5
        %v3506 = vadd.f32 %v3505, 0.5
        %v3507 = vtanh.pop %v3497
        %v3508 = vmul.f32 %v3498, 0.5
        %v3509 = vtanh.pop %v3508
        %v3510 = vmul.f32 %v3509, 0.5
        %v3511 = vadd.f32 %v3510, 0.5
        %v3512 = vmul.f32 %v3506, %v3405
        %v3513 = vmul.f32 %v3502, %v3507
        %v3514 = vadd.f32 %v3512, %v3513
        %v3515 = vtanh.pop %v3514
        %v3516 = vmul.f32 %v3511, %v3515
        %3517 = vst [vmem:[%s2481] sm:$0xff] %v3516
        %3518 = vst [vmem:[%s2483] sm:$0xff] %v3514
        %p3519 = scmp.eq.s32.totalorder %s34, 1
        // Predicated region
        $region97: #{tpu_custom_call.1} parent=63 // pred_check
          %p3520 = pneg %p3519
        $region98: #{tpu_custom_call.1} parent=63 // pred_check_branch
          %3522 = sbr.rel (%p3520) target = $region100
        $region99: #{tpu_custom_call.1} parent=63 // pred_region
          %v3523 = vpack.c.bf16 %v3516, %v3516
          %v3524 = vld [vmem:[#allocation15] sm:$0xf]
          %v3525 = vld [vmem:[#allocation15 + $0x4] sm:$0xf]
          %v3526 = vld [vmem:[#allocation15 + $0x8] sm:$0xf]
          %v3527 = vld [vmem:[#allocation15 + $0xc] sm:$0xf]
          %v3528 = vld [vmem:[#allocation15 + $0x10] sm:$0xf]
          %v3529 = vld [vmem:[#allocation15 + $0x14] sm:$0xf]
          %v3530 = vld [vmem:[#allocation15 + $0x18] sm:$0xf]
          %v3531 = vld [vmem:[#allocation15 + $0x1c] sm:$0xf]
          %v3532 = vld [vmem:[#allocation15 + $0x20] sm:$0xf]
          %v3533 = vld [vmem:[#allocation15 + $0x24] sm:$0xf]
          %v3534 = vld [vmem:[#allocation15 + $0x28] sm:$0xf]
          %v3535 = vld [vmem:[#allocation15 + $0x2c] sm:$0xf]
          %v3536 = vld [vmem:[#allocation15 + $0x30] sm:$0xf]
          %v3537 = vld [vmem:[#allocation15 + $0x34] sm:$0xf]
          %v3538 = vld [vmem:[#allocation15 + $0x38] sm:$0xf]
          %v3539 = vld [vmem:[#allocation15 + $0x3c] sm:$0xf]
          %v3540 = vld [vmem:[%s8] sm:$0x1]
          %v3542 = vlaneseq
          %v3543 = vshrl.u32 %v3542, 7
          %v3544 = vsub.s32 0, %v3543
          %v3545 = vrot.slane %v3540, %v3544
          %v3563 = vunpack.c.l.b16 %v3524
          %v3564 = vunpack.c.l.b16 %v3525
          %v3565 = vunpack.c.l.b16 %v3526
          %v3566 = vunpack.c.l.b16 %v3527
          %v3567 = vunpack.c.l.b16 %v3528
          %v3568 = vunpack.c.l.b16 %v3529
          %v3569 = vunpack.c.l.b16 %v3530
          %v3570 = vunpack.c.l.b16 %v3531
          %v3571 = vunpack.c.l.b16 %v3532
          %v3572 = vunpack.c.l.b16 %v3533
          %v3573 = vunpack.c.l.b16 %v3534
          %v3574 = vunpack.c.l.b16 %v3535
          %v3575 = vunpack.c.l.b16 %v3536
          %v3576 = vunpack.c.l.b16 %v3537
          %v3577 = vunpack.c.l.b16 %v3538
          %v3578 = vunpack.c.l.b16 %v3539
          %v3579 = vpack.c.b16 %v3564, %v3563
          %v3580 = vpack.c.b16 %v3566, %v3565
          %v3581 = vpack.c.b16 %v3568, %v3567
          %v3582 = vpack.c.b16 %v3570, %v3569
          %v3583 = vpack.c.b16 %v3572, %v3571
          %v3584 = vpack.c.b16 %v3574, %v3573
          %v3585 = vpack.c.b16 %v3576, %v3575
          %v3586 = vpack.c.b16 %v3578, %v3577
          %3595 = vmatprep.subr.bf16.mxu0 0
          %3596 = vmatpush1.bf16.msra.mxu0 %v3579
          %3597 = vmatprep.subr.bf16.mxu0 0
          %3598 = vmatpush1.bf16.msra.mxu0 %v3580
          %3599 = vmatprep.subr.bf16.mxu0 0
          %3600 = vmatpush1.bf16.msra.mxu0 %v3581
          %3601 = vmatprep.subr.bf16.mxu0 0
          %3602 = vmatpush1.bf16.msra.mxu0 %v3582
          %3603 = vmatprep.subr.bf16.mxu0 0
          %3604 = vmatpush1.bf16.msra.mxu0 %v3583
          %3605 = vmatprep.subr.bf16.mxu0 0
          %3606 = vmatpush1.bf16.msra.mxu0 %v3584
          %3607 = vmatprep.subr.bf16.mxu0 0
          %3608 = vmatpush1.bf16.msra.mxu0 %v3585
          %3609 = vmatprep.subr.bf16.mxu0 0
          %3610 = vmatpush1.bf16.msra.mxu0 %v3586
          %3611 = vmatprep.subr.bf16.mxu0 0
          %3612 = vmatpush1.bf16.msra.mxu0 0
          %3613 = vmatprep.subr.bf16.mxu0 0
          %3614 = vmatpush1.bf16.msra.mxu0 0
          %3615 = vmatprep.subr.bf16.mxu0 0
          %3616 = vmatpush1.bf16.msra.mxu0 0
          %3617 = vmatprep.subr.bf16.mxu0 0
          %3618 = vmatpush1.bf16.msra.mxu0 0
          %3619 = vmatprep.subr.bf16.mxu0 0
          %3620 = vmatpush1.bf16.msra.mxu0 0
          %3621 = vmatprep.subr.bf16.mxu0 0
          %3622 = vmatpush1.bf16.msra.mxu0 0
          %3623 = vmatprep.subr.bf16.mxu0 0
          %3624 = vmatpush1.bf16.msra.mxu0 0
          %3625 = vmatprep.subr.bf16.mxu0 0
          %3626 = vmatpush1.bf16.msra.mxu0 0
          %3627 = vmatprep.mubr.bf16.mxu0 0
          %3628 = vmatmul.mubr.bf16.gmra.mrb[0].mxu0 %v3523
          %v3629 = vpop.f32.mrb[0].mxu0
          %v3630 = vadd.f32 %v3545, %v3629
          %v3631 = vpop.f32.mrb[0].mxu0
          %v3632 = vpop.f32.mrb[0].mxu0
          %v3633 = vpop.f32.mrb[0].mxu0
          %3634 = vdwg.mxu0
          %v3635 = vmax.f32 %v3630, 0.0
          %v3636 = vpack.c.bf16 %v3635, %v3635
          %v3637 = vld [vmem:[#allocation17] sm:$0xf]
          %v3638 = vld [vmem:[#allocation17 + $0x4] sm:$0xf]
          %v3639 = vld [vmem:[#allocation17 + $0x8] sm:$0xf]
          %v3640 = vld [vmem:[#allocation17 + $0xc] sm:$0xf]
          %v3641 = vld [vmem:[#allocation17 + $0x10] sm:$0xf]
          %v3642 = vld [vmem:[#allocation17 + $0x14] sm:$0xf]
          %v3643 = vld [vmem:[#allocation17 + $0x18] sm:$0xf]
          %v3644 = vld [vmem:[#allocation17 + $0x1c] sm:$0xf]
          %v3645 = vld [vmem:[#allocation17 + $0x20] sm:$0xf]
          %v3646 = vld [vmem:[#allocation17 + $0x24] sm:$0xf]
          %v3647 = vld [vmem:[#allocation17 + $0x28] sm:$0xf]
          %v3648 = vld [vmem:[#allocation17 + $0x2c] sm:$0xf]
          %v3649 = vld [vmem:[#allocation17 + $0x30] sm:$0xf]
          %v3650 = vld [vmem:[#allocation17 + $0x34] sm:$0xf]
          %v3651 = vld [vmem:[#allocation17 + $0x38] sm:$0xf]
          %v3652 = vld [vmem:[#allocation17 + $0x3c] sm:$0xf]
          %v3653 = vld [vmem:[%s10] sm:$0x1]
          %v3655 = vlaneseq
          %v3656 = vshrl.u32 %v3655, 7
          %v3657 = vsub.s32 0, %v3656
          %v3658 = vrot.slane %v3653, %v3657
          %v3676 = vunpack.c.l.b16 %v3637
          %v3677 = vunpack.c.l.b16 %v3638
          %v3678 = vunpack.c.l.b16 %v3639
          %v3679 = vunpack.c.l.b16 %v3640
          %v3680 = vunpack.c.l.b16 %v3641
          %v3681 = vunpack.c.l.b16 %v3642
          %v3682 = vunpack.c.l.b16 %v3643
          %v3683 = vunpack.c.l.b16 %v3644
          %v3684 = vunpack.c.l.b16 %v3645
          %v3685 = vunpack.c.l.b16 %v3646
          %v3686 = vunpack.c.l.b16 %v3647
          %v3687 = vunpack.c.l.b16 %v3648
          %v3688 = vunpack.c.l.b16 %v3649
          %v3689 = vunpack.c.l.b16 %v3650
          %v3690 = vunpack.c.l.b16 %v3651
          %v3691 = vunpack.c.l.b16 %v3652
          %v3692 = vpack.c.b16 %v3677, %v3676
          %v3693 = vpack.c.b16 %v3679, %v3678
          %v3694 = vpack.c.b16 %v3681, %v3680
          %v3695 = vpack.c.b16 %v3683, %v3682
          %v3696 = vpack.c.b16 %v3685, %v3684
          %v3697 = vpack.c.b16 %v3687, %v3686
          %v3698 = vpack.c.b16 %v3689, %v3688
          %v3699 = vpack.c.b16 %v3691, %v3690
          %3708 = vmatprep.subr.bf16.mxu0 0
          %3709 = vmatpush1.bf16.msra.mxu0 %v3692
          %3710 = vmatprep.subr.bf16.mxu0 0
          %3711 = vmatpush1.bf16.msra.mxu0 %v3693
          %3712 = vmatprep.subr.bf16.mxu0 0
          %3713 = vmatpush1.bf16.msra.mxu0 %v3694
          %3714 = vmatprep.subr.bf16.mxu0 0
          %3715 = vmatpush1.bf16.msra.mxu0 %v3695
          %3716 = vmatprep.subr.bf16.mxu0 0
          %3717 = vmatpush1.bf16.msra.mxu0 %v3696
          %3718 = vmatprep.subr.bf16.mxu0 0
          %3719 = vmatpush1.bf16.msra.mxu0 %v3697
          %3720 = vmatprep.subr.bf16.mxu0 0
          %3721 = vmatpush1.bf16.msra.mxu0 %v3698
          %3722 = vmatprep.subr.bf16.mxu0 0
          %3723 = vmatpush1.bf16.msra.mxu0 %v3699
          %3724 = vmatprep.subr.bf16.mxu0 0
          %3725 = vmatpush1.bf16.msra.mxu0 0
          %3726 = vmatprep.subr.bf16.mxu0 0
          %3727 = vmatpush1.bf16.msra.mxu0 0
          %3728 = vmatprep.subr.bf16.mxu0 0
          %3729 = vmatpush1.bf16.msra.mxu0 0
          %3730 = vmatprep.subr.bf16.mxu0 0
          %3731 = vmatpush1.bf16.msra.mxu0 0
          %3732 = vmatprep.subr.bf16.mxu0 0
          %3733 = vmatpush1.bf16.msra.mxu0 0
          %3734 = vmatprep.subr.bf16.mxu0 0
          %3735 = vmatpush1.bf16.msra.mxu0 0
          %3736 = vmatprep.subr.bf16.mxu0 0
          %3737 = vmatpush1.bf16.msra.mxu0 0
          %3738 = vmatprep.subr.bf16.mxu0 0
          %3739 = vmatpush1.bf16.msra.mxu0 0
          %3740 = vmatprep.mubr.bf16.mxu0 0
          %3741 = vmatmul.mubr.bf16.gmra.mrb[0].mxu0 %v3636
          %v3742 = vpop.f32.mrb[0].mxu0
          %v3743 = vadd.f32 %v3658, %v3742
          %v3744 = vpop.f32.mrb[0].mxu0
          %v3745 = vpop.f32.mrb[0].mxu0
          %v3746 = vpop.f32.mrb[0].mxu0
          %3747 = vdwg.mxu0
          %3748 = vst [vmem:[#allocation18] sm:$0xff] %v3743
        $region100: #{tpu_custom_call.1} parent=63 // pred_fallthru
          _
        // Predicated region
        $region101: #{tpu_custom_call.1} parent=63 // pred_check
          %p3749 = pneg %p297
        $region102: #{tpu_custom_call.1} parent=63 // pred_check_branch
          %3751 = sbr.rel (%p3749) target = $region104
        $region103: #{tpu_custom_call.1} parent=63 // pred_region
          %s3753 = ssub.s32 128, 128
          %3754 = vsyncadd [#allocation8], %s3753
          %s3755 = smul.addr %s33, 128
          %s3756 = scalar_lea.hbm %s11, %s3755
          %s3758 = sshll.u32 [#allocation18], 4
          %s3759 = int_to_ptr.vmem [resolvable:$true] %s3758
          %3761 = dma.vmem_to_hbm [thread:$0]  %s3759, 128, %s3756, [#allocation8]
        $region104: #{tpu_custom_call.1} parent=63 // pred_fallthru
          _
        // Predicated region
        $region105: #{tpu_custom_call.1} parent=63 // pred_check
          %p3762 = pneg %p297
        $region106: #{tpu_custom_call.1} parent=63 // pred_check_branch
          %3764 = sbr.rel (%p3762) target = $region108
        $region107: #{tpu_custom_call.1} parent=63 // pred_region
          %3765 = dma.done [#allocation8], 128
        $region108: #{tpu_custom_call.1} parent=63 // pred_fallthru
          _
      $region64: #{tpu_custom_call.1} parent=5 // pred_fallthru
        _
      %p3766 = scmp.le.s32.totalorder 2, %s24
      // Predicated region
      $region109: #{tpu_custom_call.1} parent=5 // pred_check
        %p3767 = pneg %p3766
      $region110: #{tpu_custom_call.1} parent=5 // pred_check_branch
        %3769 = sbr.rel (%p3767) target = $region112
      $region111: #{tpu_custom_call.1} parent=5 // pred_region
        %s3770 = ssub.s32 %s24, 2
      $region112: #{tpu_custom_call.1} parent=5 // pred_fallthru
        _
    $region6: #{tpu_custom_call.1} parent=1 // loop_footer
      %s28 = sadd.s32 1, %s24
    $region7: #{tpu_custom_call.1} parent=1 // loop_footer_branch
      %23 = sbr.rel target = $region3
    $region8: #{tpu_custom_call.1} parent=1 // loop_exit
      _
    %3771 = vsyncpa [#allocation7], 1
    %s3772 = scalar_lea.sflag [#allocation7], 1
    %3773 = vsyncpa %s3772, 1
    %3774 = vsyncpa [#allocation10], 1
    %3775 = vsyncpa [#allocation13], 1
    %3776 = vsyncpa [#allocation16], 1
    %3777 = vsyncpa [#allocation8], 1
    %s3778 = scalar_lea.sflag [#allocation8], 1
    %3779 = vsyncpa %s3778, 1

</llo_original>
